<compile_context>
chip_gen: v7x
topology: tpu7x:2x2x1
jax: 0.10.0
libtpu: 0.0.40
codegen_flags: <defaults>
</compile_context>

<pallas_src>
import jax
import jax.numpy as jnp
from jax import lax
from jax.experimental import pallas as pl
from jax.experimental.pallas import tpu as pltpu


# ----------------------------- kernel ------------------------------------

def _pick_row_tile(Ho, Wo):
    """Largest divisor `th` of Ho such that a chunk (th*Wo rows) is ~<=128 rows."""
    limit = max(1, 128 // max(Wo, 1))
    th = 1
    for cand in range(1, Ho + 1):
        if Ho % cand == 0 and cand <= limit:
            th = cand
    return th


def _make_fused_kernel(stride, Ho, Wo, th):
    """Fused (ComplexConv3x3 stride s -> ReLU -> ComplexConv3x3 -> ReLU) kernel."""
    nch = Ho // th          # number of output-row chunks (static)
    rows = th * Wo          # rows per chunk of the (rows, C) matmul operands

    def kernel(x_ref, w1_ref, b1_ref, w2_ref, b2_ref, out_ref, y1_ref):
        # x_ref  : (1, Hp, Wp, C0)       padded NHWC input, C0 = 2*Cin  ([re|im])
        # w1_ref : (9, C0, C1)           block-complex weights, tap-major (ky*3+kx)
        # b1_ref : (1, C1)               C1 = 2*Cmid
        # w2_ref : (9, C1, C2)           C2 = 2*Cout
        # b2_ref : (1, C2)
        # out_ref: (1, nch, rows, C2)    chunk-major output (row-major inside chunk)
        # y1_ref : VMEM scratch (Ho+2, Wo+2, C1)  stage-1 output, 1-px zero halo
        C0 = x_ref.shape[3]
        C1 = w1_ref.shape[2]
        C2 = w2_ref.shape[2]

        # zero the scratch (its 1-pixel halo is what actually matters; the
        # interior is overwritten below). Cheap at block sizes, and safe with
        # "parallel" batch sharding since it runs every grid step.
        y1_ref[...] = jnp.zeros_like(y1_ref)

        b1 = b1_ref[...].astype(jnp.float32)   # (1, C1)
        b2 = b2_ref[...].astype(jnp.float32)   # (1, C2)

        # ---------------- stage 1: ComplexConv2d(stride) + ReLU ----------------
        def stage1(i, carry):
            r0 = i * th
            acc = jnp.zeros((rows, C1), jnp.float32)
            for ky in range(3):
                for kx in range(3):
                    if stride == 1:
                        xs = x_ref[0, pl.ds(ky + r0, th), pl.ds(kx, Wo), :]
                    else:
                        # direct strided window (no wasted stride-1 compute)
                        xs = x_ref[0, pl.ds(ky + r0 * stride, th, stride),
                                   pl.ds(kx, Wo, stride), :]
                    xs = xs.reshape(rows, C0)
                    acc = acc + jnp.dot(xs, w1_ref[ky * 3 + kx],
                                        preferred_element_type=jnp.float32)
            y = jnp.maximum(acc + b1, 0.0).astype(y1_ref.dtype).reshape(th, Wo, C1)
            y1_ref[pl.ds(1 + r0, th), pl.ds(1, Wo), :] = y
            return carry

        lax.fori_loop(0, nch, stage1, 0)

        # ---------------- stage 2: ComplexConv2d(stride=1) + ReLU --------------
        def stage2(i, carry):
            r0 = i * th
            acc = jnp.zeros((rows, C2), jnp.float32)
            for ky in range(3):
                for kx in range(3):
                    ys = y1_ref[pl.ds(ky + r0, th), pl.ds(kx, Wo), :]
                    ys = ys.reshape(rows, C1)
                    acc = acc + jnp.dot(ys, w2_ref[ky * 3 + kx],
                                        preferred_element_type=jnp.float32)
            out_ref[0, i] = jnp.maximum(acc + b2, 0.0)
            return carry

        lax.fori_loop(0, nch, stage2, 0)

    return kernel


# ----------------------------- wrapper ------------------------------------

def _block_weight(w_re, w_im):
    """OIHW complex conv weights -> (9, 2*Cin, 2*Cout) block-real weights."""
    Cout, Cin = w_re.shape[0], w_re.shape[1]
    wr = jnp.transpose(w_re, (2, 3, 1, 0)).reshape(9, Cin, Cout)
    wi = jnp.transpose(w_im, (2, 3, 1, 0)).reshape(9, Cin, Cout)
    top = jnp.concatenate([wr, wi], axis=2)     # x_re rows -> [ W_re |  W_im]
    bot = jnp.concatenate([-wi, wr], axis=2)    # x_im rows -> [-W_im |  W_re]
    return jnp.concatenate([top, bot], axis=1).astype(jnp.float32)  # (9,2Cin,2Cout)


def complex_conv_block(x, params1, params2, stride=1, compute_dtype=None):
    """ComplexConvBlock.forward: x (B, 2, Cin, H, W) -> (B, 2, Cout, H', W').

    params* = (w_re, w_im, b_re, b_im) with w_* OIHW (Cout, Cin, 3, 3), b_* (Cout,).
    compute_dtype: optionally cast matmul operands (e.g. jnp.bfloat16 on v6e/v7x);
    accumulation stays float32.
    """
    assert x.ndim == 5 and x.shape[1] == 2, "Invalid shape!"
    B, _, Cin, H, W = x.shape
    w1_re, w1_im, b1_re, b1_im = params1
    w2_re, w2_im, b2_re, b2_im = params2
    Cmid = w1_re.shape[0]
    Cout = w2_re.shape[0]
    C0, C1, C2 = 2 * Cin, 2 * Cmid, 2 * Cout

    # Output spatial sizes for k=3, pad=1, stride s.
    Ho = (H - 1) // stride + 1
    Wo = (W - 1) // stride + 1

    # (B,2,Cin,H,W) -> NHWC with channels = [re..., im...]; pad spatial halo.
    x_cat = jnp.transpose(x, (0, 3, 4, 1, 2)).reshape(B, H, W, C0)
    pad_b = max(0, stride * (Ho - 1) + 2 - H)
    pad_r = max(0, stride * (Wo - 1) + 2 - W)
    x_pad = jnp.pad(x_cat, ((0, 0), (1, pad_b), (1, pad_r), (0, 0)))

    w1 = _block_weight(w1_re, w1_im)                                  # (9, C0, C1)
    w2 = _block_weight(w2_re, w2_im)                                  # (9, C1, C2)
    b1 = jnp.concatenate([b1_re - b1_im, b1_re + b1_im]).reshape(1, C1)
    b2 = jnp.concatenate([b2_re - b2_im, b2_re + b2_im]).reshape(1, C2)
    b1 = b1.astype(jnp.float32)
    b2 = b2.astype(jnp.float32)

    if compute_dtype is not None:
        x_pad = x_pad.astype(compute_dtype)
        w1 = w1.astype(compute_dtype)
        w2 = w2.astype(compute_dtype)

    Hp, Wp = x_pad.shape[1], x_pad.shape[2]
    th = _pick_row_tile(Ho, Wo)
    nch = Ho // th
    rows = th * Wo

    kernel = _make_fused_kernel(stride, Ho, Wo, th)

    flops = 2 * B * 9 * Ho * Wo * (C0 * C1 + C1 * C2)
    bytes_accessed = (x_pad.size * x_pad.dtype.itemsize
                      + w1.size * w1.dtype.itemsize
                      + w2.size * w2.dtype.itemsize
                      + b1.size * 4 + b2.size * 4
                      + B * Ho * Wo * C2 * 4)

    out = pl.pallas_call(
        kernel,
        out_shape=jax.ShapeDtypeStruct((B, nch, rows, C2), jnp.float32),
        grid_spec=pltpu.PrefetchScalarGridSpec(
            num_scalar_prefetch=0,
            grid=(B,),
            in_specs=[
                pl.BlockSpec((1, Hp, Wp, C0), lambda b: (b, 0, 0, 0)),
                pl.BlockSpec((9, C0, C1), lambda b: (0, 0, 0)),   # weights: DMA once
                pl.BlockSpec((1, C1), lambda b: (0, 0)),
                pl.BlockSpec((9, C1, C2), lambda b: (0, 0, 0)),
                pl.BlockSpec((1, C2), lambda b: (0, 0)),
            ],
            out_specs=pl.BlockSpec((1, nch, rows, C2), lambda b: (b, 0, 0, 0)),
            scratch_shapes=[pltpu.VMEM((Ho + 2, Wo + 2, C1), x_pad.dtype)],
        ),
        compiler_params=pltpu.CompilerParams(
            dimension_semantics=("parallel",)),
        cost_estimate=pl.CostEstimate(
            flops=flops, transcendentals=0, bytes_accessed=bytes_accessed),
    )(x_pad, w1, b1, w2, b2)

    # (B, nch, rows, 2*Cout) -> (B, Ho, Wo, 2, Cout) -> (B, 2, Cout, Ho, Wo)
    out = out.reshape(B, Ho, Wo, 2, Cout)
    return jnp.transpose(out, (0, 3, 4, 1, 2))


# ---------------- pure-JAX reference (for verification) ----------------

def _conv_ref(x, w, b, stride):
    out = lax.conv_general_dilated(
        x, w, window_strides=(stride, stride), padding=((1, 1), (1, 1)),
        dimension_numbers=("NCHW", "OIHW", "NCHW"))
    return out + b[None, :, None, None]


def _complex_conv_relu_ref(x_re, x_im, w_re, w_im, b_re, b_im, stride):
    o_re = _conv_ref(x_re, w_re, b_re, stride) - _conv_ref(x_im, w_im, b_im, stride)
    o_im = _conv_ref(x_im, w_re, b_re, stride) + _conv_ref(x_re, w_im, b_im, stride)
    return jnp.maximum(o_re, 0.0), jnp.maximum(o_im, 0.0)


def complex_conv_block_ref(x, params1, params2, stride=1):
    x_re, x_im = x[:, 0], x[:, 1]
    y_re, y_im = _complex_conv_relu_ref(x_re, x_im, *params1, stride=stride)
    z_re, z_im = _complex_conv_relu_ref(y_re, y_im, *params2, stride=1)
    return jnp.stack([z_re, z_im], axis=1)


# ------------------------------- main -----------------------------------

if __name__ == "__main__":
    B, in_chans, out_chans, H, W = 2, 4, 8, 16, 16
    stride = 1

    key = jax.random.PRNGKey(0)
    ks = jax.random.split(key, 9)

    def conv_params(kw, kb, cin, cout):
        w = 0.1 * jax.random.normal(kw, (cout, cin, 3, 3), jnp.float32)
        b = 0.05 * jax.random.normal(kb, (cout,), jnp.float32)
        return w, b

    w1_re, b1_re = conv_params(ks[0], ks[1], in_chans, out_chans)
    w1_im, b1_im = conv_params(ks[2], ks[3], in_chans, out_chans)
    w2_re, b2_re = conv_params(ks[4], ks[5], out_chans, out_chans)
    w2_im, b2_im = conv_params(ks[6], ks[7], out_chans, out_chans)

    params1 = (w1_re, w1_im, b1_re, b1_im)
    params2 = (w2_re, w2_im, b2_re, b2_im)

    x = jax.random.normal(ks[8], (B, 2, in_chans, H, W), jnp.float32)

    out = complex_conv_block(x, params1, params2, stride=stride)
    out = jax.block_until_ready(out)

    ref = jax.block_until_ready(
        complex_conv_block_ref(x, params1, params2, stride=stride))

    assert out.shape == (B, 2, out_chans, H, W), out.shape
    assert jnp.allclose(out, ref, atol=1e-4, rtol=1e-4), (
        float(jnp.max(jnp.abs(out - ref))))

    print("KERNEL_OK")
</pallas_src>

<mosaic_0001>
module attributes {stable_mosaic.version = 11 : i64} {
  func.func @kernel(%arg0: i32, %arg1: memref<1x18x18x8xf32, #tpu.memory_space<vmem>>, %arg2: memref<9x8x16xf32, #tpu.memory_space<vmem>>, %arg3: memref<1x16xf32, #tpu.memory_space<vmem>>, %arg4: memref<9x16x16xf32, #tpu.memory_space<vmem>>, %arg5: memref<1x16xf32, #tpu.memory_space<vmem>>, %arg6: memref<1x2x128x16xf32, #tpu.memory_space<vmem>>, %arg7: memref<18x18x16xf32, #tpu.memory_space<vmem>>) attributes {dimension_semantics = [#tpu.dimension_semantics<parallel>], iteration_bounds = array<i64: 2>, scalar_prefetch = 0 : i64, scratch_operands = 1 : i64, tpu.core_type = #tpu.core_type<tc>, window_params = [{transform_indices = @transform_0, window_bounds = array<i64: 1, 18, 18, 8>}, {pipeline_mode = #tpu.pipeline_mode<synchronous>, transform_indices = @transform_1, window_bounds = array<i64: 9, 8, 16>}, {pipeline_mode = #tpu.pipeline_mode<synchronous>, transform_indices = @transform_2, window_bounds = array<i64: 1, 16>}, {pipeline_mode = #tpu.pipeline_mode<synchronous>, transform_indices = @transform_3, window_bounds = array<i64: 9, 16, 16>}, {pipeline_mode = #tpu.pipeline_mode<synchronous>, transform_indices = @transform_4, window_bounds = array<i64: 1, 16>}, {transform_indices = @transform_5, window_bounds = array<i64: 1, 2, 128, 16>}]} {
    %cst = arith.constant 0.000000e+00 : f32
    %0 = vector.broadcast %cst : f32 to vector<18x18x16xf32>
    %c0 = arith.constant 0 : index
    %c0_0 = arith.constant 0 : index
    %c0_1 = arith.constant 0 : index
    %1 = vector.load %arg7[%c0, %c0_0, %c0_1] : memref<18x18x16xf32, #tpu.memory_space<vmem>>, vector<18x18x16xf32>
    tpu.vector_store %arg7[%c0, %c0_0, %c0_1], %0 {strides = array<i32>} : memref<18x18x16xf32, #tpu.memory_space<vmem>>, vector<18x18x16xf32>,
    %c0_2 = arith.constant 0 : index
    %c0_3 = arith.constant 0 : index
    %2 = vector.load %arg3[%c0_2, %c0_3] : memref<1x16xf32, #tpu.memory_space<vmem>>, vector<1x16xf32>
    %c0_4 = arith.constant 0 : index
    %c0_5 = arith.constant 0 : index
    %3 = vector.load %arg5[%c0_4, %c0_5] : memref<1x16xf32, #tpu.memory_space<vmem>>, vector<1x16xf32>
    %c0_i32 = arith.constant 0 : i32
    %c2_i32 = arith.constant 2 : i32
    %4 = arith.addi %c0_i32, %c2_i32 : i32
    %c1_i32 = arith.constant 1 : i32
    scf.for %arg8 = %c0_i32 to %4 step %c1_i32  : i32 {
      %c8_i32 = arith.constant 8 : i32
      %6 = arith.muli %arg8, %c8_i32 : i32
      %cst_11 = arith.constant 0.000000e+00 : f32
      %7 = vector.broadcast %cst_11 : f32 to vector<128x16xf32>
      %c0_i32_12 = arith.constant 0 : i32
      %8 = arith.addi %c0_i32_12, %6 : i32
      %c0_13 = arith.constant 0 : index
      %9 = arith.index_cast %8 : i32 to index
      %c0_14 = arith.constant 0 : index
      %c0_15 = arith.constant 0 : index
      %10 = vector.load %arg1[%c0_13, %9, %c0_14, %c0_15] : memref<1x18x18x8xf32, #tpu.memory_space<vmem>>, vector<1x8x16x8xf32>
      %11 = vector.shape_cast %10 : vector<1x8x16x8xf32> to vector<8x16x8xf32>
      %12 = vector.shape_cast %11 : vector<8x16x8xf32> to vector<128x8xf32>
      %c0_16 = arith.constant 0 : index
      %c0_17 = arith.constant 0 : index
      %c0_18 = arith.constant 0 : index
      %13 = vector.load %arg2[%c0_16, %c0_17, %c0_18] : memref<9x8x16xf32, #tpu.memory_space<vmem>>, vector<1x8x16xf32>
      %14 = vector.shape_cast %13 : vector<1x8x16xf32> to vector<8x16xf32>
      %cst_19 = arith.constant dense<0.000000e+00> : vector<128x16xf32>
      %15 = tpu.matmul %12, %14, %cst_19 {dimension_numbers = #tpu.dot_dimension_numbers<[1], [0], [0], [1], [0, 0, 1, 1], [], []>} : vector<128x8xf32>, vector<8x16xf32>, vector<128x16xf32> -> vector<128x16xf32>
      %16 = arith.addf %7, %15 : vector<128x16xf32>
      %c0_i32_20 = arith.constant 0 : i32
      %17 = arith.addi %c0_i32_20, %6 : i32
      %c0_21 = arith.constant 0 : index
      %18 = arith.index_cast %17 : i32 to index
      %c1 = arith.constant 1 : index
      %c0_22 = arith.constant 0 : index
      %19 = vector.load %arg1[%c0_21, %18, %c1, %c0_22] : memref<1x18x18x8xf32, #tpu.memory_space<vmem>>, vector<1x8x16x8xf32>
      %20 = vector.shape_cast %19 : vector<1x8x16x8xf32> to vector<8x16x8xf32>
      %21 = vector.shape_cast %20 : vector<8x16x8xf32> to vector<128x8xf32>
      %c1_23 = arith.constant 1 : index
      %c0_24 = arith.constant 0 : index
      %c0_25 = arith.constant 0 : index
      %22 = vector.load %arg2[%c1_23, %c0_24, %c0_25] : memref<9x8x16xf32, #tpu.memory_space<vmem>>, vector<1x8x16xf32>
      %23 = vector.shape_cast %22 : vector<1x8x16xf32> to vector<8x16xf32>
      %cst_26 = arith.constant dense<0.000000e+00> : vector<128x16xf32>
      %24 = tpu.matmul %21, %23, %cst_26 {dimension_numbers = #tpu.dot_dimension_numbers<[1], [0], [0], [1], [0, 0, 1, 1], [], []>} : vector<128x8xf32>, vector<8x16xf32>, vector<128x16xf32> -> vector<128x16xf32>
      %25 = arith.addf %16, %24 : vector<128x16xf32>
      %c0_i32_27 = arith.constant 0 : i32
      %26 = arith.addi %c0_i32_27, %6 : i32
      %c0_28 = arith.constant 0 : index
      %27 = arith.index_cast %26 : i32 to index
      %c2 = arith.constant 2 : index
      %c0_29 = arith.constant 0 : index
      %28 = vector.load %arg1[%c0_28, %27, %c2, %c0_29] : memref<1x18x18x8xf32, #tpu.memory_space<vmem>>, vector<1x8x16x8xf32>
      %29 = vector.shape_cast %28 : vector<1x8x16x8xf32> to vector<8x16x8xf32>
      %30 = vector.shape_cast %29 : vector<8x16x8xf32> to vector<128x8xf32>
      %c2_30 = arith.constant 2 : index
      %c0_31 = arith.constant 0 : index
      %c0_32 = arith.constant 0 : index
      %31 = vector.load %arg2[%c2_30, %c0_31, %c0_32] : memref<9x8x16xf32, #tpu.memory_space<vmem>>, vector<1x8x16xf32>
      %32 = vector.shape_cast %31 : vector<1x8x16xf32> to vector<8x16xf32>
      %cst_33 = arith.constant dense<0.000000e+00> : vector<128x16xf32>
      %33 = tpu.matmul %30, %32, %cst_33 {dimension_numbers = #tpu.dot_dimension_numbers<[1], [0], [0], [1], [0, 0, 1, 1], [], []>} : vector<128x8xf32>, vector<8x16xf32>, vector<128x16xf32> -> vector<128x16xf32>
      %34 = arith.addf %25, %33 : vector<128x16xf32>
      %c1_i32_34 = arith.constant 1 : i32
      %35 = arith.addi %c1_i32_34, %6 : i32
      %c0_35 = arith.constant 0 : index
      %36 = arith.index_cast %35 : i32 to index
      %c0_36 = arith.constant 0 : index
      %c0_37 = arith.constant 0 : index
      %37 = vector.load %arg1[%c0_35, %36, %c0_36, %c0_37] : memref<1x18x18x8xf32, #tpu.memory_space<vmem>>, vector<1x8x16x8xf32>
      %38 = vector.shape_cast %37 : vector<1x8x16x8xf32> to vector<8x16x8xf32>
      %39 = vector.shape_cast %38 : vector<8x16x8xf32> to vector<128x8xf32>
      %c3 = arith.constant 3 : index
      %c0_38 = arith.constant 0 : index
      %c0_39 = arith.constant 0 : index
      %40 = vector.load %arg2[%c3, %c0_38, %c0_39] : memref<9x8x16xf32, #tpu.memory_space<vmem>>, vector<1x8x16xf32>
      %41 = vector.shape_cast %40 : vector<1x8x16xf32> to vector<8x16xf32>
      %cst_40 = arith.constant dense<0.000000e+00> : vector<128x16xf32>
      %42 = tpu.matmul %39, %41, %cst_40 {dimension_numbers = #tpu.dot_dimension_numbers<[1], [0], [0], [1], [0, 0, 1, 1], [], []>} : vector<128x8xf32>, vector<8x16xf32>, vector<128x16xf32> -> vector<128x16xf32>
      %43 = arith.addf %34, %42 : vector<128x16xf32>
      %c1_i32_41 = arith.constant 1 : i32
      %44 = arith.addi %c1_i32_41, %6 : i32
      %c0_42 = arith.constant 0 : index
      %45 = arith.index_cast %44 : i32 to index
      %c1_43 = arith.constant 1 : index
      %c0_44 = arith.constant 0 : index
      %46 = vector.load %arg1[%c0_42, %45, %c1_43, %c0_44] : memref<1x18x18x8xf32, #tpu.memory_space<vmem>>, vector<1x8x16x8xf32>
      %47 = vector.shape_cast %46 : vector<1x8x16x8xf32> to vector<8x16x8xf32>
      %48 = vector.shape_cast %47 : vector<8x16x8xf32> to vector<128x8xf32>
      %c4 = arith.constant 4 : index
      %c0_45 = arith.constant 0 : index
      %c0_46 = arith.constant 0 : index
      %49 = vector.load %arg2[%c4, %c0_45, %c0_46] : memref<9x8x16xf32, #tpu.memory_space<vmem>>, vector<1x8x16xf32>
      %50 = vector.shape_cast %49 : vector<1x8x16xf32> to vector<8x16xf32>
      %cst_47 = arith.constant dense<0.000000e+00> : vector<128x16xf32>
      %51 = tpu.matmul %48, %50, %cst_47 {dimension_numbers = #tpu.dot_dimension_numbers<[1], [0], [0], [1], [0, 0, 1, 1], [], []>} : vector<128x8xf32>, vector<8x16xf32>, vector<128x16xf32> -> vector<128x16xf32>
      %52 = arith.addf %43, %51 : vector<128x16xf32>
      %c1_i32_48 = arith.constant 1 : i32
      %53 = arith.addi %c1_i32_48, %6 : i32
      %c0_49 = arith.constant 0 : index
      %54 = arith.index_cast %53 : i32 to index
      %c2_50 = arith.constant 2 : index
      %c0_51 = arith.constant 0 : index
      %55 = vector.load %arg1[%c0_49, %54, %c2_50, %c0_51] : memref<1x18x18x8xf32, #tpu.memory_space<vmem>>, vector<1x8x16x8xf32>
      %56 = vector.shape_cast %55 : vector<1x8x16x8xf32> to vector<8x16x8xf32>
      %57 = vector.shape_cast %56 : vector<8x16x8xf32> to vector<128x8xf32>
      %c5 = arith.constant 5 : index
      %c0_52 = arith.constant 0 : index
      %c0_53 = arith.constant 0 : index
      %58 = vector.load %arg2[%c5, %c0_52, %c0_53] : memref<9x8x16xf32, #tpu.memory_space<vmem>>, vector<1x8x16xf32>
      %59 = vector.shape_cast %58 : vector<1x8x16xf32> to vector<8x16xf32>
      %cst_54 = arith.constant dense<0.000000e+00> : vector<128x16xf32>
      %60 = tpu.matmul %57, %59, %cst_54 {dimension_numbers = #tpu.dot_dimension_numbers<[1], [0], [0], [1], [0, 0, 1, 1], [], []>} : vector<128x8xf32>, vector<8x16xf32>, vector<128x16xf32> -> vector<128x16xf32>
      %61 = arith.addf %52, %60 : vector<128x16xf32>
      %c2_i32_55 = arith.constant 2 : i32
      %62 = arith.addi %c2_i32_55, %6 : i32
      %c0_56 = arith.constant 0 : index
      %63 = arith.index_cast %62 : i32 to index
      %c0_57 = arith.constant 0 : index
      %c0_58 = arith.constant 0 : index
      %64 = vector.load %arg1[%c0_56, %63, %c0_57, %c0_58] : memref<1x18x18x8xf32, #tpu.memory_space<vmem>>, vector<1x8x16x8xf32>
      %65 = vector.shape_cast %64 : vector<1x8x16x8xf32> to vector<8x16x8xf32>
      %66 = vector.shape_cast %65 : vector<8x16x8xf32> to vector<128x8xf32>
      %c6 = arith.constant 6 : index
      %c0_59 = arith.constant 0 : index
      %c0_60 = arith.constant 0 : index
      %67 = vector.load %arg2[%c6, %c0_59, %c0_60] : memref<9x8x16xf32, #tpu.memory_space<vmem>>, vector<1x8x16xf32>
      %68 = vector.shape_cast %67 : vector<1x8x16xf32> to vector<8x16xf32>
      %cst_61 = arith.constant dense<0.000000e+00> : vector<128x16xf32>
      %69 = tpu.matmul %66, %68, %cst_61 {dimension_numbers = #tpu.dot_dimension_numbers<[1], [0], [0], [1], [0, 0, 1, 1], [], []>} : vector<128x8xf32>, vector<8x16xf32>, vector<128x16xf32> -> vector<128x16xf32>
      %70 = arith.addf %61, %69 : vector<128x16xf32>
      %c2_i32_62 = arith.constant 2 : i32
      %71 = arith.addi %c2_i32_62, %6 : i32
      %c0_63 = arith.constant 0 : index
      %72 = arith.index_cast %71 : i32 to index
      %c1_64 = arith.constant 1 : index
      %c0_65 = arith.constant 0 : index
      %73 = vector.load %arg1[%c0_63, %72, %c1_64, %c0_65] : memref<1x18x18x8xf32, #tpu.memory_space<vmem>>, vector<1x8x16x8xf32>
      %74 = vector.shape_cast %73 : vector<1x8x16x8xf32> to vector<8x16x8xf32>
      %75 = vector.shape_cast %74 : vector<8x16x8xf32> to vector<128x8xf32>
      %c7 = arith.constant 7 : index
      %c0_66 = arith.constant 0 : index
      %c0_67 = arith.constant 0 : index
      %76 = vector.load %arg2[%c7, %c0_66, %c0_67] : memref<9x8x16xf32, #tpu.memory_space<vmem>>, vector<1x8x16xf32>
      %77 = vector.shape_cast %76 : vector<1x8x16xf32> to vector<8x16xf32>
      %cst_68 = arith.constant dense<0.000000e+00> : vector<128x16xf32>
      %78 = tpu.matmul %75, %77, %cst_68 {dimension_numbers = #tpu.dot_dimension_numbers<[1], [0], [0], [1], [0, 0, 1, 1], [], []>} : vector<128x8xf32>, vector<8x16xf32>, vector<128x16xf32> -> vector<128x16xf32>
      %79 = arith.addf %70, %78 : vector<128x16xf32>
      %c2_i32_69 = arith.constant 2 : i32
      %80 = arith.addi %c2_i32_69, %6 : i32
      %c0_70 = arith.constant 0 : index
      %81 = arith.index_cast %80 : i32 to index
      %c2_71 = arith.constant 2 : index
      %c0_72 = arith.constant 0 : index
      %82 = vector.load %arg1[%c0_70, %81, %c2_71, %c0_72] : memref<1x18x18x8xf32, #tpu.memory_space<vmem>>, vector<1x8x16x8xf32>
      %83 = vector.shape_cast %82 : vector<1x8x16x8xf32> to vector<8x16x8xf32>
      %84 = vector.shape_cast %83 : vector<8x16x8xf32> to vector<128x8xf32>
      %c8 = arith.constant 8 : index
      %c0_73 = arith.constant 0 : index
      %c0_74 = arith.constant 0 : index
      %85 = vector.load %arg2[%c8, %c0_73, %c0_74] : memref<9x8x16xf32, #tpu.memory_space<vmem>>, vector<1x8x16xf32>
      %86 = vector.shape_cast %85 : vector<1x8x16xf32> to vector<8x16xf32>
      %cst_75 = arith.constant dense<0.000000e+00> : vector<128x16xf32>
      %87 = tpu.matmul %84, %86, %cst_75 {dimension_numbers = #tpu.dot_dimension_numbers<[1], [0], [0], [1], [0, 0, 1, 1], [], []>} : vector<128x8xf32>, vector<8x16xf32>, vector<128x16xf32> -> vector<128x16xf32>
      %88 = arith.addf %79, %87 : vector<128x16xf32>
      %89 = vector.broadcast %2 : vector<1x16xf32> to vector<128x16xf32>
      %90 = arith.addf %88, %89 : vector<128x16xf32>
      %cst_76 = arith.constant 0.000000e+00 : f32
      %91 = vector.broadcast %cst_76 : f32 to vector<128x16xf32>
      %92 = arith.maximumf %90, %91 : vector<128x16xf32>
      %93 = vector.shape_cast %92 : vector<128x16xf32> to vector<8x16x16xf32>
      %c1_i32_77 = arith.constant 1 : i32
      %94 = arith.addi %c1_i32_77, %6 : i32
      %95 = arith.index_cast %94 : i32 to index
      %c1_78 = arith.constant 1 : index
      %c0_79 = arith.constant 0 : index
      %96 = vector.load %arg7[%95, %c1_78, %c0_79] : memref<18x18x16xf32, #tpu.memory_space<vmem>>, vector<8x16x16xf32>
      tpu.vector_store %arg7[%95, %c1_78, %c0_79], %93 {strides = array<i32>} : memref<18x18x16xf32, #tpu.memory_space<vmem>>, vector<8x16x16xf32>,
    }
    %c2_i32_6 = arith.constant 2 : i32
    %c0_i32_7 = arith.constant 0 : i32
    %c2_i32_8 = arith.constant 2 : i32
    %5 = arith.addi %c0_i32_7, %c2_i32_8 : i32
    %c1_i32_9 = arith.constant 1 : i32
    scf.for %arg8 = %c0_i32_7 to %5 step %c1_i32_9  : i32 {
      %c8_i32 = arith.constant 8 : i32
      %6 = arith.muli %arg8, %c8_i32 : i32
      %cst_11 = arith.constant 0.000000e+00 : f32
      %7 = vector.broadcast %cst_11 : f32 to vector<128x16xf32>
      %c0_i32_12 = arith.constant 0 : i32
      %8 = arith.addi %c0_i32_12, %6 : i32
      %9 = arith.index_cast %8 : i32 to index
      %c0_13 = arith.constant 0 : index
      %c0_14 = arith.constant 0 : index
      %10 = vector.load %arg7[%9, %c0_13, %c0_14] : memref<18x18x16xf32, #tpu.memory_space<vmem>>, vector<8x16x16xf32>
      %11 = vector.shape_cast %10 : vector<8x16x16xf32> to vector<128x16xf32>
      %c0_15 = arith.constant 0 : index
      %c0_16 = arith.constant 0 : index
      %c0_17 = arith.constant 0 : index
      %12 = vector.load %arg4[%c0_15, %c0_16, %c0_17] : memref<9x16x16xf32, #tpu.memory_space<vmem>>, vector<1x16x16xf32>
      %13 = vector.shape_cast %12 : vector<1x16x16xf32> to vector<16x16xf32>
      %cst_18 = arith.constant dense<0.000000e+00> : vector<128x16xf32>
      %14 = tpu.matmul %11, %13, %cst_18 {dimension_numbers = #tpu.dot_dimension_numbers<[1], [0], [0], [1], [0, 0, 1, 1], [], []>} : vector<128x16xf32>, vector<16x16xf32>, vector<128x16xf32> -> vector<128x16xf32>
      %15 = arith.addf %7, %14 : vector<128x16xf32>
      %c0_i32_19 = arith.constant 0 : i32
      %16 = arith.addi %c0_i32_19, %6 : i32
      %17 = arith.index_cast %16 : i32 to index
      %c1 = arith.constant 1 : index
      %c0_20 = arith.constant 0 : index
      %18 = vector.load %arg7[%17, %c1, %c0_20] : memref<18x18x16xf32, #tpu.memory_space<vmem>>, vector<8x16x16xf32>
      %19 = vector.shape_cast %18 : vector<8x16x16xf32> to vector<128x16xf32>
      %c1_21 = arith.constant 1 : index
      %c0_22 = arith.constant 0 : index
      %c0_23 = arith.constant 0 : index
      %20 = vector.load %arg4[%c1_21, %c0_22, %c0_23] : memref<9x16x16xf32, #tpu.memory_space<vmem>>, vector<1x16x16xf32>
      %21 = vector.shape_cast %20 : vector<1x16x16xf32> to vector<16x16xf32>
      %cst_24 = arith.constant dense<0.000000e+00> : vector<128x16xf32>
      %22 = tpu.matmul %19, %21, %cst_24 {dimension_numbers = #tpu.dot_dimension_numbers<[1], [0], [0], [1], [0, 0, 1, 1], [], []>} : vector<128x16xf32>, vector<16x16xf32>, vector<128x16xf32> -> vector<128x16xf32>
      %23 = arith.addf %15, %22 : vector<128x16xf32>
      %c0_i32_25 = arith.constant 0 : i32
      %24 = arith.addi %c0_i32_25, %6 : i32
      %25 = arith.index_cast %24 : i32 to index
      %c2 = arith.constant 2 : index
      %c0_26 = arith.constant 0 : index
      %26 = vector.load %arg7[%25, %c2, %c0_26] : memref<18x18x16xf32, #tpu.memory_space<vmem>>, vector<8x16x16xf32>
      %27 = vector.shape_cast %26 : vector<8x16x16xf32> to vector<128x16xf32>
      %c2_27 = arith.constant 2 : index
      %c0_28 = arith.constant 0 : index
      %c0_29 = arith.constant 0 : index
      %28 = vector.load %arg4[%c2_27, %c0_28, %c0_29] : memref<9x16x16xf32, #tpu.memory_space<vmem>>, vector<1x16x16xf32>
      %29 = vector.shape_cast %28 : vector<1x16x16xf32> to vector<16x16xf32>
      %cst_30 = arith.constant dense<0.000000e+00> : vector<128x16xf32>
      %30 = tpu.matmul %27, %29, %cst_30 {dimension_numbers = #tpu.dot_dimension_numbers<[1], [0], [0], [1], [0, 0, 1, 1], [], []>} : vector<128x16xf32>, vector<16x16xf32>, vector<128x16xf32> -> vector<128x16xf32>
      %31 = arith.addf %23, %30 : vector<128x16xf32>
      %c1_i32_31 = arith.constant 1 : i32
      %32 = arith.addi %c1_i32_31, %6 : i32
      %33 = arith.index_cast %32 : i32 to index
      %c0_32 = arith.constant 0 : index
      %c0_33 = arith.constant 0 : index
      %34 = vector.load %arg7[%33, %c0_32, %c0_33] : memref<18x18x16xf32, #tpu.memory_space<vmem>>, vector<8x16x16xf32>
      %35 = vector.shape_cast %34 : vector<8x16x16xf32> to vector<128x16xf32>
      %c3 = arith.constant 3 : index
      %c0_34 = arith.constant 0 : index
      %c0_35 = arith.constant 0 : index
      %36 = vector.load %arg4[%c3, %c0_34, %c0_35] : memref<9x16x16xf32, #tpu.memory_space<vmem>>, vector<1x16x16xf32>
      %37 = vector.shape_cast %36 : vector<1x16x16xf32> to vector<16x16xf32>
      %cst_36 = arith.constant dense<0.000000e+00> : vector<128x16xf32>
      %38 = tpu.matmul %35, %37, %cst_36 {dimension_numbers = #tpu.dot_dimension_numbers<[1], [0], [0], [1], [0, 0, 1, 1], [], []>} : vector<128x16xf32>, vector<16x16xf32>, vector<128x16xf32> -> vector<128x16xf32>
      %39 = arith.addf %31, %38 : vector<128x16xf32>
      %c1_i32_37 = arith.constant 1 : i32
      %40 = arith.addi %c1_i32_37, %6 : i32
      %41 = arith.index_cast %40 : i32 to index
      %c1_38 = arith.constant 1 : index
      %c0_39 = arith.constant 0 : index
      %42 = vector.load %arg7[%41, %c1_38, %c0_39] : memref<18x18x16xf32, #tpu.memory_space<vmem>>, vector<8x16x16xf32>
      %43 = vector.shape_cast %42 : vector<8x16x16xf32> to vector<128x16xf32>
      %c4 = arith.constant 4 : index
      %c0_40 = arith.constant 0 : index
      %c0_41 = arith.constant 0 : index
      %44 = vector.load %arg4[%c4, %c0_40, %c0_41] : memref<9x16x16xf32, #tpu.memory_space<vmem>>, vector<1x16x16xf32>
      %45 = vector.shape_cast %44 : vector<1x16x16xf32> to vector<16x16xf32>
      %cst_42 = arith.constant dense<0.000000e+00> : vector<128x16xf32>
      %46 = tpu.matmul %43, %45, %cst_42 {dimension_numbers = #tpu.dot_dimension_numbers<[1], [0], [0], [1], [0, 0, 1, 1], [], []>} : vector<128x16xf32>, vector<16x16xf32>, vector<128x16xf32> -> vector<128x16xf32>
      %47 = arith.addf %39, %46 : vector<128x16xf32>
      %c1_i32_43 = arith.constant 1 : i32
      %48 = arith.addi %c1_i32_43, %6 : i32
      %49 = arith.index_cast %48 : i32 to index
      %c2_44 = arith.constant 2 : index
      %c0_45 = arith.constant 0 : index
      %50 = vector.load %arg7[%49, %c2_44, %c0_45] : memref<18x18x16xf32, #tpu.memory_space<vmem>>, vector<8x16x16xf32>
      %51 = vector.shape_cast %50 : vector<8x16x16xf32> to vector<128x16xf32>
      %c5 = arith.constant 5 : index
      %c0_46 = arith.constant 0 : index
      %c0_47 = arith.constant 0 : index
      %52 = vector.load %arg4[%c5, %c0_46, %c0_47] : memref<9x16x16xf32, #tpu.memory_space<vmem>>, vector<1x16x16xf32>
      %53 = vector.shape_cast %52 : vector<1x16x16xf32> to vector<16x16xf32>
      %cst_48 = arith.constant dense<0.000000e+00> : vector<128x16xf32>
      %54 = tpu.matmul %51, %53, %cst_48 {dimension_numbers = #tpu.dot_dimension_numbers<[1], [0], [0], [1], [0, 0, 1, 1], [], []>} : vector<128x16xf32>, vector<16x16xf32>, vector<128x16xf32> -> vector<128x16xf32>
      %55 = arith.addf %47, %54 : vector<128x16xf32>
      %c2_i32_49 = arith.constant 2 : i32
      %56 = arith.addi %c2_i32_49, %6 : i32
      %57 = arith.index_cast %56 : i32 to index
      %c0_50 = arith.constant 0 : index
      %c0_51 = arith.constant 0 : index
      %58 = vector.load %arg7[%57, %c0_50, %c0_51] : memref<18x18x16xf32, #tpu.memory_space<vmem>>, vector<8x16x16xf32>
      %59 = vector.shape_cast %58 : vector<8x16x16xf32> to vector<128x16xf32>
      %c6 = arith.constant 6 : index
      %c0_52 = arith.constant 0 : index
      %c0_53 = arith.constant 0 : index
      %60 = vector.load %arg4[%c6, %c0_52, %c0_53] : memref<9x16x16xf32, #tpu.memory_space<vmem>>, vector<1x16x16xf32>
      %61 = vector.shape_cast %60 : vector<1x16x16xf32> to vector<16x16xf32>
      %cst_54 = arith.constant dense<0.000000e+00> : vector<128x16xf32>
      %62 = tpu.matmul %59, %61, %cst_54 {dimension_numbers = #tpu.dot_dimension_numbers<[1], [0], [0], [1], [0, 0, 1, 1], [], []>} : vector<128x16xf32>, vector<16x16xf32>, vector<128x16xf32> -> vector<128x16xf32>
      %63 = arith.addf %55, %62 : vector<128x16xf32>
      %c2_i32_55 = arith.constant 2 : i32
      %64 = arith.addi %c2_i32_55, %6 : i32
      %65 = arith.index_cast %64 : i32 to index
      %c1_56 = arith.constant 1 : index
      %c0_57 = arith.constant 0 : index
      %66 = vector.load %arg7[%65, %c1_56, %c0_57] : memref<18x18x16xf32, #tpu.memory_space<vmem>>, vector<8x16x16xf32>
      %67 = vector.shape_cast %66 : vector<8x16x16xf32> to vector<128x16xf32>
      %c7 = arith.constant 7 : index
      %c0_58 = arith.constant 0 : index
      %c0_59 = arith.constant 0 : index
      %68 = vector.load %arg4[%c7, %c0_58, %c0_59] : memref<9x16x16xf32, #tpu.memory_space<vmem>>, vector<1x16x16xf32>
      %69 = vector.shape_cast %68 : vector<1x16x16xf32> to vector<16x16xf32>
      %cst_60 = arith.constant dense<0.000000e+00> : vector<128x16xf32>
      %70 = tpu.matmul %67, %69, %cst_60 {dimension_numbers = #tpu.dot_dimension_numbers<[1], [0], [0], [1], [0, 0, 1, 1], [], []>} : vector<128x16xf32>, vector<16x16xf32>, vector<128x16xf32> -> vector<128x16xf32>
      %71 = arith.addf %63, %70 : vector<128x16xf32>
      %c2_i32_61 = arith.constant 2 : i32
      %72 = arith.addi %c2_i32_61, %6 : i32
      %73 = arith.index_cast %72 : i32 to index
      %c2_62 = arith.constant 2 : index
      %c0_63 = arith.constant 0 : index
      %74 = vector.load %arg7[%73, %c2_62, %c0_63] : memref<18x18x16xf32, #tpu.memory_space<vmem>>, vector<8x16x16xf32>
      %75 = vector.shape_cast %74 : vector<8x16x16xf32> to vector<128x16xf32>
      %c8 = arith.constant 8 : index
      %c0_64 = arith.constant 0 : index
      %c0_65 = arith.constant 0 : index
      %76 = vector.load %arg4[%c8, %c0_64, %c0_65] : memref<9x16x16xf32, #tpu.memory_space<vmem>>, vector<1x16x16xf32>
      %77 = vector.shape_cast %76 : vector<1x16x16xf32> to vector<16x16xf32>
      %cst_66 = arith.constant dense<0.000000e+00> : vector<128x16xf32>
      %78 = tpu.matmul %75, %77, %cst_66 {dimension_numbers = #tpu.dot_dimension_numbers<[1], [0], [0], [1], [0, 0, 1, 1], [], []>} : vector<128x16xf32>, vector<16x16xf32>, vector<128x16xf32> -> vector<128x16xf32>
      %79 = arith.addf %71, %78 : vector<128x16xf32>
      %80 = vector.broadcast %3 : vector<1x16xf32> to vector<128x16xf32>
      %81 = arith.addf %79, %80 : vector<128x16xf32>
      %cst_67 = arith.constant 0.000000e+00 : f32
      %82 = vector.broadcast %cst_67 : f32 to vector<128x16xf32>
      %83 = arith.maximumf %81, %82 : vector<128x16xf32>
      %c0_68 = arith.constant 0 : index
      %84 = arith.index_cast %arg8 : i32 to index
      %c0_69 = arith.constant 0 : index
      %c0_70 = arith.constant 0 : index
      %85 = vector.load %arg6[%c0_68, %84, %c0_69, %c0_70] : memref<1x2x128x16xf32, #tpu.memory_space<vmem>>, vector<1x1x128x16xf32>
      %86 = vector.shape_cast %85 : vector<1x1x128x16xf32> to vector<128x16xf32>
      %87 = vector.shape_cast %83 : vector<128x16xf32> to vector<1x1x128x16xf32>
      tpu.vector_store %arg6[%c0_68, %84, %c0_69, %c0_70], %87 {strides = array<i32>} : memref<1x2x128x16xf32, #tpu.memory_space<vmem>>, vector<1x1x128x16xf32>,
    }
    %c2_i32_10 = arith.constant 2 : i32
    return
  }
  func.func @transform_0(%arg0: i32) -> (i32, i32, i32, i32) {
    %c0_i32 = arith.constant 0 : i32
    %c0_i32_0 = arith.constant 0 : i32
    %c0_i32_1 = arith.constant 0 : i32
    %c0_i32_2 = arith.constant 0 : i32
    return %arg0, %c0_i32, %c0_i32_0, %c0_i32_1 : i32, i32, i32, i32
  }
  func.func @transform_1(%arg0: i32) -> (i32, i32, i32) {
    %c0_i32 = arith.constant 0 : i32
    %c0_i32_0 = arith.constant 0 : i32
    %c0_i32_1 = arith.constant 0 : i32
    %c0_i32_2 = arith.constant 0 : i32
    return %c0_i32, %c0_i32_0, %c0_i32_1 : i32, i32, i32
  }
  func.func @transform_2(%arg0: i32) -> (i32, i32) {
    %c0_i32 = arith.constant 0 : i32
    %c0_i32_0 = arith.constant 0 : i32
    %c0_i32_1 = arith.constant 0 : i32
    return %c0_i32, %c0_i32_0 : i32, i32
  }
  func.func @transform_3(%arg0: i32) -> (i32, i32, i32) {
    %c0_i32 = arith.constant 0 : i32
    %c0_i32_0 = arith.constant 0 : i32
    %c0_i32_1 = arith.constant 0 : i32
    %c0_i32_2 = arith.constant 0 : i32
    return %c0_i32, %c0_i32_0, %c0_i32_1 : i32, i32, i32
  }
  func.func @transform_4(%arg0: i32) -> (i32, i32) {
    %c0_i32 = arith.constant 0 : i32
    %c0_i32_0 = arith.constant 0 : i32
    %c0_i32_1 = arith.constant 0 : i32
    return %c0_i32, %c0_i32_0 : i32, i32
  }
  func.func @transform_5(%arg0: i32) -> (i32, i32, i32, i32) {
    %c0_i32 = arith.constant 0 : i32
    %c0_i32_0 = arith.constant 0 : i32
    %c0_i32_1 = arith.constant 0 : i32
    %c0_i32_2 = arith.constant 0 : i32
    return %arg0, %c0_i32, %c0_i32_0, %c0_i32_1 : i32, i32, i32, i32
  }
}

</mosaic_0001>

<llo_original>
// kernel: tpu_custom_call.1
$region0: #{tpu_custom_call.1}
  #allocation0 [shape = 'u32[]', space=smem, size = 0x4, offset = 0x4, fixed_abs, tag = 'smem constant byte address 0x4 - core index']
  #allocation1 [shape = 'u32[144,128]{1,0:T(1,128)}', space=vmem, size = 0x12000, scoped, tag = 'internal scratch']
  #allocation2 [shape = 'f32[18,18,16]{2,1,0:T(8,128)}', space=vmem, size = 0x36000, scoped, tag = 'scratch operand']
  %s0 = inlined_call_operand.vmem [shape: f32[2,18,18,8], index: 0, kind: input, shape index: {}]
  %s1 = inlined_call_operand.vmem [shape: f32[9,8,16], index: 1, kind: input, shape index: {}]
  %s2 = inlined_call_operand.vmem [shape: f32[1,16], index: 2, kind: input, shape index: {}]
  %s3 = inlined_call_operand.vmem [shape: f32[9,16,16], index: 3, kind: input, shape index: {}]
  %s4 = inlined_call_operand.vmem [shape: f32[1,16], index: 4, kind: input, shape index: {}]
  %s5 = inlined_call_operand.vmem [shape: f32[2,2,128,16], index: 5, kind: output, shape index: {}]
  %s6 = sld [smem:[#allocation0]]
  $region67: #{tpu_custom_call.1} parent=0
    _
  %s8 = ssub.s32 1, %s6
  %s9 = scalar_select 0, %s8, %s6
  loop: start=0, step=1, limit=4
  $region2: #{tpu_custom_call.1} parent=0 // loop_pre_header
    _
  $region3: #{tpu_custom_call.1} parent=0 // loop_header
    %s11 = sphi 0, %s15
    %p12 = scmp.ge.s32.totalorder %s11, 4
    %s21 = sphi 0, %s23
    %s24 = sphi 0, %s21
    %s25 = sphi 0, %s24
    %s41 = sphi 0, %s25
    %s45 = sphi 0, %s45
    %s47 = sphi 0, %s45
    %s48 = sphi 0, %s47
    %s62 = sphi 0, %s48
    %s66 = sphi 0, %s66
    %s68 = sphi 0, %s66
    %s69 = sphi 0, %s68
    %s83 = sphi 0, %s69
    %s87 = sphi 0, %s87
    %s89 = sphi 0, %s87
    %s90 = sphi 0, %s89
    %s104 = sphi 0, %s90
    %s108 = sphi 0, %s108
    %s110 = sphi 0, %s108
    %s111 = sphi 0, %s110
    %s125 = sphi 0, %s111
    %s131 = sphi 0, %s133
    %s134 = sphi 0, %s131
    %s135 = sphi 0, %s134
    %s151 = sphi 0, %s135
  $region4: #{tpu_custom_call.1} parent=0 // loop_header_branch
    %14 = sbr.rel (%p12) target = $region8
  $region5: #{tpu_custom_call.1} parent=0 // loop_body
    %s16 = ssub.s32 %s11, 1
    %s17 = ssub.s32 %s11, 2
    %s18 = sadd.s32 %s11, 1
    %s19 = ssub.s32 %s11, %s18
    %p20 = scmp.eq.s32.totalorder %s19, 0
    %s22 = sadd.s32 %s21, 1
    %s23 = scalar_select %p20, %s21, %s22
    %p26 = pneg %p20
    %p27 = scmp.eq.s32.totalorder %s11, 1
    %p28 = por %p26, %p27
    %p29 = scmp.ne.s32.totalorder %s21, %s24
    %p30 = scmp.eq.s32.totalorder %s11, 0
    %p31 = por %p29, %p30
    %p32 = scmp.ne.s32.totalorder %s21, %s24
    %p33 = scmp.eq.s32.totalorder %s16, 1
    %p34 = por %p32, %p33
    %p35 = scmp.ne.s32.totalorder %s24, %s25
    %p36 = scmp.eq.s32.totalorder %s16, 0
    %p37 = por %p35, %p36
    %p38 = scmp.ne.s32.totalorder %s24, %s25
    %p39 = scmp.eq.s32.totalorder %s17, 1
    %p40 = por %p38, %p39
    %p42 = scmp.ne.s32.totalorder %s25, %s41
    %p43 = scmp.eq.s32.totalorder %s17, 0
    %p44 = por %p42, %p43
    %s46 = sadd.s32 %s45, 1
    %p49 = scmp.eq.s32.totalorder %s11, 1
    %p50 = scmp.ne.s32.totalorder %s45, %s47
    %p51 = scmp.eq.s32.totalorder %s11, 0
    %p52 = por %p50, %p51
    %p53 = scmp.ne.s32.totalorder %s45, %s47
    %p54 = scmp.eq.s32.totalorder %s16, 1
    %p55 = por %p53, %p54
    %p56 = scmp.ne.s32.totalorder %s47, %s48
    %p57 = scmp.eq.s32.totalorder %s16, 0
    %p58 = por %p56, %p57
    %p59 = scmp.ne.s32.totalorder %s47, %s48
    %p60 = scmp.eq.s32.totalorder %s17, 1
    %p61 = por %p59, %p60
    %p63 = scmp.ne.s32.totalorder %s48, %s62
    %p64 = scmp.eq.s32.totalorder %s17, 0
    %p65 = por %p63, %p64
    %s67 = sadd.s32 %s66, 1
    %p70 = scmp.eq.s32.totalorder %s11, 1
    %p71 = scmp.ne.s32.totalorder %s66, %s68
    %p72 = scmp.eq.s32.totalorder %s11, 0
    %p73 = por %p71, %p72
    %p74 = scmp.ne.s32.totalorder %s66, %s68
    %p75 = scmp.eq.s32.totalorder %s16, 1
    %p76 = por %p74, %p75
    %p77 = scmp.ne.s32.totalorder %s68, %s69
    %p78 = scmp.eq.s32.totalorder %s16, 0
    %p79 = por %p77, %p78
    %p80 = scmp.ne.s32.totalorder %s68, %s69
    %p81 = scmp.eq.s32.totalorder %s17, 1
    %p82 = por %p80, %p81
    %p84 = scmp.ne.s32.totalorder %s69, %s83
    %p85 = scmp.eq.s32.totalorder %s17, 0
    %p86 = por %p84, %p85
    %s88 = sadd.s32 %s87, 1
    %p91 = scmp.eq.s32.totalorder %s11, 1
    %p92 = scmp.ne.s32.totalorder %s87, %s89
    %p93 = scmp.eq.s32.totalorder %s11, 0
    %p94 = por %p92, %p93
    %p95 = scmp.ne.s32.totalorder %s87, %s89
    %p96 = scmp.eq.s32.totalorder %s16, 1
    %p97 = por %p95, %p96
    %p98 = scmp.ne.s32.totalorder %s89, %s90
    %p99 = scmp.eq.s32.totalorder %s16, 0
    %p100 = por %p98, %p99
    %p101 = scmp.ne.s32.totalorder %s89, %s90
    %p102 = scmp.eq.s32.totalorder %s17, 1
    %p103 = por %p101, %p102
    %p105 = scmp.ne.s32.totalorder %s90, %s104
    %p106 = scmp.eq.s32.totalorder %s17, 0
    %p107 = por %p105, %p106
    %s109 = sadd.s32 %s108, 1
    %p112 = scmp.eq.s32.totalorder %s11, 1
    %p113 = scmp.ne.s32.totalorder %s108, %s110
    %p114 = scmp.eq.s32.totalorder %s11, 0
    %p115 = por %p113, %p114
    %p116 = scmp.ne.s32.totalorder %s108, %s110
    %p117 = scmp.eq.s32.totalorder %s16, 1
    %p118 = por %p116, %p117
    %p119 = scmp.ne.s32.totalorder %s110, %s111
    %p120 = scmp.eq.s32.totalorder %s16, 0
    %p121 = por %p119, %p120
    %p122 = scmp.ne.s32.totalorder %s110, %s111
    %p123 = scmp.eq.s32.totalorder %s17, 1
    %p124 = por %p122, %p123
    %p126 = scmp.ne.s32.totalorder %s111, %s125
    %p127 = scmp.eq.s32.totalorder %s17, 0
    %p128 = por %p126, %p127
    %s129 = ssub.s32 %s11, %s18
    %p130 = scmp.eq.s32.totalorder %s129, 0
    %s132 = sadd.s32 %s131, 1
    %s133 = scalar_select %p130, %s131, %s132
    %p136 = pneg %p130
    %p137 = scmp.eq.s32.totalorder %s11, 1
    %p138 = por %p136, %p137
    %p139 = scmp.ne.s32.totalorder %s131, %s134
    %p140 = scmp.eq.s32.totalorder %s11, 0
    %p141 = por %p139, %p140
    %p142 = scmp.ne.s32.totalorder %s131, %s134
    %p143 = scmp.eq.s32.totalorder %s16, 1
    %p144 = por %p142, %p143
    %p145 = scmp.ne.s32.totalorder %s134, %s135
    %p146 = scmp.eq.s32.totalorder %s16, 0
    %p147 = por %p145, %p146
    %p148 = scmp.ne.s32.totalorder %s134, %s135
    %p149 = scmp.eq.s32.totalorder %s17, 1
    %p150 = por %p148, %p149
    %p152 = scmp.ne.s32.totalorder %s135, %s151
    %p153 = scmp.eq.s32.totalorder %s17, 0
    %p154 = por %p152, %p153
    %p155 = scmp.le.s32.totalorder 1, %s11
    %p156 = scmp.lt.s32.totalorder %s11, 3
    %p157 = pnand %p155, %p156
    %p158 = pneg %p157
    // Predicated region
    $region9: #{tpu_custom_call.1} parent=5 // pred_check
      _
    $region10: #{tpu_custom_call.1} parent=5 // pred_check_branch
      %160 = sbr.rel (%p157) target = $region12
    $region11: #{tpu_custom_call.1} parent=5 // pred_region
      %s161 = ssub.s32 %s11, 1
      // Predicated region
      $region13: #{tpu_custom_call.1} parent=11 // pred_check
        %p162 = pneg %p58
      $region14: #{tpu_custom_call.1} parent=11 // pred_check_branch
        %164 = sbr.rel (%p162) target = $region16
      $region15: #{tpu_custom_call.1} parent=11 // pred_region
        _
      $region16: #{tpu_custom_call.1} parent=11 // pred_fallthru
        _
      // Predicated region
      $region17: #{tpu_custom_call.1} parent=11 // pred_check
        %p165 = pneg %p79
      $region18: #{tpu_custom_call.1} parent=11 // pred_check_branch
        %167 = sbr.rel (%p165) target = $region20
      $region19: #{tpu_custom_call.1} parent=11 // pred_region
        _
      $region20: #{tpu_custom_call.1} parent=11 // pred_fallthru
        _
      // Predicated region
      $region21: #{tpu_custom_call.1} parent=11 // pred_check
        %p168 = pneg %p100
      $region22: #{tpu_custom_call.1} parent=11 // pred_check_branch
        %170 = sbr.rel (%p168) target = $region24
      $region23: #{tpu_custom_call.1} parent=11 // pred_region
        _
      $region24: #{tpu_custom_call.1} parent=11 // pred_fallthru
        _
      // Predicated region
      $region25: #{tpu_custom_call.1} parent=11 // pred_check
        %p171 = pneg %p121
      $region26: #{tpu_custom_call.1} parent=11 // pred_check_branch
        %173 = sbr.rel (%p171) target = $region28
      $region27: #{tpu_custom_call.1} parent=11 // pred_region
        _
      $region28: #{tpu_custom_call.1} parent=11 // pred_fallthru
        _
    $region12: #{tpu_custom_call.1} parent=5 // pred_fallthru
      _
    %p174 = scmp.lt.s32.totalorder %s11, 2
    // Predicated region
    $region29: #{tpu_custom_call.1} parent=5 // pred_check
      %p175 = pneg %p174
    $region30: #{tpu_custom_call.1} parent=5 // pred_check_branch
      %177 = sbr.rel (%p175) target = $region32
    $region31: #{tpu_custom_call.1} parent=5 // pred_region
      // Predicated region
      $region33: #{tpu_custom_call.1} parent=31 // pred_check
        %p178 = pneg %p31
      $region34: #{tpu_custom_call.1} parent=31 // pred_check_branch
        %180 = sbr.rel (%p178) target = $region36
      $region35: #{tpu_custom_call.1} parent=31 // pred_region
        %p181 = scmp.lt.s32.totalorder %s11, 1
        %s182 = scalar_select %p181, %s11, 1
        %s183 = smul.addr %s182, 54
        %s184 = smul.addr %s183, 8
        %s185 = scalar_lea.vmem %s0, %s184
      $region36: #{tpu_custom_call.1} parent=31 // pred_fallthru
        _
    $region32: #{tpu_custom_call.1} parent=5 // pred_fallthru
      _
    %p186 = scmp.le.s32.totalorder 1, %s11
    %p187 = scmp.lt.s32.totalorder %s11, 3
    %p188 = pnand %p186, %p187
    %p189 = pneg %p188
    // Predicated region
    $region37: #{tpu_custom_call.1} parent=5 // pred_check
      _
    $region38: #{tpu_custom_call.1} parent=5 // pred_check_branch
      %191 = sbr.rel (%p188) target = $region40
    $region39: #{tpu_custom_call.1} parent=5 // pred_region
      %s192 = ssub.s32 %s11, 1
      %p193 = scmp.lt.s32.totalorder %s16, 1
      %s194 = scalar_select %p193, %s16, 1
      %s195 = smul.addr %s194, 54
      %s196 = smul.addr %s195, 8
      %s197 = scalar_lea.vmem %s0, %s196
      %p198 = pneg %p37
      %p199 = pneg %p34
      %p200 = pneg %p58
      %p201 = pneg %p55
      %p202 = pneg %p79
      %p203 = pneg %p76
      %p204 = pneg %p100
      %p205 = pneg %p97
      %p206 = pneg %p121
      %p207 = pneg %p118
      %p208 = pneg %p147
      %p209 = pneg %p144
      %p210 = scmp.lt.s32.totalorder %s16, 1
      %s211 = scalar_select %p210, %s16, 1
      %s212 = smul.addr %s211, 32
      %s213 = smul.addr %s212, 8
      %s214 = scalar_lea.vmem %s5, %s213
      %p215 = scmp.lt.s32.totalorder %s16, 1
      %s216 = scalar_select %p215, %s16, 1
      %s217 = smul.addr %s216, 54
      %s218 = smul.addr %s217, 8
      %s219 = scalar_lea.vmem %s0, %s218
      %p220 = scmp.lt.s32.totalorder %s16, 1
      %s221 = scalar_select %p220, %s16, 1
      %s222 = smul.addr %s221, 32
      %s223 = smul.addr %s222, 8
      %s224 = scalar_lea.vmem %s5, %s223
      %vm225 = vcmask 130048
      %226 = vst.msk [vmem:[#allocation2] sm:$0xff] %vm225, 0.0
      %227 = vst.msk [vmem:[#allocation2 + $0x8] sm:$0xff] %vm225, 0.0
      %vm228 = vcmask 123904
      %229 = vst.msk [vmem:[#allocation2 + $0x10] sm:$0x3] %vm228, 0.0
      %230 = vst.msk [vmem:[#allocation2 + $0x18] sm:$0xff] %vm225, 0.0
      %231 = vst.msk [vmem:[#allocation2 + $0x20] sm:$0xff] %vm225, 0.0
      %232 = vst.msk [vmem:[#allocation2 + $0x28] sm:$0x3] %vm228, 0.0
      %233 = vst.msk [vmem:[#allocation2 + $0x30] sm:$0xff] %vm225, 0.0
      %234 = vst.msk [vmem:[#allocation2 + $0x38] sm:$0xff] %vm225, 0.0
      %235 = vst.msk [vmem:[#allocation2 + $0x40] sm:$0x3] %vm228, 0.0
      %236 = vst.msk [vmem:[#allocation2 + $0x48] sm:$0xff] %vm225, 0.0
      %237 = vst.msk [vmem:[#allocation2 + $0x50] sm:$0xff] %vm225, 0.0
      %238 = vst.msk [vmem:[#allocation2 + $0x58] sm:$0x3] %vm228, 0.0
      %239 = vst.msk [vmem:[#allocation2 + $0x60] sm:$0xff] %vm225, 0.0
      %240 = vst.msk [vmem:[#allocation2 + $0x68] sm:$0xff] %vm225, 0.0
      %241 = vst.msk [vmem:[#allocation2 + $0x70] sm:$0x3] %vm228, 0.0
      %242 = vst.msk [vmem:[#allocation2 + $0x78] sm:$0xff] %vm225, 0.0
      %243 = vst.msk [vmem:[#allocation2 + $0x80] sm:$0xff] %vm225, 0.0
      %244 = vst.msk [vmem:[#allocation2 + $0x88] sm:$0x3] %vm228, 0.0
      %245 = vst.msk [vmem:[#allocation2 + $0x90] sm:$0xff] %vm225, 0.0
      %246 = vst.msk [vmem:[#allocation2 + $0x98] sm:$0xff] %vm225, 0.0
      %247 = vst.msk [vmem:[#allocation2 + $0xa0] sm:$0x3] %vm228, 0.0
      %248 = vst.msk [vmem:[#allocation2 + $0xa8] sm:$0xff] %vm225, 0.0
      %249 = vst.msk [vmem:[#allocation2 + $0xb0] sm:$0xff] %vm225, 0.0
      %250 = vst.msk [vmem:[#allocation2 + $0xb8] sm:$0x3] %vm228, 0.0
      %251 = vst.msk [vmem:[#allocation2 + $0xc0] sm:$0xff] %vm225, 0.0
      %252 = vst.msk [vmem:[#allocation2 + $0xc8] sm:$0xff] %vm225, 0.0
      %253 = vst.msk [vmem:[#allocation2 + $0xd0] sm:$0x3] %vm228, 0.0
      %254 = vst.msk [vmem:[#allocation2 + $0xd8] sm:$0xff] %vm225, 0.0
      %255 = vst.msk [vmem:[#allocation2 + $0xe0] sm:$0xff] %vm225, 0.0
      %256 = vst.msk [vmem:[#allocation2 + $0xe8] sm:$0x3] %vm228, 0.0
      %257 = vst.msk [vmem:[#allocation2 + $0xf0] sm:$0xff] %vm225, 0.0
      %258 = vst.msk [vmem:[#allocation2 + $0xf8] sm:$0xff] %vm225, 0.0
      %259 = vst.msk [vmem:[#allocation2 + $0x100] sm:$0x3] %vm228, 0.0
      %260 = vst.msk [vmem:[#allocation2 + $0x108] sm:$0xff] %vm225, 0.0
      %261 = vst.msk [vmem:[#allocation2 + $0x110] sm:$0xff] %vm225, 0.0
      %262 = vst.msk [vmem:[#allocation2 + $0x118] sm:$0x3] %vm228, 0.0
      %263 = vst.msk [vmem:[#allocation2 + $0x120] sm:$0xff] %vm225, 0.0
      %264 = vst.msk [vmem:[#allocation2 + $0x128] sm:$0xff] %vm225, 0.0
      %265 = vst.msk [vmem:[#allocation2 + $0x130] sm:$0x3] %vm228, 0.0
      %266 = vst.msk [vmem:[#allocation2 + $0x138] sm:$0xff] %vm225, 0.0
      %267 = vst.msk [vmem:[#allocation2 + $0x140] sm:$0xff] %vm225, 0.0
      %268 = vst.msk [vmem:[#allocation2 + $0x148] sm:$0x3] %vm228, 0.0
      %269 = vst.msk [vmem:[#allocation2 + $0x150] sm:$0xff] %vm225, 0.0
      %270 = vst.msk [vmem:[#allocation2 + $0x158] sm:$0xff] %vm225, 0.0
      %271 = vst.msk [vmem:[#allocation2 + $0x160] sm:$0x3] %vm228, 0.0
      %272 = vst.msk [vmem:[#allocation2 + $0x168] sm:$0xff] %vm225, 0.0
      %273 = vst.msk [vmem:[#allocation2 + $0x170] sm:$0xff] %vm225, 0.0
      %274 = vst.msk [vmem:[#allocation2 + $0x178] sm:$0x3] %vm228, 0.0
      %275 = vst.msk [vmem:[#allocation2 + $0x180] sm:$0xff] %vm225, 0.0
      %276 = vst.msk [vmem:[#allocation2 + $0x188] sm:$0xff] %vm225, 0.0
      %277 = vst.msk [vmem:[#allocation2 + $0x190] sm:$0x3] %vm228, 0.0
      %278 = vst.msk [vmem:[#allocation2 + $0x198] sm:$0xff] %vm225, 0.0
      %279 = vst.msk [vmem:[#allocation2 + $0x1a0] sm:$0xff] %vm225, 0.0
      %280 = vst.msk [vmem:[#allocation2 + $0x1a8] sm:$0x3] %vm228, 0.0
      %v281 = vld [vmem:[%s2] sm:$0x1]
      %v282 = vld [vmem:[%s4] sm:$0x1]
      loop: start=0, step=1, limit=2
      $region41: #{tpu_custom_call.1} parent=39 // loop_pre_header
        _
      $region42: #{tpu_custom_call.1} parent=39 // loop_header
        %s284 = sphi 0, %s288
        %p285 = scmp.ge.s32.totalorder %s284, 2
      $region43: #{tpu_custom_call.1} parent=39 // loop_header_branch
        %287 = sbr.rel (%p285) target = $region47
      $region44: #{tpu_custom_call.1} parent=39 // loop_body
        %s289 = smul.u32 %s284, 8
        %s290 = smul.u32 %s289, 24
        %s291 = scalar_lea.vmem %s219, %s290
        %v292 = vld [vmem:[%s291] sm:$0xff]
        %v293 = vld [vmem:[%s291 + $0x8] sm:$0xff]
        %v294 = vld [vmem:[%s291 + $0x18] sm:$0xff]
        %v295 = vld [vmem:[%s291 + $0x20] sm:$0xff]
        %v296 = vld [vmem:[%s291 + $0x30] sm:$0xff]
        %v297 = vld [vmem:[%s291 + $0x38] sm:$0xff]
        %v298 = vld [vmem:[%s291 + $0x48] sm:$0xff]
        %v299 = vld [vmem:[%s291 + $0x50] sm:$0xff]
        %v300 = vld [vmem:[%s291 + $0x60] sm:$0xff]
        %v301 = vld [vmem:[%s291 + $0x68] sm:$0xff]
        %v302 = vld [vmem:[%s291 + $0x78] sm:$0xff]
        %v303 = vld [vmem:[%s291 + $0x80] sm:$0xff]
        %v304 = vld [vmem:[%s291 + $0x90] sm:$0xff]
        %v305 = vld [vmem:[%s291 + $0x98] sm:$0xff]
        %v306 = vld [vmem:[%s291 + $0xa8] sm:$0xff]
        %v307 = vld [vmem:[%s291 + $0xb0] sm:$0xff]
        %v308 = vld [vmem:[%s1] sm:$0xff]
        %v309 = vld [vmem:[%s291 + $0x1] sm:$0xff]
        %v310 = vld [vmem:[%s291 + $0x9] sm:$0xff]
        %v311 = vld [vmem:[%s291 + $0x19] sm:$0xff]
        %v312 = vld [vmem:[%s291 + $0x21] sm:$0xff]
        %v313 = vld [vmem:[%s291 + $0x31] sm:$0xff]
        %v314 = vld [vmem:[%s291 + $0x39] sm:$0xff]
        %v315 = vld [vmem:[%s291 + $0x49] sm:$0xff]
        %v316 = vld [vmem:[%s291 + $0x51] sm:$0xff]
        %v317 = vld [vmem:[%s291 + $0x61] sm:$0xff]
        %v318 = vld [vmem:[%s291 + $0x69] sm:$0xff]
        %v319 = vld [vmem:[%s291 + $0x79] sm:$0xff]
        %v320 = vld [vmem:[%s291 + $0x81] sm:$0xff]
        %v321 = vld [vmem:[%s291 + $0x91] sm:$0xff]
        %v322 = vld [vmem:[%s291 + $0x99] sm:$0xff]
        %v323 = vld [vmem:[%s291 + $0xa9] sm:$0xff]
        %v324 = vld [vmem:[%s291 + $0xb1] sm:$0xff]
        %s325 = scalar_lea.vmem %s1, 8
        %v326 = vld [vmem:[%s325] sm:$0xff]
        %vm327 = vcmask 64512
        %v329 = vsel %vm327, %v309, 0
        %v332 = vsel %vm327, %v310, 0
        %v335 = vsel %vm327, %v311, 0
        %v338 = vsel %vm327, %v312, 0
        %v341 = vsel %vm327, %v313, 0
        %v344 = vsel %vm327, %v314, 0
        %v347 = vsel %vm327, %v315, 0
        %v350 = vsel %vm327, %v316, 0
        %v353 = vsel %vm327, %v317, 0
        %v356 = vsel %vm327, %v318, 0
        %v359 = vsel %vm327, %v319, 0
        %v362 = vsel %vm327, %v320, 0
        %v365 = vsel %vm327, %v321, 0
        %v368 = vsel %vm327, %v322, 0
        %v371 = vsel %vm327, %v323, 0
        %v374 = vsel %vm327, %v324, 0
        %376 = vmatprep.subr.mxu0 0.0
        %377 = vmatpush1.msra.mxu0 %v326
        %378 = vmatprep.subr.mxu0 0.0
        %379 = vmatpush1.msra.mxu0 0.0
        %380 = vmatprep.subr.mxu0 0.0
        %381 = vmatpush1.msra.mxu0 0.0
        %382 = vmatprep.subr.mxu0 0.0
        %383 = vmatpush1.msra.mxu0 0.0
        %384 = vmatprep.subr.mxu0 0.0
        %385 = vmatpush1.msra.mxu0 0.0
        %386 = vmatprep.subr.mxu0 0.0
        %387 = vmatpush1.msra.mxu0 0.0
        %388 = vmatprep.subr.mxu0 0.0
        %389 = vmatpush1.msra.mxu0 0.0
        %390 = vmatprep.subr.mxu0 0.0
        %391 = vmatpush1.msra.mxu0 0.0
        %392 = vmatprep.subr.mxu0 0.0
        %393 = vmatpush1.msra.mxu0 0.0
        %394 = vmatprep.subr.mxu0 0.0
        %395 = vmatpush1.msra.mxu0 0.0
        %396 = vmatprep.subr.mxu0 0.0
        %397 = vmatpush1.msra.mxu0 0.0
        %398 = vmatprep.subr.mxu0 0.0
        %399 = vmatpush1.msra.mxu0 0.0
        %400 = vmatprep.subr.mxu0 0.0
        %401 = vmatpush1.msra.mxu0 0.0
        %402 = vmatprep.subr.mxu0 0.0
        %403 = vmatpush1.msra.mxu0 0.0
        %404 = vmatprep.subr.mxu0 0.0
        %405 = vmatpush1.msra.mxu0 0.0
        %406 = vmatprep.subr.mxu0 0.0
        %407 = vmatpush1.msra.mxu0 0.0
        %408 = vmatprep.subr.mxu0 0.0
        %409 = vmatpush1.msra.mxu0 0.0
        %410 = vmatprep.subr.mxu0 0.0
        %411 = vmatpush1.msra.mxu0 0.0
        %412 = vmatprep.subr.mxu0 0.0
        %413 = vmatpush1.msra.mxu0 0.0
        %414 = vmatprep.subr.mxu0 0.0
        %415 = vmatpush1.msra.mxu0 0.0
        %416 = vmatprep.subr.mxu0 0.0
        %417 = vmatpush1.msra.mxu0 0.0
        %418 = vmatprep.subr.mxu0 0.0
        %419 = vmatpush1.msra.mxu0 0.0
        %420 = vmatprep.subr.mxu0 0.0
        %421 = vmatpush1.msra.mxu0 0.0
        %422 = vmatprep.subr.mxu0 0.0
        %423 = vmatpush1.msra.mxu0 0.0
        %424 = vmatprep.subr.mxu0 0.0
        %425 = vmatpush1.msra.mxu0 0.0
        %426 = vmatprep.subr.mxu0 0.0
        %427 = vmatpush1.msra.mxu0 0.0
        %428 = vmatprep.subr.mxu0 0.0
        %429 = vmatpush1.msra.mxu0 0.0
        %430 = vmatprep.subr.mxu0 0.0
        %431 = vmatpush1.msra.mxu0 0.0
        %432 = vmatprep.subr.mxu0 0.0
        %433 = vmatpush1.msra.mxu0 0.0
        %434 = vmatprep.subr.mxu0 0.0
        %435 = vmatpush1.msra.mxu0 0.0
        %436 = vmatprep.subr.mxu0 0.0
        %437 = vmatpush1.msra.mxu0 0.0
        %438 = vmatprep.subr.mxu0 0.0
        %439 = vmatpush1.msra.mxu0 0.0
        %440 = vmatprep.mubr.f32.mxu0 0.0
        %441 = vmatmul.mubr.f32.gmra.mrb[0].mxu0 %v329
        %v442 = vpop.f32.mrb[0].mxu0
        %v443 = vadd.f32 0.0, %v442
        %v444 = vpop.f32.mrb[0].mxu0
        %445 = vmatprep.mubr.f32.mxu0 0.0
        %446 = vmatmul.mubr.f32.gmra.mrb[0].mxu0 %v332
        %v447 = vpop.f32.mrb[0].mxu0
        %v448 = vadd.f32 0.0, %v447
        %v449 = vpop.f32.mrb[0].mxu0
        %450 = vmatprep.mubr.f32.mxu0 0.0
        %451 = vmatmul.mubr.f32.gmra.mrb[0].mxu0 %v335
        %v452 = vpop.f32.mrb[0].mxu0
        %v453 = vadd.f32 0.0, %v452
        %v454 = vpop.f32.mrb[0].mxu0
        %455 = vmatprep.mubr.f32.mxu0 0.0
        %456 = vmatmul.mubr.f32.gmra.mrb[0].mxu0 %v338
        %v457 = vpop.f32.mrb[0].mxu0
        %v458 = vadd.f32 0.0, %v457
        %v459 = vpop.f32.mrb[0].mxu0
        %460 = vmatprep.mubr.f32.mxu0 0.0
        %461 = vmatmul.mubr.f32.gmra.mrb[0].mxu0 %v341
        %v462 = vpop.f32.mrb[0].mxu0
        %v463 = vadd.f32 0.0, %v462
        %v464 = vpop.f32.mrb[0].mxu0
        %465 = vmatprep.mubr.f32.mxu0 0.0
        %466 = vmatmul.mubr.f32.gmra.mrb[0].mxu0 %v344
        %v467 = vpop.f32.mrb[0].mxu0
        %v468 = vadd.f32 0.0, %v467
        %v469 = vpop.f32.mrb[0].mxu0
        %470 = vmatprep.mubr.f32.mxu0 0.0
        %471 = vmatmul.mubr.f32.gmra.mrb[0].mxu0 %v347
        %v472 = vpop.f32.mrb[0].mxu0
        %v473 = vadd.f32 0.0, %v472
        %v474 = vpop.f32.mrb[0].mxu0
        %475 = vmatprep.mubr.f32.mxu0 0.0
        %476 = vmatmul.mubr.f32.gmra.mrb[0].mxu0 %v350
        %v477 = vpop.f32.mrb[0].mxu0
        %v478 = vadd.f32 0.0, %v477
        %v479 = vpop.f32.mrb[0].mxu0
        %480 = vmatprep.mubr.f32.mxu0 0.0
        %481 = vmatmul.mubr.f32.gmra.mrb[0].mxu0 %v353
        %v482 = vpop.f32.mrb[0].mxu0
        %v483 = vadd.f32 0.0, %v482
        %v484 = vpop.f32.mrb[0].mxu0
        %485 = vmatprep.mubr.f32.mxu0 0.0
        %486 = vmatmul.mubr.f32.gmra.mrb[0].mxu0 %v356
        %v487 = vpop.f32.mrb[0].mxu0
        %v488 = vadd.f32 0.0, %v487
        %v489 = vpop.f32.mrb[0].mxu0
        %490 = vmatprep.mubr.f32.mxu0 0.0
        %491 = vmatmul.mubr.f32.gmra.mrb[0].mxu0 %v359
        %v492 = vpop.f32.mrb[0].mxu0
        %v493 = vadd.f32 0.0, %v492
        %v494 = vpop.f32.mrb[0].mxu0
        %495 = vmatprep.mubr.f32.mxu0 0.0
        %496 = vmatmul.mubr.f32.gmra.mrb[0].mxu0 %v362
        %v497 = vpop.f32.mrb[0].mxu0
        %v498 = vadd.f32 0.0, %v497
        %v499 = vpop.f32.mrb[0].mxu0
        %500 = vmatprep.mubr.f32.mxu0 0.0
        %501 = vmatmul.mubr.f32.gmra.mrb[0].mxu0 %v365
        %v502 = vpop.f32.mrb[0].mxu0
        %v503 = vadd.f32 0.0, %v502
        %v504 = vpop.f32.mrb[0].mxu0
        %505 = vmatprep.mubr.f32.mxu0 0.0
        %506 = vmatmul.mubr.f32.gmra.mrb[0].mxu0 %v368
        %v507 = vpop.f32.mrb[0].mxu0
        %v508 = vadd.f32 0.0, %v507
        %v509 = vpop.f32.mrb[0].mxu0
        %510 = vmatprep.mubr.f32.mxu0 0.0
        %511 = vmatmul.mubr.f32.gmra.mrb[0].mxu0 %v371
        %v512 = vpop.f32.mrb[0].mxu0
        %v513 = vadd.f32 0.0, %v512
        %v514 = vpop.f32.mrb[0].mxu0
        %515 = vmatprep.mubr.f32.mxu0 0.0
        %516 = vmatmul.mubr.f32.gmra.mrb[0].mxu0 %v374
        %v517 = vpop.f32.mrb[0].mxu0
        %v518 = vadd.f32 0.0, %v517
        %v519 = vpop.f32.mrb[0].mxu0
        %520 = vdwg.mxu0
        %v522 = vsel %vm327, %v292, 0
        %v525 = vsel %vm327, %v293, 0
        %v528 = vsel %vm327, %v294, 0
        %v531 = vsel %vm327, %v295, 0
        %v534 = vsel %vm327, %v296, 0
        %v537 = vsel %vm327, %v297, 0
        %v540 = vsel %vm327, %v298, 0
        %v543 = vsel %vm327, %v299, 0
        %v546 = vsel %vm327, %v300, 0
        %v549 = vsel %vm327, %v301, 0
        %v552 = vsel %vm327, %v302, 0
        %v555 = vsel %vm327, %v303, 0
        %v558 = vsel %vm327, %v304, 0
        %v561 = vsel %vm327, %v305, 0
        %v564 = vsel %vm327, %v306, 0
        %v567 = vsel %vm327, %v307, 0
        %569 = vmatprep.subr.mxu0 0.0
        %570 = vmatpush1.msra.mxu0 %v308
        %571 = vmatprep.subr.mxu0 0.0
        %572 = vmatpush1.msra.mxu0 0.0
        %573 = vmatprep.subr.mxu0 0.0
        %574 = vmatpush1.msra.mxu0 0.0
        %575 = vmatprep.subr.mxu0 0.0
        %576 = vmatpush1.msra.mxu0 0.0
        %577 = vmatprep.subr.mxu0 0.0
        %578 = vmatpush1.msra.mxu0 0.0
        %579 = vmatprep.subr.mxu0 0.0
        %580 = vmatpush1.msra.mxu0 0.0
        %581 = vmatprep.subr.mxu0 0.0
        %582 = vmatpush1.msra.mxu0 0.0
        %583 = vmatprep.subr.mxu0 0.0
        %584 = vmatpush1.msra.mxu0 0.0
        %585 = vmatprep.subr.mxu0 0.0
        %586 = vmatpush1.msra.mxu0 0.0
        %587 = vmatprep.subr.mxu0 0.0
        %588 = vmatpush1.msra.mxu0 0.0
        %589 = vmatprep.subr.mxu0 0.0
        %590 = vmatpush1.msra.mxu0 0.0
        %591 = vmatprep.subr.mxu0 0.0
        %592 = vmatpush1.msra.mxu0 0.0
        %593 = vmatprep.subr.mxu0 0.0
        %594 = vmatpush1.msra.mxu0 0.0
        %595 = vmatprep.subr.mxu0 0.0
        %596 = vmatpush1.msra.mxu0 0.0
        %597 = vmatprep.subr.mxu0 0.0
        %598 = vmatpush1.msra.mxu0 0.0
        %599 = vmatprep.subr.mxu0 0.0
        %600 = vmatpush1.msra.mxu0 0.0
        %601 = vmatprep.subr.mxu0 0.0
        %602 = vmatpush1.msra.mxu0 0.0
        %603 = vmatprep.subr.mxu0 0.0
        %604 = vmatpush1.msra.mxu0 0.0
        %605 = vmatprep.subr.mxu0 0.0
        %606 = vmatpush1.msra.mxu0 0.0
        %607 = vmatprep.subr.mxu0 0.0
        %608 = vmatpush1.msra.mxu0 0.0
        %609 = vmatprep.subr.mxu0 0.0
        %610 = vmatpush1.msra.mxu0 0.0
        %611 = vmatprep.subr.mxu0 0.0
        %612 = vmatpush1.msra.mxu0 0.0
        %613 = vmatprep.subr.mxu0 0.0
        %614 = vmatpush1.msra.mxu0 0.0
        %615 = vmatprep.subr.mxu0 0.0
        %616 = vmatpush1.msra.mxu0 0.0
        %617 = vmatprep.subr.mxu0 0.0
        %618 = vmatpush1.msra.mxu0 0.0
        %619 = vmatprep.subr.mxu0 0.0
        %620 = vmatpush1.msra.mxu0 0.0
        %621 = vmatprep.subr.mxu0 0.0
        %622 = vmatpush1.msra.mxu0 0.0
        %623 = vmatprep.subr.mxu0 0.0
        %624 = vmatpush1.msra.mxu0 0.0
        %625 = vmatprep.subr.mxu0 0.0
        %626 = vmatpush1.msra.mxu0 0.0
        %627 = vmatprep.subr.mxu0 0.0
        %628 = vmatpush1.msra.mxu0 0.0
        %629 = vmatprep.subr.mxu0 0.0
        %630 = vmatpush1.msra.mxu0 0.0
        %631 = vmatprep.subr.mxu0 0.0
        %632 = vmatpush1.msra.mxu0 0.0
        %633 = vmatprep.mubr.f32.mxu0 0.0
        %634 = vmatmul.mubr.f32.gmra.mrb[0].mxu0 %v522
        %v635 = vpop.f32.mrb[0].mxu0
        %v636 = vadd.f32 %v443, %v635
        %v637 = vpop.f32.mrb[0].mxu0
        %638 = vmatprep.mubr.f32.mxu0 0.0
        %639 = vmatmul.mubr.f32.gmra.mrb[0].mxu0 %v525
        %v640 = vpop.f32.mrb[0].mxu0
        %v641 = vadd.f32 %v448, %v640
        %v642 = vpop.f32.mrb[0].mxu0
        %643 = vmatprep.mubr.f32.mxu0 0.0
        %644 = vmatmul.mubr.f32.gmra.mrb[0].mxu0 %v528
        %v645 = vpop.f32.mrb[0].mxu0
        %v646 = vadd.f32 %v453, %v645
        %v647 = vpop.f32.mrb[0].mxu0
        %648 = vmatprep.mubr.f32.mxu0 0.0
        %649 = vmatmul.mubr.f32.gmra.mrb[0].mxu0 %v531
        %v650 = vpop.f32.mrb[0].mxu0
        %v651 = vadd.f32 %v458, %v650
        %v652 = vpop.f32.mrb[0].mxu0
        %653 = vmatprep.mubr.f32.mxu0 0.0
        %654 = vmatmul.mubr.f32.gmra.mrb[0].mxu0 %v534
        %v655 = vpop.f32.mrb[0].mxu0
        %v656 = vadd.f32 %v463, %v655
        %v657 = vpop.f32.mrb[0].mxu0
        %658 = vmatprep.mubr.f32.mxu0 0.0
        %659 = vmatmul.mubr.f32.gmra.mrb[0].mxu0 %v537
        %v660 = vpop.f32.mrb[0].mxu0
        %v661 = vadd.f32 %v468, %v660
        %v662 = vpop.f32.mrb[0].mxu0
        %663 = vmatprep.mubr.f32.mxu0 0.0
        %664 = vmatmul.mubr.f32.gmra.mrb[0].mxu0 %v540
        %v665 = vpop.f32.mrb[0].mxu0
        %v666 = vadd.f32 %v473, %v665
        %v667 = vpop.f32.mrb[0].mxu0
        %668 = vmatprep.mubr.f32.mxu0 0.0
        %669 = vmatmul.mubr.f32.gmra.mrb[0].mxu0 %v543
        %v670 = vpop.f32.mrb[0].mxu0
        %v671 = vadd.f32 %v478, %v670
        %v672 = vpop.f32.mrb[0].mxu0
        %673 = vmatprep.mubr.f32.mxu0 0.0
        %674 = vmatmul.mubr.f32.gmra.mrb[0].mxu0 %v546
        %v675 = vpop.f32.mrb[0].mxu0
        %v676 = vadd.f32 %v483, %v675
        %v677 = vpop.f32.mrb[0].mxu0
        %678 = vmatprep.mubr.f32.mxu0 0.0
        %679 = vmatmul.mubr.f32.gmra.mrb[0].mxu0 %v549
        %v680 = vpop.f32.mrb[0].mxu0
        %v681 = vadd.f32 %v488, %v680
        %v682 = vpop.f32.mrb[0].mxu0
        %683 = vmatprep.mubr.f32.mxu0 0.0
        %684 = vmatmul.mubr.f32.gmra.mrb[0].mxu0 %v552
        %v685 = vpop.f32.mrb[0].mxu0
        %v686 = vadd.f32 %v493, %v685
        %v687 = vpop.f32.mrb[0].mxu0
        %688 = vmatprep.mubr.f32.mxu0 0.0
        %689 = vmatmul.mubr.f32.gmra.mrb[0].mxu0 %v555
        %v690 = vpop.f32.mrb[0].mxu0
        %v691 = vadd.f32 %v498, %v690
        %v692 = vpop.f32.mrb[0].mxu0
        %693 = vmatprep.mubr.f32.mxu0 0.0
        %694 = vmatmul.mubr.f32.gmra.mrb[0].mxu0 %v558
        %v695 = vpop.f32.mrb[0].mxu0
        %v696 = vadd.f32 %v503, %v695
        %v697 = vpop.f32.mrb[0].mxu0
        %698 = vmatprep.mubr.f32.mxu0 0.0
        %699 = vmatmul.mubr.f32.gmra.mrb[0].mxu0 %v561
        %v700 = vpop.f32.mrb[0].mxu0
        %v701 = vadd.f32 %v508, %v700
        %v702 = vpop.f32.mrb[0].mxu0
        %703 = vmatprep.mubr.f32.mxu0 0.0
        %704 = vmatmul.mubr.f32.gmra.mrb[0].mxu0 %v564
        %v705 = vpop.f32.mrb[0].mxu0
        %v706 = vadd.f32 %v513, %v705
        %v707 = vpop.f32.mrb[0].mxu0
        %708 = vmatprep.mubr.f32.mxu0 0.0
        %709 = vmatmul.mubr.f32.gmra.mrb[0].mxu0 %v567
        %v710 = vpop.f32.mrb[0].mxu0
        %v711 = vadd.f32 %v518, %v710
        %v712 = vpop.f32.mrb[0].mxu0
        %713 = vdwg.mxu0
        %v714 = vld [vmem:[%s291 + $0x2] sm:$0xff]
        %v715 = vld [vmem:[%s291 + $0xa] sm:$0xff]
        %v716 = vld [vmem:[%s291 + $0x1a] sm:$0xff]
        %v717 = vld [vmem:[%s291 + $0x22] sm:$0xff]
        %v718 = vld [vmem:[%s291 + $0x32] sm:$0xff]
        %v719 = vld [vmem:[%s291 + $0x3a] sm:$0xff]
        %v720 = vld [vmem:[%s291 + $0x4a] sm:$0xff]
        %v721 = vld [vmem:[%s291 + $0x52] sm:$0xff]
        %v722 = vld [vmem:[%s291 + $0x62] sm:$0xff]
        %v723 = vld [vmem:[%s291 + $0x6a] sm:$0xff]
        %v724 = vld [vmem:[%s291 + $0x7a] sm:$0xff]
        %v725 = vld [vmem:[%s291 + $0x82] sm:$0xff]
        %v726 = vld [vmem:[%s291 + $0x92] sm:$0xff]
        %v727 = vld [vmem:[%s291 + $0x9a] sm:$0xff]
        %v728 = vld [vmem:[%s291 + $0xaa] sm:$0xff]
        %v729 = vld [vmem:[%s291 + $0xb2] sm:$0xff]
        %s730 = scalar_lea.vmem %s1, 16
        %v731 = vld [vmem:[%s730] sm:$0xff]
        %v733 = vsel %vm327, %v714, 0
        %v736 = vsel %vm327, %v715, 0
        %v739 = vsel %vm327, %v716, 0
        %v742 = vsel %vm327, %v717, 0
        %v745 = vsel %vm327, %v718, 0
        %v748 = vsel %vm327, %v719, 0
        %v751 = vsel %vm327, %v720, 0
        %v754 = vsel %vm327, %v721, 0
        %v757 = vsel %vm327, %v722, 0
        %v760 = vsel %vm327, %v723, 0
        %v763 = vsel %vm327, %v724, 0
        %v766 = vsel %vm327, %v725, 0
        %v769 = vsel %vm327, %v726, 0
        %v772 = vsel %vm327, %v727, 0
        %v775 = vsel %vm327, %v728, 0
        %v778 = vsel %vm327, %v729, 0
        %780 = vmatprep.subr.mxu0 0.0
        %781 = vmatpush1.msra.mxu0 %v731
        %782 = vmatprep.subr.mxu0 0.0
        %783 = vmatpush1.msra.mxu0 0.0
        %784 = vmatprep.subr.mxu0 0.0
        %785 = vmatpush1.msra.mxu0 0.0
        %786 = vmatprep.subr.mxu0 0.0
        %787 = vmatpush1.msra.mxu0 0.0
        %788 = vmatprep.subr.mxu0 0.0
        %789 = vmatpush1.msra.mxu0 0.0
        %790 = vmatprep.subr.mxu0 0.0
        %791 = vmatpush1.msra.mxu0 0.0
        %792 = vmatprep.subr.mxu0 0.0
        %793 = vmatpush1.msra.mxu0 0.0
        %794 = vmatprep.subr.mxu0 0.0
        %795 = vmatpush1.msra.mxu0 0.0
        %796 = vmatprep.subr.mxu0 0.0
        %797 = vmatpush1.msra.mxu0 0.0
        %798 = vmatprep.subr.mxu0 0.0
        %799 = vmatpush1.msra.mxu0 0.0
        %800 = vmatprep.subr.mxu0 0.0
        %801 = vmatpush1.msra.mxu0 0.0
        %802 = vmatprep.subr.mxu0 0.0
        %803 = vmatpush1.msra.mxu0 0.0
        %804 = vmatprep.subr.mxu0 0.0
        %805 = vmatpush1.msra.mxu0 0.0
        %806 = vmatprep.subr.mxu0 0.0
        %807 = vmatpush1.msra.mxu0 0.0
        %808 = vmatprep.subr.mxu0 0.0
        %809 = vmatpush1.msra.mxu0 0.0
        %810 = vmatprep.subr.mxu0 0.0
        %811 = vmatpush1.msra.mxu0 0.0
        %812 = vmatprep.subr.mxu0 0.0
        %813 = vmatpush1.msra.mxu0 0.0
        %814 = vmatprep.subr.mxu0 0.0
        %815 = vmatpush1.msra.mxu0 0.0
        %816 = vmatprep.subr.mxu0 0.0
        %817 = vmatpush1.msra.mxu0 0.0
        %818 = vmatprep.subr.mxu0 0.0
        %819 = vmatpush1.msra.mxu0 0.0
        %820 = vmatprep.subr.mxu0 0.0
        %821 = vmatpush1.msra.mxu0 0.0
        %822 = vmatprep.subr.mxu0 0.0
        %823 = vmatpush1.msra.mxu0 0.0
        %824 = vmatprep.subr.mxu0 0.0
        %825 = vmatpush1.msra.mxu0 0.0
        %826 = vmatprep.subr.mxu0 0.0
        %827 = vmatpush1.msra.mxu0 0.0
        %828 = vmatprep.subr.mxu0 0.0
        %829 = vmatpush1.msra.mxu0 0.0
        %830 = vmatprep.subr.mxu0 0.0
        %831 = vmatpush1.msra.mxu0 0.0
        %832 = vmatprep.subr.mxu0 0.0
        %833 = vmatpush1.msra.mxu0 0.0
        %834 = vmatprep.subr.mxu0 0.0
        %835 = vmatpush1.msra.mxu0 0.0
        %836 = vmatprep.subr.mxu0 0.0
        %837 = vmatpush1.msra.mxu0 0.0
        %838 = vmatprep.subr.mxu0 0.0
        %839 = vmatpush1.msra.mxu0 0.0
        %840 = vmatprep.subr.mxu0 0.0
        %841 = vmatpush1.msra.mxu0 0.0
        %842 = vmatprep.subr.mxu0 0.0
        %843 = vmatpush1.msra.mxu0 0.0
        %844 = vmatprep.mubr.f32.mxu0 0.0
        %845 = vmatmul.mubr.f32.gmra.mrb[0].mxu0 %v733
        %v846 = vpop.f32.mrb[0].mxu0
        %v847 = vadd.f32 0.0, %v846
        %v848 = vpop.f32.mrb[0].mxu0
        %849 = vmatprep.mubr.f32.mxu0 0.0
        %850 = vmatmul.mubr.f32.gmra.mrb[0].mxu0 %v736
        %v851 = vpop.f32.mrb[0].mxu0
        %v852 = vadd.f32 0.0, %v851
        %v853 = vpop.f32.mrb[0].mxu0
        %854 = vmatprep.mubr.f32.mxu0 0.0
        %855 = vmatmul.mubr.f32.gmra.mrb[0].mxu0 %v739
        %v856 = vpop.f32.mrb[0].mxu0
        %v857 = vadd.f32 0.0, %v856
        %v858 = vpop.f32.mrb[0].mxu0
        %859 = vmatprep.mubr.f32.mxu0 0.0
        %860 = vmatmul.mubr.f32.gmra.mrb[0].mxu0 %v742
        %v861 = vpop.f32.mrb[0].mxu0
        %v862 = vadd.f32 0.0, %v861
        %v863 = vpop.f32.mrb[0].mxu0
        %864 = vmatprep.mubr.f32.mxu0 0.0
        %865 = vmatmul.mubr.f32.gmra.mrb[0].mxu0 %v745
        %v866 = vpop.f32.mrb[0].mxu0
        %v867 = vadd.f32 0.0, %v866
        %v868 = vpop.f32.mrb[0].mxu0
        %869 = vmatprep.mubr.f32.mxu0 0.0
        %870 = vmatmul.mubr.f32.gmra.mrb[0].mxu0 %v748
        %v871 = vpop.f32.mrb[0].mxu0
        %v872 = vadd.f32 0.0, %v871
        %v873 = vpop.f32.mrb[0].mxu0
        %874 = vmatprep.mubr.f32.mxu0 0.0
        %875 = vmatmul.mubr.f32.gmra.mrb[0].mxu0 %v751
        %v876 = vpop.f32.mrb[0].mxu0
        %v877 = vadd.f32 0.0, %v876
        %v878 = vpop.f32.mrb[0].mxu0
        %879 = vmatprep.mubr.f32.mxu0 0.0
        %880 = vmatmul.mubr.f32.gmra.mrb[0].mxu0 %v754
        %v881 = vpop.f32.mrb[0].mxu0
        %v882 = vadd.f32 0.0, %v881
        %v883 = vpop.f32.mrb[0].mxu0
        %884 = vmatprep.mubr.f32.mxu0 0.0
        %885 = vmatmul.mubr.f32.gmra.mrb[0].mxu0 %v757
        %v886 = vpop.f32.mrb[0].mxu0
        %v887 = vadd.f32 0.0, %v886
        %v888 = vpop.f32.mrb[0].mxu0
        %889 = vmatprep.mubr.f32.mxu0 0.0
        %890 = vmatmul.mubr.f32.gmra.mrb[0].mxu0 %v760
        %v891 = vpop.f32.mrb[0].mxu0
        %v892 = vadd.f32 0.0, %v891
        %v893 = vpop.f32.mrb[0].mxu0
        %894 = vmatprep.mubr.f32.mxu0 0.0
        %895 = vmatmul.mubr.f32.gmra.mrb[0].mxu0 %v763
        %v896 = vpop.f32.mrb[0].mxu0
        %v897 = vadd.f32 0.0, %v896
        %v898 = vpop.f32.mrb[0].mxu0
        %899 = vmatprep.mubr.f32.mxu0 0.0
        %900 = vmatmul.mubr.f32.gmra.mrb[0].mxu0 %v766
        %v901 = vpop.f32.mrb[0].mxu0
        %v902 = vadd.f32 0.0, %v901
        %v903 = vpop.f32.mrb[0].mxu0
        %904 = vmatprep.mubr.f32.mxu0 0.0
        %905 = vmatmul.mubr.f32.gmra.mrb[0].mxu0 %v769
        %v906 = vpop.f32.mrb[0].mxu0
        %v907 = vadd.f32 0.0, %v906
        %v908 = vpop.f32.mrb[0].mxu0
        %909 = vmatprep.mubr.f32.mxu0 0.0
        %910 = vmatmul.mubr.f32.gmra.mrb[0].mxu0 %v772
        %v911 = vpop.f32.mrb[0].mxu0
        %v912 = vadd.f32 0.0, %v911
        %v913 = vpop.f32.mrb[0].mxu0
        %914 = vmatprep.mubr.f32.mxu0 0.0
        %915 = vmatmul.mubr.f32.gmra.mrb[0].mxu0 %v775
        %v916 = vpop.f32.mrb[0].mxu0
        %v917 = vadd.f32 0.0, %v916
        %v918 = vpop.f32.mrb[0].mxu0
        %919 = vmatprep.mubr.f32.mxu0 0.0
        %920 = vmatmul.mubr.f32.gmra.mrb[0].mxu0 %v778
        %v921 = vpop.f32.mrb[0].mxu0
        %v922 = vadd.f32 0.0, %v921
        %v923 = vpop.f32.mrb[0].mxu0
        %924 = vdwg.mxu0
        %v925 = vadd.f32 %v636, %v847
        %v926 = vadd.f32 %v641, %v852
        %v927 = vadd.f32 %v646, %v857
        %v928 = vadd.f32 %v651, %v862
        %v929 = vadd.f32 %v656, %v867
        %v930 = vadd.f32 %v661, %v872
        %v931 = vadd.f32 %v666, %v877
        %v932 = vadd.f32 %v671, %v882
        %v933 = vadd.f32 %v676, %v887
        %v934 = vadd.f32 %v681, %v892
        %v935 = vadd.f32 %v686, %v897
        %v936 = vadd.f32 %v691, %v902
        %v937 = vadd.f32 %v696, %v907
        %v938 = vadd.f32 %v701, %v912
        %v939 = vadd.f32 %v706, %v917
        %v940 = vadd.f32 %v711, %v922
        %s941 = sadd.s32 %s289, 1
        %s942 = smul.u32 %s941, 24
        %s943 = scalar_lea.vmem %s219, %s942
        %v944 = vld [vmem:[%s943] sm:$0xff]
        %v945 = vld [vmem:[%s943 + $0x8] sm:$0xff]
        %v946 = vld [vmem:[%s943 + $0x18] sm:$0xff]
        %v947 = vld [vmem:[%s943 + $0x20] sm:$0xff]
        %v948 = vld [vmem:[%s943 + $0x30] sm:$0xff]
        %v949 = vld [vmem:[%s943 + $0x38] sm:$0xff]
        %v950 = vld [vmem:[%s943 + $0x48] sm:$0xff]
        %v951 = vld [vmem:[%s943 + $0x50] sm:$0xff]
        %v952 = vld [vmem:[%s943 + $0x60] sm:$0xff]
        %v953 = vld [vmem:[%s943 + $0x68] sm:$0xff]
        %v954 = vld [vmem:[%s943 + $0x78] sm:$0xff]
        %v955 = vld [vmem:[%s943 + $0x80] sm:$0xff]
        %v956 = vld [vmem:[%s943 + $0x90] sm:$0xff]
        %v957 = vld [vmem:[%s943 + $0x98] sm:$0xff]
        %v958 = vld [vmem:[%s943 + $0xa8] sm:$0xff]
        %v959 = vld [vmem:[%s943 + $0xb0] sm:$0xff]
        %s960 = scalar_lea.vmem %s1, 24
        %v961 = vld [vmem:[%s960] sm:$0xff]
        %v963 = vsel %vm327, %v944, 0
        %v966 = vsel %vm327, %v945, 0
        %v969 = vsel %vm327, %v946, 0
        %v972 = vsel %vm327, %v947, 0
        %v975 = vsel %vm327, %v948, 0
        %v978 = vsel %vm327, %v949, 0
        %v981 = vsel %vm327, %v950, 0
        %v984 = vsel %vm327, %v951, 0
        %v987 = vsel %vm327, %v952, 0
        %v990 = vsel %vm327, %v953, 0
        %v993 = vsel %vm327, %v954, 0
        %v996 = vsel %vm327, %v955, 0
        %v999 = vsel %vm327, %v956, 0
        %v1002 = vsel %vm327, %v957, 0
        %v1005 = vsel %vm327, %v958, 0
        %v1008 = vsel %vm327, %v959, 0
        %1010 = vmatprep.subr.mxu0 0.0
        %1011 = vmatpush1.msra.mxu0 %v961
        %1012 = vmatprep.subr.mxu0 0.0
        %1013 = vmatpush1.msra.mxu0 0.0
        %1014 = vmatprep.subr.mxu0 0.0
        %1015 = vmatpush1.msra.mxu0 0.0
        %1016 = vmatprep.subr.mxu0 0.0
        %1017 = vmatpush1.msra.mxu0 0.0
        %1018 = vmatprep.subr.mxu0 0.0
        %1019 = vmatpush1.msra.mxu0 0.0
        %1020 = vmatprep.subr.mxu0 0.0
        %1021 = vmatpush1.msra.mxu0 0.0
        %1022 = vmatprep.subr.mxu0 0.0
        %1023 = vmatpush1.msra.mxu0 0.0
        %1024 = vmatprep.subr.mxu0 0.0
        %1025 = vmatpush1.msra.mxu0 0.0
        %1026 = vmatprep.subr.mxu0 0.0
        %1027 = vmatpush1.msra.mxu0 0.0
        %1028 = vmatprep.subr.mxu0 0.0
        %1029 = vmatpush1.msra.mxu0 0.0
        %1030 = vmatprep.subr.mxu0 0.0
        %1031 = vmatpush1.msra.mxu0 0.0
        %1032 = vmatprep.subr.mxu0 0.0
        %1033 = vmatpush1.msra.mxu0 0.0
        %1034 = vmatprep.subr.mxu0 0.0
        %1035 = vmatpush1.msra.mxu0 0.0
        %1036 = vmatprep.subr.mxu0 0.0
        %1037 = vmatpush1.msra.mxu0 0.0
        %1038 = vmatprep.subr.mxu0 0.0
        %1039 = vmatpush1.msra.mxu0 0.0
        %1040 = vmatprep.subr.mxu0 0.0
        %1041 = vmatpush1.msra.mxu0 0.0
        %1042 = vmatprep.subr.mxu0 0.0
        %1043 = vmatpush1.msra.mxu0 0.0
        %1044 = vmatprep.subr.mxu0 0.0
        %1045 = vmatpush1.msra.mxu0 0.0
        %1046 = vmatprep.subr.mxu0 0.0
        %1047 = vmatpush1.msra.mxu0 0.0
        %1048 = vmatprep.subr.mxu0 0.0
        %1049 = vmatpush1.msra.mxu0 0.0
        %1050 = vmatprep.subr.mxu0 0.0
        %1051 = vmatpush1.msra.mxu0 0.0
        %1052 = vmatprep.subr.mxu0 0.0
        %1053 = vmatpush1.msra.mxu0 0.0
        %1054 = vmatprep.subr.mxu0 0.0
        %1055 = vmatpush1.msra.mxu0 0.0
        %1056 = vmatprep.subr.mxu0 0.0
        %1057 = vmatpush1.msra.mxu0 0.0
        %1058 = vmatprep.subr.mxu0 0.0
        %1059 = vmatpush1.msra.mxu0 0.0
        %1060 = vmatprep.subr.mxu0 0.0
        %1061 = vmatpush1.msra.mxu0 0.0
        %1062 = vmatprep.subr.mxu0 0.0
        %1063 = vmatpush1.msra.mxu0 0.0
        %1064 = vmatprep.subr.mxu0 0.0
        %1065 = vmatpush1.msra.mxu0 0.0
        %1066 = vmatprep.subr.mxu0 0.0
        %1067 = vmatpush1.msra.mxu0 0.0
        %1068 = vmatprep.subr.mxu0 0.0
        %1069 = vmatpush1.msra.mxu0 0.0
        %1070 = vmatprep.subr.mxu0 0.0
        %1071 = vmatpush1.msra.mxu0 0.0
        %1072 = vmatprep.subr.mxu0 0.0
        %1073 = vmatpush1.msra.mxu0 0.0
        %1074 = vmatprep.mubr.f32.mxu0 0.0
        %1075 = vmatmul.mubr.f32.gmra.mrb[0].mxu0 %v963
        %v1076 = vpop.f32.mrb[0].mxu0
        %v1077 = vadd.f32 0.0, %v1076
        %v1078 = vpop.f32.mrb[0].mxu0
        %1079 = vmatprep.mubr.f32.mxu0 0.0
        %1080 = vmatmul.mubr.f32.gmra.mrb[0].mxu0 %v966
        %v1081 = vpop.f32.mrb[0].mxu0
        %v1082 = vadd.f32 0.0, %v1081
        %v1083 = vpop.f32.mrb[0].mxu0
        %1084 = vmatprep.mubr.f32.mxu0 0.0
        %1085 = vmatmul.mubr.f32.gmra.mrb[0].mxu0 %v969
        %v1086 = vpop.f32.mrb[0].mxu0
        %v1087 = vadd.f32 0.0, %v1086
        %v1088 = vpop.f32.mrb[0].mxu0
        %1089 = vmatprep.mubr.f32.mxu0 0.0
        %1090 = vmatmul.mubr.f32.gmra.mrb[0].mxu0 %v972
        %v1091 = vpop.f32.mrb[0].mxu0
        %v1092 = vadd.f32 0.0, %v1091
        %v1093 = vpop.f32.mrb[0].mxu0
        %1094 = vmatprep.mubr.f32.mxu0 0.0
        %1095 = vmatmul.mubr.f32.gmra.mrb[0].mxu0 %v975
        %v1096 = vpop.f32.mrb[0].mxu0
        %v1097 = vadd.f32 0.0, %v1096
        %v1098 = vpop.f32.mrb[0].mxu0
        %1099 = vmatprep.mubr.f32.mxu0 0.0
        %1100 = vmatmul.mubr.f32.gmra.mrb[0].mxu0 %v978
        %v1101 = vpop.f32.mrb[0].mxu0
        %v1102 = vadd.f32 0.0, %v1101
        %v1103 = vpop.f32.mrb[0].mxu0
        %1104 = vmatprep.mubr.f32.mxu0 0.0
        %1105 = vmatmul.mubr.f32.gmra.mrb[0].mxu0 %v981
        %v1106 = vpop.f32.mrb[0].mxu0
        %v1107 = vadd.f32 0.0, %v1106
        %v1108 = vpop.f32.mrb[0].mxu0
        %1109 = vmatprep.mubr.f32.mxu0 0.0
        %1110 = vmatmul.mubr.f32.gmra.mrb[0].mxu0 %v984
        %v1111 = vpop.f32.mrb[0].mxu0
        %v1112 = vadd.f32 0.0, %v1111
        %v1113 = vpop.f32.mrb[0].mxu0
        %1114 = vmatprep.mubr.f32.mxu0 0.0
        %1115 = vmatmul.mubr.f32.gmra.mrb[0].mxu0 %v987
        %v1116 = vpop.f32.mrb[0].mxu0
        %v1117 = vadd.f32 0.0, %v1116
        %v1118 = vpop.f32.mrb[0].mxu0
        %1119 = vmatprep.mubr.f32.mxu0 0.0
        %1120 = vmatmul.mubr.f32.gmra.mrb[0].mxu0 %v990
        %v1121 = vpop.f32.mrb[0].mxu0
        %v1122 = vadd.f32 0.0, %v1121
        %v1123 = vpop.f32.mrb[0].mxu0
        %1124 = vmatprep.mubr.f32.mxu0 0.0
        %1125 = vmatmul.mubr.f32.gmra.mrb[0].mxu0 %v993
        %v1126 = vpop.f32.mrb[0].mxu0
        %v1127 = vadd.f32 0.0, %v1126
        %v1128 = vpop.f32.mrb[0].mxu0
        %1129 = vmatprep.mubr.f32.mxu0 0.0
        %1130 = vmatmul.mubr.f32.gmra.mrb[0].mxu0 %v996
        %v1131 = vpop.f32.mrb[0].mxu0
        %v1132 = vadd.f32 0.0, %v1131
        %v1133 = vpop.f32.mrb[0].mxu0
        %1134 = vmatprep.mubr.f32.mxu0 0.0
        %1135 = vmatmul.mubr.f32.gmra.mrb[0].mxu0 %v999
        %v1136 = vpop.f32.mrb[0].mxu0
        %v1137 = vadd.f32 0.0, %v1136
        %v1138 = vpop.f32.mrb[0].mxu0
        %1139 = vmatprep.mubr.f32.mxu0 0.0
        %1140 = vmatmul.mubr.f32.gmra.mrb[0].mxu0 %v1002
        %v1141 = vpop.f32.mrb[0].mxu0
        %v1142 = vadd.f32 0.0, %v1141
        %v1143 = vpop.f32.mrb[0].mxu0
        %1144 = vmatprep.mubr.f32.mxu0 0.0
        %1145 = vmatmul.mubr.f32.gmra.mrb[0].mxu0 %v1005
        %v1146 = vpop.f32.mrb[0].mxu0
        %v1147 = vadd.f32 0.0, %v1146
        %v1148 = vpop.f32.mrb[0].mxu0
        %1149 = vmatprep.mubr.f32.mxu0 0.0
        %1150 = vmatmul.mubr.f32.gmra.mrb[0].mxu0 %v1008
        %v1151 = vpop.f32.mrb[0].mxu0
        %v1152 = vadd.f32 0.0, %v1151
        %v1153 = vpop.f32.mrb[0].mxu0
        %1154 = vdwg.mxu0
        %v1155 = vadd.f32 %v925, %v1077
        %v1156 = vadd.f32 %v926, %v1082
        %v1157 = vadd.f32 %v927, %v1087
        %v1158 = vadd.f32 %v928, %v1092
        %v1159 = vadd.f32 %v929, %v1097
        %v1160 = vadd.f32 %v930, %v1102
        %v1161 = vadd.f32 %v931, %v1107
        %v1162 = vadd.f32 %v932, %v1112
        %v1163 = vadd.f32 %v933, %v1117
        %v1164 = vadd.f32 %v934, %v1122
        %v1165 = vadd.f32 %v935, %v1127
        %v1166 = vadd.f32 %v936, %v1132
        %v1167 = vadd.f32 %v937, %v1137
        %v1168 = vadd.f32 %v938, %v1142
        %v1169 = vadd.f32 %v939, %v1147
        %v1170 = vadd.f32 %v940, %v1152
        %v1171 = vld [vmem:[%s943 + $0x1] sm:$0xff]
        %v1172 = vld [vmem:[%s943 + $0x9] sm:$0xff]
        %v1173 = vld [vmem:[%s943 + $0x19] sm:$0xff]
        %v1174 = vld [vmem:[%s943 + $0x21] sm:$0xff]
        %v1175 = vld [vmem:[%s943 + $0x31] sm:$0xff]
        %v1176 = vld [vmem:[%s943 + $0x39] sm:$0xff]
        %v1177 = vld [vmem:[%s943 + $0x49] sm:$0xff]
        %v1178 = vld [vmem:[%s943 + $0x51] sm:$0xff]
        %v1179 = vld [vmem:[%s943 + $0x61] sm:$0xff]
        %v1180 = vld [vmem:[%s943 + $0x69] sm:$0xff]
        %v1181 = vld [vmem:[%s943 + $0x79] sm:$0xff]
        %v1182 = vld [vmem:[%s943 + $0x81] sm:$0xff]
        %v1183 = vld [vmem:[%s943 + $0x91] sm:$0xff]
        %v1184 = vld [vmem:[%s943 + $0x99] sm:$0xff]
        %v1185 = vld [vmem:[%s943 + $0xa9] sm:$0xff]
        %v1186 = vld [vmem:[%s943 + $0xb1] sm:$0xff]
        %s1187 = scalar_lea.vmem %s1, 32
        %v1188 = vld [vmem:[%s1187] sm:$0xff]
        %v1190 = vsel %vm327, %v1171, 0
        %v1193 = vsel %vm327, %v1172, 0
        %v1196 = vsel %vm327, %v1173, 0
        %v1199 = vsel %vm327, %v1174, 0
        %v1202 = vsel %vm327, %v1175, 0
        %v1205 = vsel %vm327, %v1176, 0
        %v1208 = vsel %vm327, %v1177, 0
        %v1211 = vsel %vm327, %v1178, 0
        %v1214 = vsel %vm327, %v1179, 0
        %v1217 = vsel %vm327, %v1180, 0
        %v1220 = vsel %vm327, %v1181, 0
        %v1223 = vsel %vm327, %v1182, 0
        %v1226 = vsel %vm327, %v1183, 0
        %v1229 = vsel %vm327, %v1184, 0
        %v1232 = vsel %vm327, %v1185, 0
        %v1235 = vsel %vm327, %v1186, 0
        %1237 = vmatprep.subr.mxu0 0.0
        %1238 = vmatpush1.msra.mxu0 %v1188
        %1239 = vmatprep.subr.mxu0 0.0
        %1240 = vmatpush1.msra.mxu0 0.0
        %1241 = vmatprep.subr.mxu0 0.0
        %1242 = vmatpush1.msra.mxu0 0.0
        %1243 = vmatprep.subr.mxu0 0.0
        %1244 = vmatpush1.msra.mxu0 0.0
        %1245 = vmatprep.subr.mxu0 0.0
        %1246 = vmatpush1.msra.mxu0 0.0
        %1247 = vmatprep.subr.mxu0 0.0
        %1248 = vmatpush1.msra.mxu0 0.0
        %1249 = vmatprep.subr.mxu0 0.0
        %1250 = vmatpush1.msra.mxu0 0.0
        %1251 = vmatprep.subr.mxu0 0.0
        %1252 = vmatpush1.msra.mxu0 0.0
        %1253 = vmatprep.subr.mxu0 0.0
        %1254 = vmatpush1.msra.mxu0 0.0
        %1255 = vmatprep.subr.mxu0 0.0
        %1256 = vmatpush1.msra.mxu0 0.0
        %1257 = vmatprep.subr.mxu0 0.0
        %1258 = vmatpush1.msra.mxu0 0.0
        %1259 = vmatprep.subr.mxu0 0.0
        %1260 = vmatpush1.msra.mxu0 0.0
        %1261 = vmatprep.subr.mxu0 0.0
        %1262 = vmatpush1.msra.mxu0 0.0
        %1263 = vmatprep.subr.mxu0 0.0
        %1264 = vmatpush1.msra.mxu0 0.0
        %1265 = vmatprep.subr.mxu0 0.0
        %1266 = vmatpush1.msra.mxu0 0.0
        %1267 = vmatprep.subr.mxu0 0.0
        %1268 = vmatpush1.msra.mxu0 0.0
        %1269 = vmatprep.subr.mxu0 0.0
        %1270 = vmatpush1.msra.mxu0 0.0
        %1271 = vmatprep.subr.mxu0 0.0
        %1272 = vmatpush1.msra.mxu0 0.0
        %1273 = vmatprep.subr.mxu0 0.0
        %1274 = vmatpush1.msra.mxu0 0.0
        %1275 = vmatprep.subr.mxu0 0.0
        %1276 = vmatpush1.msra.mxu0 0.0
        %1277 = vmatprep.subr.mxu0 0.0
        %1278 = vmatpush1.msra.mxu0 0.0
        %1279 = vmatprep.subr.mxu0 0.0
        %1280 = vmatpush1.msra.mxu0 0.0
        %1281 = vmatprep.subr.mxu0 0.0
        %1282 = vmatpush1.msra.mxu0 0.0
        %1283 = vmatprep.subr.mxu0 0.0
        %1284 = vmatpush1.msra.mxu0 0.0
        %1285 = vmatprep.subr.mxu0 0.0
        %1286 = vmatpush1.msra.mxu0 0.0
        %1287 = vmatprep.subr.mxu0 0.0
        %1288 = vmatpush1.msra.mxu0 0.0
        %1289 = vmatprep.subr.mxu0 0.0
        %1290 = vmatpush1.msra.mxu0 0.0
        %1291 = vmatprep.subr.mxu0 0.0
        %1292 = vmatpush1.msra.mxu0 0.0
        %1293 = vmatprep.subr.mxu0 0.0
        %1294 = vmatpush1.msra.mxu0 0.0
        %1295 = vmatprep.subr.mxu0 0.0
        %1296 = vmatpush1.msra.mxu0 0.0
        %1297 = vmatprep.subr.mxu0 0.0
        %1298 = vmatpush1.msra.mxu0 0.0
        %1299 = vmatprep.subr.mxu0 0.0
        %1300 = vmatpush1.msra.mxu0 0.0
        %1301 = vmatprep.mubr.f32.mxu0 0.0
        %1302 = vmatmul.mubr.f32.gmra.mrb[0].mxu0 %v1190
        %v1303 = vpop.f32.mrb[0].mxu0
        %v1304 = vadd.f32 0.0, %v1303
        %v1305 = vpop.f32.mrb[0].mxu0
        %1306 = vmatprep.mubr.f32.mxu0 0.0
        %1307 = vmatmul.mubr.f32.gmra.mrb[0].mxu0 %v1193
        %v1308 = vpop.f32.mrb[0].mxu0
        %v1309 = vadd.f32 0.0, %v1308
        %v1310 = vpop.f32.mrb[0].mxu0
        %1311 = vmatprep.mubr.f32.mxu0 0.0
        %1312 = vmatmul.mubr.f32.gmra.mrb[0].mxu0 %v1196
        %v1313 = vpop.f32.mrb[0].mxu0
        %v1314 = vadd.f32 0.0, %v1313
        %v1315 = vpop.f32.mrb[0].mxu0
        %1316 = vmatprep.mubr.f32.mxu0 0.0
        %1317 = vmatmul.mubr.f32.gmra.mrb[0].mxu0 %v1199
        %v1318 = vpop.f32.mrb[0].mxu0
        %v1319 = vadd.f32 0.0, %v1318
        %v1320 = vpop.f32.mrb[0].mxu0
        %1321 = vmatprep.mubr.f32.mxu0 0.0
        %1322 = vmatmul.mubr.f32.gmra.mrb[0].mxu0 %v1202
        %v1323 = vpop.f32.mrb[0].mxu0
        %v1324 = vadd.f32 0.0, %v1323
        %v1325 = vpop.f32.mrb[0].mxu0
        %1326 = vmatprep.mubr.f32.mxu0 0.0
        %1327 = vmatmul.mubr.f32.gmra.mrb[0].mxu0 %v1205
        %v1328 = vpop.f32.mrb[0].mxu0
        %v1329 = vadd.f32 0.0, %v1328
        %v1330 = vpop.f32.mrb[0].mxu0
        %1331 = vmatprep.mubr.f32.mxu0 0.0
        %1332 = vmatmul.mubr.f32.gmra.mrb[0].mxu0 %v1208
        %v1333 = vpop.f32.mrb[0].mxu0
        %v1334 = vadd.f32 0.0, %v1333
        %v1335 = vpop.f32.mrb[0].mxu0
        %1336 = vmatprep.mubr.f32.mxu0 0.0
        %1337 = vmatmul.mubr.f32.gmra.mrb[0].mxu0 %v1211
        %v1338 = vpop.f32.mrb[0].mxu0
        %v1339 = vadd.f32 0.0, %v1338
        %v1340 = vpop.f32.mrb[0].mxu0
        %1341 = vmatprep.mubr.f32.mxu0 0.0
        %1342 = vmatmul.mubr.f32.gmra.mrb[0].mxu0 %v1214
        %v1343 = vpop.f32.mrb[0].mxu0
        %v1344 = vadd.f32 0.0, %v1343
        %v1345 = vpop.f32.mrb[0].mxu0
        %1346 = vmatprep.mubr.f32.mxu0 0.0
        %1347 = vmatmul.mubr.f32.gmra.mrb[0].mxu0 %v1217
        %v1348 = vpop.f32.mrb[0].mxu0
        %v1349 = vadd.f32 0.0, %v1348
        %v1350 = vpop.f32.mrb[0].mxu0
        %1351 = vmatprep.mubr.f32.mxu0 0.0
        %1352 = vmatmul.mubr.f32.gmra.mrb[0].mxu0 %v1220
        %v1353 = vpop.f32.mrb[0].mxu0
        %v1354 = vadd.f32 0.0, %v1353
        %v1355 = vpop.f32.mrb[0].mxu0
        %1356 = vmatprep.mubr.f32.mxu0 0.0
        %1357 = vmatmul.mubr.f32.gmra.mrb[0].mxu0 %v1223
        %v1358 = vpop.f32.mrb[0].mxu0
        %v1359 = vadd.f32 0.0, %v1358
        %v1360 = vpop.f32.mrb[0].mxu0
        %1361 = vmatprep.mubr.f32.mxu0 0.0
        %1362 = vmatmul.mubr.f32.gmra.mrb[0].mxu0 %v1226
        %v1363 = vpop.f32.mrb[0].mxu0
        %v1364 = vadd.f32 0.0, %v1363
        %v1365 = vpop.f32.mrb[0].mxu0
        %1366 = vmatprep.mubr.f32.mxu0 0.0
        %1367 = vmatmul.mubr.f32.gmra.mrb[0].mxu0 %v1229
        %v1368 = vpop.f32.mrb[0].mxu0
        %v1369 = vadd.f32 0.0, %v1368
        %v1370 = vpop.f32.mrb[0].mxu0
        %1371 = vmatprep.mubr.f32.mxu0 0.0
        %1372 = vmatmul.mubr.f32.gmra.mrb[0].mxu0 %v1232
        %v1373 = vpop.f32.mrb[0].mxu0
        %v1374 = vadd.f32 0.0, %v1373
        %v1375 = vpop.f32.mrb[0].mxu0
        %1376 = vmatprep.mubr.f32.mxu0 0.0
        %1377 = vmatmul.mubr.f32.gmra.mrb[0].mxu0 %v1235
        %v1378 = vpop.f32.mrb[0].mxu0
        %v1379 = vadd.f32 0.0, %v1378
        %v1380 = vpop.f32.mrb[0].mxu0
        %1381 = vdwg.mxu0
        %v1382 = vadd.f32 %v1155, %v1304
        %v1383 = vadd.f32 %v1156, %v1309
        %v1384 = vadd.f32 %v1157, %v1314
        %v1385 = vadd.f32 %v1158, %v1319
        %v1386 = vadd.f32 %v1159, %v1324
        %v1387 = vadd.f32 %v1160, %v1329
        %v1388 = vadd.f32 %v1161, %v1334
        %v1389 = vadd.f32 %v1162, %v1339
        %v1390 = vadd.f32 %v1163, %v1344
        %v1391 = vadd.f32 %v1164, %v1349
        %v1392 = vadd.f32 %v1165, %v1354
        %v1393 = vadd.f32 %v1166, %v1359
        %v1394 = vadd.f32 %v1167, %v1364
        %v1395 = vadd.f32 %v1168, %v1369
        %v1396 = vadd.f32 %v1169, %v1374
        %v1397 = vadd.f32 %v1170, %v1379
        %v1398 = vld [vmem:[%s943 + $0x2] sm:$0xff]
        %v1399 = vld [vmem:[%s943 + $0xa] sm:$0xff]
        %v1400 = vld [vmem:[%s943 + $0x1a] sm:$0xff]
        %v1401 = vld [vmem:[%s943 + $0x22] sm:$0xff]
        %v1402 = vld [vmem:[%s943 + $0x32] sm:$0xff]
        %v1403 = vld [vmem:[%s943 + $0x3a] sm:$0xff]
        %v1404 = vld [vmem:[%s943 + $0x4a] sm:$0xff]
        %v1405 = vld [vmem:[%s943 + $0x52] sm:$0xff]
        %v1406 = vld [vmem:[%s943 + $0x62] sm:$0xff]
        %v1407 = vld [vmem:[%s943 + $0x6a] sm:$0xff]
        %v1408 = vld [vmem:[%s943 + $0x7a] sm:$0xff]
        %v1409 = vld [vmem:[%s943 + $0x82] sm:$0xff]
        %v1410 = vld [vmem:[%s943 + $0x92] sm:$0xff]
        %v1411 = vld [vmem:[%s943 + $0x9a] sm:$0xff]
        %v1412 = vld [vmem:[%s943 + $0xaa] sm:$0xff]
        %v1413 = vld [vmem:[%s943 + $0xb2] sm:$0xff]
        %s1414 = scalar_lea.vmem %s1, 40
        %v1415 = vld [vmem:[%s1414] sm:$0xff]
        %v1417 = vsel %vm327, %v1398, 0
        %v1420 = vsel %vm327, %v1399, 0
        %v1423 = vsel %vm327, %v1400, 0
        %v1426 = vsel %vm327, %v1401, 0
        %v1429 = vsel %vm327, %v1402, 0
        %v1432 = vsel %vm327, %v1403, 0
        %v1435 = vsel %vm327, %v1404, 0
        %v1438 = vsel %vm327, %v1405, 0
        %v1441 = vsel %vm327, %v1406, 0
        %v1444 = vsel %vm327, %v1407, 0
        %v1447 = vsel %vm327, %v1408, 0
        %v1450 = vsel %vm327, %v1409, 0
        %v1453 = vsel %vm327, %v1410, 0
        %v1456 = vsel %vm327, %v1411, 0
        %v1459 = vsel %vm327, %v1412, 0
        %v1462 = vsel %vm327, %v1413, 0
        %1464 = vmatprep.subr.mxu0 0.0
        %1465 = vmatpush1.msra.mxu0 %v1415
        %1466 = vmatprep.subr.mxu0 0.0
        %1467 = vmatpush1.msra.mxu0 0.0
        %1468 = vmatprep.subr.mxu0 0.0
        %1469 = vmatpush1.msra.mxu0 0.0
        %1470 = vmatprep.subr.mxu0 0.0
        %1471 = vmatpush1.msra.mxu0 0.0
        %1472 = vmatprep.subr.mxu0 0.0
        %1473 = vmatpush1.msra.mxu0 0.0
        %1474 = vmatprep.subr.mxu0 0.0
        %1475 = vmatpush1.msra.mxu0 0.0
        %1476 = vmatprep.subr.mxu0 0.0
        %1477 = vmatpush1.msra.mxu0 0.0
        %1478 = vmatprep.subr.mxu0 0.0
        %1479 = vmatpush1.msra.mxu0 0.0
        %1480 = vmatprep.subr.mxu0 0.0
        %1481 = vmatpush1.msra.mxu0 0.0
        %1482 = vmatprep.subr.mxu0 0.0
        %1483 = vmatpush1.msra.mxu0 0.0
        %1484 = vmatprep.subr.mxu0 0.0
        %1485 = vmatpush1.msra.mxu0 0.0
        %1486 = vmatprep.subr.mxu0 0.0
        %1487 = vmatpush1.msra.mxu0 0.0
        %1488 = vmatprep.subr.mxu0 0.0
        %1489 = vmatpush1.msra.mxu0 0.0
        %1490 = vmatprep.subr.mxu0 0.0
        %1491 = vmatpush1.msra.mxu0 0.0
        %1492 = vmatprep.subr.mxu0 0.0
        %1493 = vmatpush1.msra.mxu0 0.0
        %1494 = vmatprep.subr.mxu0 0.0
        %1495 = vmatpush1.msra.mxu0 0.0
        %1496 = vmatprep.subr.mxu0 0.0
        %1497 = vmatpush1.msra.mxu0 0.0
        %1498 = vmatprep.subr.mxu0 0.0
        %1499 = vmatpush1.msra.mxu0 0.0
        %1500 = vmatprep.subr.mxu0 0.0
        %1501 = vmatpush1.msra.mxu0 0.0
        %1502 = vmatprep.subr.mxu0 0.0
        %1503 = vmatpush1.msra.mxu0 0.0
        %1504 = vmatprep.subr.mxu0 0.0
        %1505 = vmatpush1.msra.mxu0 0.0
        %1506 = vmatprep.subr.mxu0 0.0
        %1507 = vmatpush1.msra.mxu0 0.0
        %1508 = vmatprep.subr.mxu0 0.0
        %1509 = vmatpush1.msra.mxu0 0.0
        %1510 = vmatprep.subr.mxu0 0.0
        %1511 = vmatpush1.msra.mxu0 0.0
        %1512 = vmatprep.subr.mxu0 0.0
        %1513 = vmatpush1.msra.mxu0 0.0
        %1514 = vmatprep.subr.mxu0 0.0
        %1515 = vmatpush1.msra.mxu0 0.0
        %1516 = vmatprep.subr.mxu0 0.0
        %1517 = vmatpush1.msra.mxu0 0.0
        %1518 = vmatprep.subr.mxu0 0.0
        %1519 = vmatpush1.msra.mxu0 0.0
        %1520 = vmatprep.subr.mxu0 0.0
        %1521 = vmatpush1.msra.mxu0 0.0
        %1522 = vmatprep.subr.mxu0 0.0
        %1523 = vmatpush1.msra.mxu0 0.0
        %1524 = vmatprep.subr.mxu0 0.0
        %1525 = vmatpush1.msra.mxu0 0.0
        %1526 = vmatprep.subr.mxu0 0.0
        %1527 = vmatpush1.msra.mxu0 0.0
        %1528 = vmatprep.mubr.f32.mxu0 0.0
        %1529 = vmatmul.mubr.f32.gmra.mrb[0].mxu0 %v1417
        %v1530 = vpop.f32.mrb[0].mxu0
        %v1531 = vadd.f32 0.0, %v1530
        %v1532 = vpop.f32.mrb[0].mxu0
        %1533 = vmatprep.mubr.f32.mxu0 0.0
        %1534 = vmatmul.mubr.f32.gmra.mrb[0].mxu0 %v1420
        %v1535 = vpop.f32.mrb[0].mxu0
        %v1536 = vadd.f32 0.0, %v1535
        %v1537 = vpop.f32.mrb[0].mxu0
        %1538 = vmatprep.mubr.f32.mxu0 0.0
        %1539 = vmatmul.mubr.f32.gmra.mrb[0].mxu0 %v1423
        %v1540 = vpop.f32.mrb[0].mxu0
        %v1541 = vadd.f32 0.0, %v1540
        %v1542 = vpop.f32.mrb[0].mxu0
        %1543 = vmatprep.mubr.f32.mxu0 0.0
        %1544 = vmatmul.mubr.f32.gmra.mrb[0].mxu0 %v1426
        %v1545 = vpop.f32.mrb[0].mxu0
        %v1546 = vadd.f32 0.0, %v1545
        %v1547 = vpop.f32.mrb[0].mxu0
        %1548 = vmatprep.mubr.f32.mxu0 0.0
        %1549 = vmatmul.mubr.f32.gmra.mrb[0].mxu0 %v1429
        %v1550 = vpop.f32.mrb[0].mxu0
        %v1551 = vadd.f32 0.0, %v1550
        %v1552 = vpop.f32.mrb[0].mxu0
        %1553 = vmatprep.mubr.f32.mxu0 0.0
        %1554 = vmatmul.mubr.f32.gmra.mrb[0].mxu0 %v1432
        %v1555 = vpop.f32.mrb[0].mxu0
        %v1556 = vadd.f32 0.0, %v1555
        %v1557 = vpop.f32.mrb[0].mxu0
        %1558 = vmatprep.mubr.f32.mxu0 0.0
        %1559 = vmatmul.mubr.f32.gmra.mrb[0].mxu0 %v1435
        %v1560 = vpop.f32.mrb[0].mxu0
        %v1561 = vadd.f32 0.0, %v1560
        %v1562 = vpop.f32.mrb[0].mxu0
        %1563 = vmatprep.mubr.f32.mxu0 0.0
        %1564 = vmatmul.mubr.f32.gmra.mrb[0].mxu0 %v1438
        %v1565 = vpop.f32.mrb[0].mxu0
        %v1566 = vadd.f32 0.0, %v1565
        %v1567 = vpop.f32.mrb[0].mxu0
        %1568 = vmatprep.mubr.f32.mxu0 0.0
        %1569 = vmatmul.mubr.f32.gmra.mrb[0].mxu0 %v1441
        %v1570 = vpop.f32.mrb[0].mxu0
        %v1571 = vadd.f32 0.0, %v1570
        %v1572 = vpop.f32.mrb[0].mxu0
        %1573 = vmatprep.mubr.f32.mxu0 0.0
        %1574 = vmatmul.mubr.f32.gmra.mrb[0].mxu0 %v1444
        %v1575 = vpop.f32.mrb[0].mxu0
        %v1576 = vadd.f32 0.0, %v1575
        %v1577 = vpop.f32.mrb[0].mxu0
        %1578 = vmatprep.mubr.f32.mxu0 0.0
        %1579 = vmatmul.mubr.f32.gmra.mrb[0].mxu0 %v1447
        %v1580 = vpop.f32.mrb[0].mxu0
        %v1581 = vadd.f32 0.0, %v1580
        %v1582 = vpop.f32.mrb[0].mxu0
        %1583 = vmatprep.mubr.f32.mxu0 0.0
        %1584 = vmatmul.mubr.f32.gmra.mrb[0].mxu0 %v1450
        %v1585 = vpop.f32.mrb[0].mxu0
        %v1586 = vadd.f32 0.0, %v1585
        %v1587 = vpop.f32.mrb[0].mxu0
        %1588 = vmatprep.mubr.f32.mxu0 0.0
        %1589 = vmatmul.mubr.f32.gmra.mrb[0].mxu0 %v1453
        %v1590 = vpop.f32.mrb[0].mxu0
        %v1591 = vadd.f32 0.0, %v1590
        %v1592 = vpop.f32.mrb[0].mxu0
        %1593 = vmatprep.mubr.f32.mxu0 0.0
        %1594 = vmatmul.mubr.f32.gmra.mrb[0].mxu0 %v1456
        %v1595 = vpop.f32.mrb[0].mxu0
        %v1596 = vadd.f32 0.0, %v1595
        %v1597 = vpop.f32.mrb[0].mxu0
        %1598 = vmatprep.mubr.f32.mxu0 0.0
        %1599 = vmatmul.mubr.f32.gmra.mrb[0].mxu0 %v1459
        %v1600 = vpop.f32.mrb[0].mxu0
        %v1601 = vadd.f32 0.0, %v1600
        %v1602 = vpop.f32.mrb[0].mxu0
        %1603 = vmatprep.mubr.f32.mxu0 0.0
        %1604 = vmatmul.mubr.f32.gmra.mrb[0].mxu0 %v1462
        %v1605 = vpop.f32.mrb[0].mxu0
        %v1606 = vadd.f32 0.0, %v1605
        %v1607 = vpop.f32.mrb[0].mxu0
        %1608 = vdwg.mxu0
        %v1609 = vadd.f32 %v1382, %v1531
        %v1610 = vadd.f32 %v1383, %v1536
        %v1611 = vadd.f32 %v1384, %v1541
        %v1612 = vadd.f32 %v1385, %v1546
        %v1613 = vadd.f32 %v1386, %v1551
        %v1614 = vadd.f32 %v1387, %v1556
        %v1615 = vadd.f32 %v1388, %v1561
        %v1616 = vadd.f32 %v1389, %v1566
        %v1617 = vadd.f32 %v1390, %v1571
        %v1618 = vadd.f32 %v1391, %v1576
        %v1619 = vadd.f32 %v1392, %v1581
        %v1620 = vadd.f32 %v1393, %v1586
        %v1621 = vadd.f32 %v1394, %v1591
        %v1622 = vadd.f32 %v1395, %v1596
        %v1623 = vadd.f32 %v1396, %v1601
        %v1624 = vadd.f32 %v1397, %v1606
        %s1625 = sadd.s32 %s289, 2
        %s1626 = smul.u32 %s1625, 24
        %s1627 = scalar_lea.vmem %s219, %s1626
        %v1628 = vld [vmem:[%s1627] sm:$0xff]
        %v1629 = vld [vmem:[%s1627 + $0x8] sm:$0xff]
        %v1630 = vld [vmem:[%s1627 + $0x18] sm:$0xff]
        %v1631 = vld [vmem:[%s1627 + $0x20] sm:$0xff]
        %v1632 = vld [vmem:[%s1627 + $0x30] sm:$0xff]
        %v1633 = vld [vmem:[%s1627 + $0x38] sm:$0xff]
        %v1634 = vld [vmem:[%s1627 + $0x48] sm:$0xff]
        %v1635 = vld [vmem:[%s1627 + $0x50] sm:$0xff]
        %v1636 = vld [vmem:[%s1627 + $0x60] sm:$0xff]
        %v1637 = vld [vmem:[%s1627 + $0x68] sm:$0xff]
        %v1638 = vld [vmem:[%s1627 + $0x78] sm:$0xff]
        %v1639 = vld [vmem:[%s1627 + $0x80] sm:$0xff]
        %v1640 = vld [vmem:[%s1627 + $0x90] sm:$0xff]
        %v1641 = vld [vmem:[%s1627 + $0x98] sm:$0xff]
        %v1642 = vld [vmem:[%s1627 + $0xa8] sm:$0xff]
        %v1643 = vld [vmem:[%s1627 + $0xb0] sm:$0xff]
        %s1644 = scalar_lea.vmem %s1, 48
        %v1645 = vld [vmem:[%s1644] sm:$0xff]
        %v1647 = vsel %vm327, %v1628, 0
        %v1650 = vsel %vm327, %v1629, 0
        %v1653 = vsel %vm327, %v1630, 0
        %v1656 = vsel %vm327, %v1631, 0
        %v1659 = vsel %vm327, %v1632, 0
        %v1662 = vsel %vm327, %v1633, 0
        %v1665 = vsel %vm327, %v1634, 0
        %v1668 = vsel %vm327, %v1635, 0
        %v1671 = vsel %vm327, %v1636, 0
        %v1674 = vsel %vm327, %v1637, 0
        %v1677 = vsel %vm327, %v1638, 0
        %v1680 = vsel %vm327, %v1639, 0
        %v1683 = vsel %vm327, %v1640, 0
        %v1686 = vsel %vm327, %v1641, 0
        %v1689 = vsel %vm327, %v1642, 0
        %v1692 = vsel %vm327, %v1643, 0
        %1694 = vmatprep.subr.mxu0 0.0
        %1695 = vmatpush1.msra.mxu0 %v1645
        %1696 = vmatprep.subr.mxu0 0.0
        %1697 = vmatpush1.msra.mxu0 0.0
        %1698 = vmatprep.subr.mxu0 0.0
        %1699 = vmatpush1.msra.mxu0 0.0
        %1700 = vmatprep.subr.mxu0 0.0
        %1701 = vmatpush1.msra.mxu0 0.0
        %1702 = vmatprep.subr.mxu0 0.0
        %1703 = vmatpush1.msra.mxu0 0.0
        %1704 = vmatprep.subr.mxu0 0.0
        %1705 = vmatpush1.msra.mxu0 0.0
        %1706 = vmatprep.subr.mxu0 0.0
        %1707 = vmatpush1.msra.mxu0 0.0
        %1708 = vmatprep.subr.mxu0 0.0
        %1709 = vmatpush1.msra.mxu0 0.0
        %1710 = vmatprep.subr.mxu0 0.0
        %1711 = vmatpush1.msra.mxu0 0.0
        %1712 = vmatprep.subr.mxu0 0.0
        %1713 = vmatpush1.msra.mxu0 0.0
        %1714 = vmatprep.subr.mxu0 0.0
        %1715 = vmatpush1.msra.mxu0 0.0
        %1716 = vmatprep.subr.mxu0 0.0
        %1717 = vmatpush1.msra.mxu0 0.0
        %1718 = vmatprep.subr.mxu0 0.0
        %1719 = vmatpush1.msra.mxu0 0.0
        %1720 = vmatprep.subr.mxu0 0.0
        %1721 = vmatpush1.msra.mxu0 0.0
        %1722 = vmatprep.subr.mxu0 0.0
        %1723 = vmatpush1.msra.mxu0 0.0
        %1724 = vmatprep.subr.mxu0 0.0
        %1725 = vmatpush1.msra.mxu0 0.0
        %1726 = vmatprep.subr.mxu0 0.0
        %1727 = vmatpush1.msra.mxu0 0.0
        %1728 = vmatprep.subr.mxu0 0.0
        %1729 = vmatpush1.msra.mxu0 0.0
        %1730 = vmatprep.subr.mxu0 0.0
        %1731 = vmatpush1.msra.mxu0 0.0
        %1732 = vmatprep.subr.mxu0 0.0
        %1733 = vmatpush1.msra.mxu0 0.0
        %1734 = vmatprep.subr.mxu0 0.0
        %1735 = vmatpush1.msra.mxu0 0.0
        %1736 = vmatprep.subr.mxu0 0.0
        %1737 = vmatpush1.msra.mxu0 0.0
        %1738 = vmatprep.subr.mxu0 0.0
        %1739 = vmatpush1.msra.mxu0 0.0
        %1740 = vmatprep.subr.mxu0 0.0
        %1741 = vmatpush1.msra.mxu0 0.0
        %1742 = vmatprep.subr.mxu0 0.0
        %1743 = vmatpush1.msra.mxu0 0.0
        %1744 = vmatprep.subr.mxu0 0.0
        %1745 = vmatpush1.msra.mxu0 0.0
        %1746 = vmatprep.subr.mxu0 0.0
        %1747 = vmatpush1.msra.mxu0 0.0
        %1748 = vmatprep.subr.mxu0 0.0
        %1749 = vmatpush1.msra.mxu0 0.0
        %1750 = vmatprep.subr.mxu0 0.0
        %1751 = vmatpush1.msra.mxu0 0.0
        %1752 = vmatprep.subr.mxu0 0.0
        %1753 = vmatpush1.msra.mxu0 0.0
        %1754 = vmatprep.subr.mxu0 0.0
        %1755 = vmatpush1.msra.mxu0 0.0
        %1756 = vmatprep.subr.mxu0 0.0
        %1757 = vmatpush1.msra.mxu0 0.0
        %1758 = vmatprep.mubr.f32.mxu0 0.0
        %1759 = vmatmul.mubr.f32.gmra.mrb[0].mxu0 %v1647
        %v1760 = vpop.f32.mrb[0].mxu0
        %v1761 = vadd.f32 0.0, %v1760
        %v1762 = vpop.f32.mrb[0].mxu0
        %1763 = vmatprep.mubr.f32.mxu0 0.0
        %1764 = vmatmul.mubr.f32.gmra.mrb[0].mxu0 %v1650
        %v1765 = vpop.f32.mrb[0].mxu0
        %v1766 = vadd.f32 0.0, %v1765
        %v1767 = vpop.f32.mrb[0].mxu0
        %1768 = vmatprep.mubr.f32.mxu0 0.0
        %1769 = vmatmul.mubr.f32.gmra.mrb[0].mxu0 %v1653
        %v1770 = vpop.f32.mrb[0].mxu0
        %v1771 = vadd.f32 0.0, %v1770
        %v1772 = vpop.f32.mrb[0].mxu0
        %1773 = vmatprep.mubr.f32.mxu0 0.0
        %1774 = vmatmul.mubr.f32.gmra.mrb[0].mxu0 %v1656
        %v1775 = vpop.f32.mrb[0].mxu0
        %v1776 = vadd.f32 0.0, %v1775
        %v1777 = vpop.f32.mrb[0].mxu0
        %1778 = vmatprep.mubr.f32.mxu0 0.0
        %1779 = vmatmul.mubr.f32.gmra.mrb[0].mxu0 %v1659
        %v1780 = vpop.f32.mrb[0].mxu0
        %v1781 = vadd.f32 0.0, %v1780
        %v1782 = vpop.f32.mrb[0].mxu0
        %1783 = vmatprep.mubr.f32.mxu0 0.0
        %1784 = vmatmul.mubr.f32.gmra.mrb[0].mxu0 %v1662
        %v1785 = vpop.f32.mrb[0].mxu0
        %v1786 = vadd.f32 0.0, %v1785
        %v1787 = vpop.f32.mrb[0].mxu0
        %1788 = vmatprep.mubr.f32.mxu0 0.0
        %1789 = vmatmul.mubr.f32.gmra.mrb[0].mxu0 %v1665
        %v1790 = vpop.f32.mrb[0].mxu0
        %v1791 = vadd.f32 0.0, %v1790
        %v1792 = vpop.f32.mrb[0].mxu0
        %1793 = vmatprep.mubr.f32.mxu0 0.0
        %1794 = vmatmul.mubr.f32.gmra.mrb[0].mxu0 %v1668
        %v1795 = vpop.f32.mrb[0].mxu0
        %v1796 = vadd.f32 0.0, %v1795
        %v1797 = vpop.f32.mrb[0].mxu0
        %1798 = vmatprep.mubr.f32.mxu0 0.0
        %1799 = vmatmul.mubr.f32.gmra.mrb[0].mxu0 %v1671
        %v1800 = vpop.f32.mrb[0].mxu0
        %v1801 = vadd.f32 0.0, %v1800
        %v1802 = vpop.f32.mrb[0].mxu0
        %1803 = vmatprep.mubr.f32.mxu0 0.0
        %1804 = vmatmul.mubr.f32.gmra.mrb[0].mxu0 %v1674
        %v1805 = vpop.f32.mrb[0].mxu0
        %v1806 = vadd.f32 0.0, %v1805
        %v1807 = vpop.f32.mrb[0].mxu0
        %1808 = vmatprep.mubr.f32.mxu0 0.0
        %1809 = vmatmul.mubr.f32.gmra.mrb[0].mxu0 %v1677
        %v1810 = vpop.f32.mrb[0].mxu0
        %v1811 = vadd.f32 0.0, %v1810
        %v1812 = vpop.f32.mrb[0].mxu0
        %1813 = vmatprep.mubr.f32.mxu0 0.0
        %1814 = vmatmul.mubr.f32.gmra.mrb[0].mxu0 %v1680
        %v1815 = vpop.f32.mrb[0].mxu0
        %v1816 = vadd.f32 0.0, %v1815
        %v1817 = vpop.f32.mrb[0].mxu0
        %1818 = vmatprep.mubr.f32.mxu0 0.0
        %1819 = vmatmul.mubr.f32.gmra.mrb[0].mxu0 %v1683
        %v1820 = vpop.f32.mrb[0].mxu0
        %v1821 = vadd.f32 0.0, %v1820
        %v1822 = vpop.f32.mrb[0].mxu0
        %1823 = vmatprep.mubr.f32.mxu0 0.0
        %1824 = vmatmul.mubr.f32.gmra.mrb[0].mxu0 %v1686
        %v1825 = vpop.f32.mrb[0].mxu0
        %v1826 = vadd.f32 0.0, %v1825
        %v1827 = vpop.f32.mrb[0].mxu0
        %1828 = vmatprep.mubr.f32.mxu0 0.0
        %1829 = vmatmul.mubr.f32.gmra.mrb[0].mxu0 %v1689
        %v1830 = vpop.f32.mrb[0].mxu0
        %v1831 = vadd.f32 0.0, %v1830
        %v1832 = vpop.f32.mrb[0].mxu0
        %1833 = vmatprep.mubr.f32.mxu0 0.0
        %1834 = vmatmul.mubr.f32.gmra.mrb[0].mxu0 %v1692
        %v1835 = vpop.f32.mrb[0].mxu0
        %v1836 = vadd.f32 0.0, %v1835
        %v1837 = vpop.f32.mrb[0].mxu0
        %1838 = vdwg.mxu0
        %v1839 = vadd.f32 %v1609, %v1761
        %v1840 = vadd.f32 %v1610, %v1766
        %v1841 = vadd.f32 %v1611, %v1771
        %v1842 = vadd.f32 %v1612, %v1776
        %v1843 = vadd.f32 %v1613, %v1781
        %v1844 = vadd.f32 %v1614, %v1786
        %v1845 = vadd.f32 %v1615, %v1791
        %v1846 = vadd.f32 %v1616, %v1796
        %v1847 = vadd.f32 %v1617, %v1801
        %v1848 = vadd.f32 %v1618, %v1806
        %v1849 = vadd.f32 %v1619, %v1811
        %v1850 = vadd.f32 %v1620, %v1816
        %v1851 = vadd.f32 %v1621, %v1821
        %v1852 = vadd.f32 %v1622, %v1826
        %v1853 = vadd.f32 %v1623, %v1831
        %v1854 = vadd.f32 %v1624, %v1836
        %v1855 = vld [vmem:[%s1627 + $0x1] sm:$0xff]
        %v1856 = vld [vmem:[%s1627 + $0x9] sm:$0xff]
        %v1857 = vld [vmem:[%s1627 + $0x19] sm:$0xff]
        %v1858 = vld [vmem:[%s1627 + $0x21] sm:$0xff]
        %v1859 = vld [vmem:[%s1627 + $0x31] sm:$0xff]
        %v1860 = vld [vmem:[%s1627 + $0x39] sm:$0xff]
        %v1861 = vld [vmem:[%s1627 + $0x49] sm:$0xff]
        %v1862 = vld [vmem:[%s1627 + $0x51] sm:$0xff]
        %v1863 = vld [vmem:[%s1627 + $0x61] sm:$0xff]
        %v1864 = vld [vmem:[%s1627 + $0x69] sm:$0xff]
        %v1865 = vld [vmem:[%s1627 + $0x79] sm:$0xff]
        %v1866 = vld [vmem:[%s1627 + $0x81] sm:$0xff]
        %v1867 = vld [vmem:[%s1627 + $0x91] sm:$0xff]
        %v1868 = vld [vmem:[%s1627 + $0x99] sm:$0xff]
        %v1869 = vld [vmem:[%s1627 + $0xa9] sm:$0xff]
        %v1870 = vld [vmem:[%s1627 + $0xb1] sm:$0xff]
        %s1871 = scalar_lea.vmem %s1, 56
        %v1872 = vld [vmem:[%s1871] sm:$0xff]
        %v1874 = vsel %vm327, %v1855, 0
        %v1877 = vsel %vm327, %v1856, 0
        %v1880 = vsel %vm327, %v1857, 0
        %v1883 = vsel %vm327, %v1858, 0
        %v1886 = vsel %vm327, %v1859, 0
        %v1889 = vsel %vm327, %v1860, 0
        %v1892 = vsel %vm327, %v1861, 0
        %v1895 = vsel %vm327, %v1862, 0
        %v1898 = vsel %vm327, %v1863, 0
        %v1901 = vsel %vm327, %v1864, 0
        %v1904 = vsel %vm327, %v1865, 0
        %v1907 = vsel %vm327, %v1866, 0
        %v1910 = vsel %vm327, %v1867, 0
        %v1913 = vsel %vm327, %v1868, 0
        %v1916 = vsel %vm327, %v1869, 0
        %v1919 = vsel %vm327, %v1870, 0
        %1921 = vmatprep.subr.mxu0 0.0
        %1922 = vmatpush1.msra.mxu0 %v1872
        %1923 = vmatprep.subr.mxu0 0.0
        %1924 = vmatpush1.msra.mxu0 0.0
        %1925 = vmatprep.subr.mxu0 0.0
        %1926 = vmatpush1.msra.mxu0 0.0
        %1927 = vmatprep.subr.mxu0 0.0
        %1928 = vmatpush1.msra.mxu0 0.0
        %1929 = vmatprep.subr.mxu0 0.0
        %1930 = vmatpush1.msra.mxu0 0.0
        %1931 = vmatprep.subr.mxu0 0.0
        %1932 = vmatpush1.msra.mxu0 0.0
        %1933 = vmatprep.subr.mxu0 0.0
        %1934 = vmatpush1.msra.mxu0 0.0
        %1935 = vmatprep.subr.mxu0 0.0
        %1936 = vmatpush1.msra.mxu0 0.0
        %1937 = vmatprep.subr.mxu0 0.0
        %1938 = vmatpush1.msra.mxu0 0.0
        %1939 = vmatprep.subr.mxu0 0.0
        %1940 = vmatpush1.msra.mxu0 0.0
        %1941 = vmatprep.subr.mxu0 0.0
        %1942 = vmatpush1.msra.mxu0 0.0
        %1943 = vmatprep.subr.mxu0 0.0
        %1944 = vmatpush1.msra.mxu0 0.0
        %1945 = vmatprep.subr.mxu0 0.0
        %1946 = vmatpush1.msra.mxu0 0.0
        %1947 = vmatprep.subr.mxu0 0.0
        %1948 = vmatpush1.msra.mxu0 0.0
        %1949 = vmatprep.subr.mxu0 0.0
        %1950 = vmatpush1.msra.mxu0 0.0
        %1951 = vmatprep.subr.mxu0 0.0
        %1952 = vmatpush1.msra.mxu0 0.0
        %1953 = vmatprep.subr.mxu0 0.0
        %1954 = vmatpush1.msra.mxu0 0.0
        %1955 = vmatprep.subr.mxu0 0.0
        %1956 = vmatpush1.msra.mxu0 0.0
        %1957 = vmatprep.subr.mxu0 0.0
        %1958 = vmatpush1.msra.mxu0 0.0
        %1959 = vmatprep.subr.mxu0 0.0
        %1960 = vmatpush1.msra.mxu0 0.0
        %1961 = vmatprep.subr.mxu0 0.0
        %1962 = vmatpush1.msra.mxu0 0.0
        %1963 = vmatprep.subr.mxu0 0.0
        %1964 = vmatpush1.msra.mxu0 0.0
        %1965 = vmatprep.subr.mxu0 0.0
        %1966 = vmatpush1.msra.mxu0 0.0
        %1967 = vmatprep.subr.mxu0 0.0
        %1968 = vmatpush1.msra.mxu0 0.0
        %1969 = vmatprep.subr.mxu0 0.0
        %1970 = vmatpush1.msra.mxu0 0.0
        %1971 = vmatprep.subr.mxu0 0.0
        %1972 = vmatpush1.msra.mxu0 0.0
        %1973 = vmatprep.subr.mxu0 0.0
        %1974 = vmatpush1.msra.mxu0 0.0
        %1975 = vmatprep.subr.mxu0 0.0
        %1976 = vmatpush1.msra.mxu0 0.0
        %1977 = vmatprep.subr.mxu0 0.0
        %1978 = vmatpush1.msra.mxu0 0.0
        %1979 = vmatprep.subr.mxu0 0.0
        %1980 = vmatpush1.msra.mxu0 0.0
        %1981 = vmatprep.subr.mxu0 0.0
        %1982 = vmatpush1.msra.mxu0 0.0
        %1983 = vmatprep.subr.mxu0 0.0
        %1984 = vmatpush1.msra.mxu0 0.0
        %1985 = vmatprep.mubr.f32.mxu0 0.0
        %1986 = vmatmul.mubr.f32.gmra.mrb[0].mxu0 %v1874
        %v1987 = vpop.f32.mrb[0].mxu0
        %v1988 = vadd.f32 0.0, %v1987
        %v1989 = vpop.f32.mrb[0].mxu0
        %1990 = vmatprep.mubr.f32.mxu0 0.0
        %1991 = vmatmul.mubr.f32.gmra.mrb[0].mxu0 %v1877
        %v1992 = vpop.f32.mrb[0].mxu0
        %v1993 = vadd.f32 0.0, %v1992
        %v1994 = vpop.f32.mrb[0].mxu0
        %1995 = vmatprep.mubr.f32.mxu0 0.0
        %1996 = vmatmul.mubr.f32.gmra.mrb[0].mxu0 %v1880
        %v1997 = vpop.f32.mrb[0].mxu0
        %v1998 = vadd.f32 0.0, %v1997
        %v1999 = vpop.f32.mrb[0].mxu0
        %2000 = vmatprep.mubr.f32.mxu0 0.0
        %2001 = vmatmul.mubr.f32.gmra.mrb[0].mxu0 %v1883
        %v2002 = vpop.f32.mrb[0].mxu0
        %v2003 = vadd.f32 0.0, %v2002
        %v2004 = vpop.f32.mrb[0].mxu0
        %2005 = vmatprep.mubr.f32.mxu0 0.0
        %2006 = vmatmul.mubr.f32.gmra.mrb[0].mxu0 %v1886
        %v2007 = vpop.f32.mrb[0].mxu0
        %v2008 = vadd.f32 0.0, %v2007
        %v2009 = vpop.f32.mrb[0].mxu0
        %2010 = vmatprep.mubr.f32.mxu0 0.0
        %2011 = vmatmul.mubr.f32.gmra.mrb[0].mxu0 %v1889
        %v2012 = vpop.f32.mrb[0].mxu0
        %v2013 = vadd.f32 0.0, %v2012
        %v2014 = vpop.f32.mrb[0].mxu0
        %2015 = vmatprep.mubr.f32.mxu0 0.0
        %2016 = vmatmul.mubr.f32.gmra.mrb[0].mxu0 %v1892
        %v2017 = vpop.f32.mrb[0].mxu0
        %v2018 = vadd.f32 0.0, %v2017
        %v2019 = vpop.f32.mrb[0].mxu0
        %2020 = vmatprep.mubr.f32.mxu0 0.0
        %2021 = vmatmul.mubr.f32.gmra.mrb[0].mxu0 %v1895
        %v2022 = vpop.f32.mrb[0].mxu0
        %v2023 = vadd.f32 0.0, %v2022
        %v2024 = vpop.f32.mrb[0].mxu0
        %2025 = vmatprep.mubr.f32.mxu0 0.0
        %2026 = vmatmul.mubr.f32.gmra.mrb[0].mxu0 %v1898
        %v2027 = vpop.f32.mrb[0].mxu0
        %v2028 = vadd.f32 0.0, %v2027
        %v2029 = vpop.f32.mrb[0].mxu0
        %2030 = vmatprep.mubr.f32.mxu0 0.0
        %2031 = vmatmul.mubr.f32.gmra.mrb[0].mxu0 %v1901
        %v2032 = vpop.f32.mrb[0].mxu0
        %v2033 = vadd.f32 0.0, %v2032
        %v2034 = vpop.f32.mrb[0].mxu0
        %2035 = vmatprep.mubr.f32.mxu0 0.0
        %2036 = vmatmul.mubr.f32.gmra.mrb[0].mxu0 %v1904
        %v2037 = vpop.f32.mrb[0].mxu0
        %v2038 = vadd.f32 0.0, %v2037
        %v2039 = vpop.f32.mrb[0].mxu0
        %2040 = vmatprep.mubr.f32.mxu0 0.0
        %2041 = vmatmul.mubr.f32.gmra.mrb[0].mxu0 %v1907
        %v2042 = vpop.f32.mrb[0].mxu0
        %v2043 = vadd.f32 0.0, %v2042
        %v2044 = vpop.f32.mrb[0].mxu0
        %2045 = vmatprep.mubr.f32.mxu0 0.0
        %2046 = vmatmul.mubr.f32.gmra.mrb[0].mxu0 %v1910
        %v2047 = vpop.f32.mrb[0].mxu0
        %v2048 = vadd.f32 0.0, %v2047
        %v2049 = vpop.f32.mrb[0].mxu0
        %2050 = vmatprep.mubr.f32.mxu0 0.0
        %2051 = vmatmul.mubr.f32.gmra.mrb[0].mxu0 %v1913
        %v2052 = vpop.f32.mrb[0].mxu0
        %v2053 = vadd.f32 0.0, %v2052
        %v2054 = vpop.f32.mrb[0].mxu0
        %2055 = vmatprep.mubr.f32.mxu0 0.0
        %2056 = vmatmul.mubr.f32.gmra.mrb[0].mxu0 %v1916
        %v2057 = vpop.f32.mrb[0].mxu0
        %v2058 = vadd.f32 0.0, %v2057
        %v2059 = vpop.f32.mrb[0].mxu0
        %2060 = vmatprep.mubr.f32.mxu0 0.0
        %2061 = vmatmul.mubr.f32.gmra.mrb[0].mxu0 %v1919
        %v2062 = vpop.f32.mrb[0].mxu0
        %v2063 = vadd.f32 0.0, %v2062
        %v2064 = vpop.f32.mrb[0].mxu0
        %2065 = vdwg.mxu0
        %v2066 = vadd.f32 %v1839, %v1988
        %v2067 = vadd.f32 %v1840, %v1993
        %v2068 = vadd.f32 %v1841, %v1998
        %v2069 = vadd.f32 %v1842, %v2003
        %v2070 = vadd.f32 %v1843, %v2008
        %v2071 = vadd.f32 %v1844, %v2013
        %v2072 = vadd.f32 %v1845, %v2018
        %v2073 = vadd.f32 %v1846, %v2023
        %v2074 = vadd.f32 %v1847, %v2028
        %v2075 = vadd.f32 %v1848, %v2033
        %v2076 = vadd.f32 %v1849, %v2038
        %v2077 = vadd.f32 %v1850, %v2043
        %v2078 = vadd.f32 %v1851, %v2048
        %v2079 = vadd.f32 %v1852, %v2053
        %v2080 = vadd.f32 %v1853, %v2058
        %v2081 = vadd.f32 %v1854, %v2063
        %v2082 = vld [vmem:[%s1627 + $0x2] sm:$0xff]
        %v2083 = vld [vmem:[%s1627 + $0xa] sm:$0xff]
        %v2084 = vld [vmem:[%s1627 + $0x1a] sm:$0xff]
        %v2085 = vld [vmem:[%s1627 + $0x22] sm:$0xff]
        %v2086 = vld [vmem:[%s1627 + $0x32] sm:$0xff]
        %v2087 = vld [vmem:[%s1627 + $0x3a] sm:$0xff]
        %v2088 = vld [vmem:[%s1627 + $0x4a] sm:$0xff]
        %v2089 = vld [vmem:[%s1627 + $0x52] sm:$0xff]
        %v2090 = vld [vmem:[%s1627 + $0x62] sm:$0xff]
        %v2091 = vld [vmem:[%s1627 + $0x6a] sm:$0xff]
        %v2092 = vld [vmem:[%s1627 + $0x7a] sm:$0xff]
        %v2093 = vld [vmem:[%s1627 + $0x82] sm:$0xff]
        %v2094 = vld [vmem:[%s1627 + $0x92] sm:$0xff]
        %v2095 = vld [vmem:[%s1627 + $0x9a] sm:$0xff]
        %v2096 = vld [vmem:[%s1627 + $0xaa] sm:$0xff]
        %v2097 = vld [vmem:[%s1627 + $0xb2] sm:$0xff]
        %s2098 = scalar_lea.vmem %s1, 64
        %v2099 = vld [vmem:[%s2098] sm:$0xff]
        %v2101 = vsel %vm327, %v2082, 0
        %v2104 = vsel %vm327, %v2083, 0
        %v2107 = vsel %vm327, %v2084, 0
        %v2110 = vsel %vm327, %v2085, 0
        %v2113 = vsel %vm327, %v2086, 0
        %v2116 = vsel %vm327, %v2087, 0
        %v2119 = vsel %vm327, %v2088, 0
        %v2122 = vsel %vm327, %v2089, 0
        %v2125 = vsel %vm327, %v2090, 0
        %v2128 = vsel %vm327, %v2091, 0
        %v2131 = vsel %vm327, %v2092, 0
        %v2134 = vsel %vm327, %v2093, 0
        %v2137 = vsel %vm327, %v2094, 0
        %v2140 = vsel %vm327, %v2095, 0
        %v2143 = vsel %vm327, %v2096, 0
        %v2146 = vsel %vm327, %v2097, 0
        %2148 = vmatprep.subr.mxu0 0.0
        %2149 = vmatpush1.msra.mxu0 %v2099
        %2150 = vmatprep.subr.mxu0 0.0
        %2151 = vmatpush1.msra.mxu0 0.0
        %2152 = vmatprep.subr.mxu0 0.0
        %2153 = vmatpush1.msra.mxu0 0.0
        %2154 = vmatprep.subr.mxu0 0.0
        %2155 = vmatpush1.msra.mxu0 0.0
        %2156 = vmatprep.subr.mxu0 0.0
        %2157 = vmatpush1.msra.mxu0 0.0
        %2158 = vmatprep.subr.mxu0 0.0
        %2159 = vmatpush1.msra.mxu0 0.0
        %2160 = vmatprep.subr.mxu0 0.0
        %2161 = vmatpush1.msra.mxu0 0.0
        %2162 = vmatprep.subr.mxu0 0.0
        %2163 = vmatpush1.msra.mxu0 0.0
        %2164 = vmatprep.subr.mxu0 0.0
        %2165 = vmatpush1.msra.mxu0 0.0
        %2166 = vmatprep.subr.mxu0 0.0
        %2167 = vmatpush1.msra.mxu0 0.0
        %2168 = vmatprep.subr.mxu0 0.0
        %2169 = vmatpush1.msra.mxu0 0.0
        %2170 = vmatprep.subr.mxu0 0.0
        %2171 = vmatpush1.msra.mxu0 0.0
        %2172 = vmatprep.subr.mxu0 0.0
        %2173 = vmatpush1.msra.mxu0 0.0
        %2174 = vmatprep.subr.mxu0 0.0
        %2175 = vmatpush1.msra.mxu0 0.0
        %2176 = vmatprep.subr.mxu0 0.0
        %2177 = vmatpush1.msra.mxu0 0.0
        %2178 = vmatprep.subr.mxu0 0.0
        %2179 = vmatpush1.msra.mxu0 0.0
        %2180 = vmatprep.subr.mxu0 0.0
        %2181 = vmatpush1.msra.mxu0 0.0
        %2182 = vmatprep.subr.mxu0 0.0
        %2183 = vmatpush1.msra.mxu0 0.0
        %2184 = vmatprep.subr.mxu0 0.0
        %2185 = vmatpush1.msra.mxu0 0.0
        %2186 = vmatprep.subr.mxu0 0.0
        %2187 = vmatpush1.msra.mxu0 0.0
        %2188 = vmatprep.subr.mxu0 0.0
        %2189 = vmatpush1.msra.mxu0 0.0
        %2190 = vmatprep.subr.mxu0 0.0
        %2191 = vmatpush1.msra.mxu0 0.0
        %2192 = vmatprep.subr.mxu0 0.0
        %2193 = vmatpush1.msra.mxu0 0.0
        %2194 = vmatprep.subr.mxu0 0.0
        %2195 = vmatpush1.msra.mxu0 0.0
        %2196 = vmatprep.subr.mxu0 0.0
        %2197 = vmatpush1.msra.mxu0 0.0
        %2198 = vmatprep.subr.mxu0 0.0
        %2199 = vmatpush1.msra.mxu0 0.0
        %2200 = vmatprep.subr.mxu0 0.0
        %2201 = vmatpush1.msra.mxu0 0.0
        %2202 = vmatprep.subr.mxu0 0.0
        %2203 = vmatpush1.msra.mxu0 0.0
        %2204 = vmatprep.subr.mxu0 0.0
        %2205 = vmatpush1.msra.mxu0 0.0
        %2206 = vmatprep.subr.mxu0 0.0
        %2207 = vmatpush1.msra.mxu0 0.0
        %2208 = vmatprep.subr.mxu0 0.0
        %2209 = vmatpush1.msra.mxu0 0.0
        %2210 = vmatprep.subr.mxu0 0.0
        %2211 = vmatpush1.msra.mxu0 0.0
        %2212 = vmatprep.mubr.f32.mxu0 0.0
        %2213 = vmatmul.mubr.f32.gmra.mrb[0].mxu0 %v2101
        %v2214 = vpop.f32.mrb[0].mxu0
        %v2215 = vadd.f32 0.0, %v2214
        %v2216 = vpop.f32.mrb[0].mxu0
        %2217 = vmatprep.mubr.f32.mxu0 0.0
        %2218 = vmatmul.mubr.f32.gmra.mrb[0].mxu0 %v2104
        %v2219 = vpop.f32.mrb[0].mxu0
        %v2220 = vadd.f32 0.0, %v2219
        %v2221 = vpop.f32.mrb[0].mxu0
        %2222 = vmatprep.mubr.f32.mxu0 0.0
        %2223 = vmatmul.mubr.f32.gmra.mrb[0].mxu0 %v2107
        %v2224 = vpop.f32.mrb[0].mxu0
        %v2225 = vadd.f32 0.0, %v2224
        %v2226 = vpop.f32.mrb[0].mxu0
        %2227 = vmatprep.mubr.f32.mxu0 0.0
        %2228 = vmatmul.mubr.f32.gmra.mrb[0].mxu0 %v2110
        %v2229 = vpop.f32.mrb[0].mxu0
        %v2230 = vadd.f32 0.0, %v2229
        %v2231 = vpop.f32.mrb[0].mxu0
        %2232 = vmatprep.mubr.f32.mxu0 0.0
        %2233 = vmatmul.mubr.f32.gmra.mrb[0].mxu0 %v2113
        %v2234 = vpop.f32.mrb[0].mxu0
        %v2235 = vadd.f32 0.0, %v2234
        %v2236 = vpop.f32.mrb[0].mxu0
        %2237 = vmatprep.mubr.f32.mxu0 0.0
        %2238 = vmatmul.mubr.f32.gmra.mrb[0].mxu0 %v2116
        %v2239 = vpop.f32.mrb[0].mxu0
        %v2240 = vadd.f32 0.0, %v2239
        %v2241 = vpop.f32.mrb[0].mxu0
        %2242 = vmatprep.mubr.f32.mxu0 0.0
        %2243 = vmatmul.mubr.f32.gmra.mrb[0].mxu0 %v2119
        %v2244 = vpop.f32.mrb[0].mxu0
        %v2245 = vadd.f32 0.0, %v2244
        %v2246 = vpop.f32.mrb[0].mxu0
        %2247 = vmatprep.mubr.f32.mxu0 0.0
        %2248 = vmatmul.mubr.f32.gmra.mrb[0].mxu0 %v2122
        %v2249 = vpop.f32.mrb[0].mxu0
        %v2250 = vadd.f32 0.0, %v2249
        %v2251 = vpop.f32.mrb[0].mxu0
        %2252 = vmatprep.mubr.f32.mxu0 0.0
        %2253 = vmatmul.mubr.f32.gmra.mrb[0].mxu0 %v2125
        %v2254 = vpop.f32.mrb[0].mxu0
        %v2255 = vadd.f32 0.0, %v2254
        %v2256 = vpop.f32.mrb[0].mxu0
        %2257 = vmatprep.mubr.f32.mxu0 0.0
        %2258 = vmatmul.mubr.f32.gmra.mrb[0].mxu0 %v2128
        %v2259 = vpop.f32.mrb[0].mxu0
        %v2260 = vadd.f32 0.0, %v2259
        %v2261 = vpop.f32.mrb[0].mxu0
        %2262 = vmatprep.mubr.f32.mxu0 0.0
        %2263 = vmatmul.mubr.f32.gmra.mrb[0].mxu0 %v2131
        %v2264 = vpop.f32.mrb[0].mxu0
        %v2265 = vadd.f32 0.0, %v2264
        %v2266 = vpop.f32.mrb[0].mxu0
        %2267 = vmatprep.mubr.f32.mxu0 0.0
        %2268 = vmatmul.mubr.f32.gmra.mrb[0].mxu0 %v2134
        %v2269 = vpop.f32.mrb[0].mxu0
        %v2270 = vadd.f32 0.0, %v2269
        %v2271 = vpop.f32.mrb[0].mxu0
        %2272 = vmatprep.mubr.f32.mxu0 0.0
        %2273 = vmatmul.mubr.f32.gmra.mrb[0].mxu0 %v2137
        %v2274 = vpop.f32.mrb[0].mxu0
        %v2275 = vadd.f32 0.0, %v2274
        %v2276 = vpop.f32.mrb[0].mxu0
        %2277 = vmatprep.mubr.f32.mxu0 0.0
        %2278 = vmatmul.mubr.f32.gmra.mrb[0].mxu0 %v2140
        %v2279 = vpop.f32.mrb[0].mxu0
        %v2280 = vadd.f32 0.0, %v2279
        %v2281 = vpop.f32.mrb[0].mxu0
        %2282 = vmatprep.mubr.f32.mxu0 0.0
        %2283 = vmatmul.mubr.f32.gmra.mrb[0].mxu0 %v2143
        %v2284 = vpop.f32.mrb[0].mxu0
        %v2285 = vadd.f32 0.0, %v2284
        %v2286 = vpop.f32.mrb[0].mxu0
        %2287 = vmatprep.mubr.f32.mxu0 0.0
        %2288 = vmatmul.mubr.f32.gmra.mrb[0].mxu0 %v2146
        %v2289 = vpop.f32.mrb[0].mxu0
        %v2290 = vadd.f32 0.0, %v2289
        %v2291 = vpop.f32.mrb[0].mxu0
        %2292 = vdwg.mxu0
        %v2293 = vadd.f32 %v2066, %v2215
        %v2294 = vadd.f32 %v2067, %v2220
        %v2295 = vadd.f32 %v2068, %v2225
        %v2296 = vadd.f32 %v2069, %v2230
        %v2297 = vadd.f32 %v2070, %v2235
        %v2298 = vadd.f32 %v2071, %v2240
        %v2299 = vadd.f32 %v2072, %v2245
        %v2300 = vadd.f32 %v2073, %v2250
        %v2301 = vadd.f32 %v2074, %v2255
        %v2302 = vadd.f32 %v2075, %v2260
        %v2303 = vadd.f32 %v2076, %v2265
        %v2304 = vadd.f32 %v2077, %v2270
        %v2305 = vadd.f32 %v2078, %v2275
        %v2306 = vadd.f32 %v2079, %v2280
        %v2307 = vadd.f32 %v2080, %v2285
        %v2308 = vadd.f32 %v2081, %v2290
        %v2310 = vlaneseq
        %v2311 = vshrl.u32 %v2310, 7
        %v2312 = vsub.s32 0, %v2311
        %v2313 = vrot.slane %v281, %v2312
        %v2315 = vadd.f32 %v2293, %v2313
        %v2316 = vadd.f32 %v2294, %v2313
        %v2317 = vadd.f32 %v2295, %v2313
        %v2318 = vadd.f32 %v2296, %v2313
        %v2319 = vadd.f32 %v2297, %v2313
        %v2320 = vadd.f32 %v2298, %v2313
        %v2321 = vadd.f32 %v2299, %v2313
        %v2322 = vadd.f32 %v2300, %v2313
        %v2323 = vadd.f32 %v2301, %v2313
        %v2324 = vadd.f32 %v2302, %v2313
        %v2325 = vadd.f32 %v2303, %v2313
        %v2326 = vadd.f32 %v2304, %v2313
        %v2327 = vadd.f32 %v2305, %v2313
        %v2328 = vadd.f32 %v2306, %v2313
        %v2329 = vadd.f32 %v2307, %v2313
        %v2330 = vadd.f32 %v2308, %v2313
        %v2331 = vmax.f32 %v2315, 0.0
        %v2332 = vmax.f32 %v2316, 0.0
        %v2333 = vmax.f32 %v2317, 0.0
        %v2334 = vmax.f32 %v2318, 0.0
        %v2335 = vmax.f32 %v2319, 0.0
        %v2336 = vmax.f32 %v2320, 0.0
        %v2337 = vmax.f32 %v2321, 0.0
        %v2338 = vmax.f32 %v2322, 0.0
        %v2339 = vmax.f32 %v2323, 0.0
        %v2340 = vmax.f32 %v2324, 0.0
        %v2341 = vmax.f32 %v2325, 0.0
        %v2342 = vmax.f32 %v2326, 0.0
        %v2343 = vmax.f32 %v2327, 0.0
        %v2344 = vmax.f32 %v2328, 0.0
        %v2345 = vmax.f32 %v2329, 0.0
        %v2346 = vmax.f32 %v2330, 0.0
        %s2347 = scalar_lea.vmem [#allocation2], %s942
        %2348 = vst.msk [vmem:[%s2347 + $0x1] sm:$0xff] %vm225, %v2331
        %2349 = vst.msk [vmem:[%s2347 + $0x9] sm:$0xff] %vm225, %v2332
        %2350 = vst.msk [vmem:[%s2347 + $0x19] sm:$0xff] %vm225, %v2333
        %2351 = vst.msk [vmem:[%s2347 + $0x21] sm:$0xff] %vm225, %v2334
        %2352 = vst.msk [vmem:[%s2347 + $0x31] sm:$0xff] %vm225, %v2335
        %2353 = vst.msk [vmem:[%s2347 + $0x39] sm:$0xff] %vm225, %v2336
        %2354 = vst.msk [vmem:[%s2347 + $0x49] sm:$0xff] %vm225, %v2337
        %2355 = vst.msk [vmem:[%s2347 + $0x51] sm:$0xff] %vm225, %v2338
        %2356 = vst.msk [vmem:[%s2347 + $0x61] sm:$0xff] %vm225, %v2339
        %2357 = vst.msk [vmem:[%s2347 + $0x69] sm:$0xff] %vm225, %v2340
        %2358 = vst.msk [vmem:[%s2347 + $0x79] sm:$0xff] %vm225, %v2341
        %2359 = vst.msk [vmem:[%s2347 + $0x81] sm:$0xff] %vm225, %v2342
        %2360 = vst.msk [vmem:[%s2347 + $0x91] sm:$0xff] %vm225, %v2343
        %2361 = vst.msk [vmem:[%s2347 + $0x99] sm:$0xff] %vm225, %v2344
        %2362 = vst.msk [vmem:[%s2347 + $0xa9] sm:$0xff] %vm225, %v2345
        %2363 = vst.msk [vmem:[%s2347 + $0xb1] sm:$0xff] %vm225, %v2346
      $region45: #{tpu_custom_call.1} parent=39 // loop_footer
        %s288 = sadd.s32 1, %s284
      $region46: #{tpu_custom_call.1} parent=39 // loop_footer_branch
        %283 = sbr.rel target = $region42
      $region47: #{tpu_custom_call.1} parent=39 // loop_exit
        _
      loop: start=0, step=1, limit=2
      $region48: #{tpu_custom_call.1} parent=39 // loop_pre_header
        _
      $region49: #{tpu_custom_call.1} parent=39 // loop_header
        %s2365 = sphi 0, %s2369
        %p2366 = scmp.ge.s32.totalorder %s2365, 2
      $region50: #{tpu_custom_call.1} parent=39 // loop_header_branch
        %2368 = sbr.rel (%p2366) target = $region54
      $region51: #{tpu_custom_call.1} parent=39 // loop_body
        %s2370 = smul.u32 %s2365, 8
        %s2371 = smul.u32 %s2370, 24
        %s2372 = scalar_lea.vmem [#allocation2], %s2371
        %v2373 = vld [vmem:[%s2372] sm:$0xff]
        %v2374 = vld [vmem:[%s2372 + $0x8] sm:$0xff]
        %v2375 = vld [vmem:[%s2372 + $0x18] sm:$0xff]
        %v2376 = vld [vmem:[%s2372 + $0x20] sm:$0xff]
        %v2377 = vld [vmem:[%s2372 + $0x30] sm:$0xff]
        %v2378 = vld [vmem:[%s2372 + $0x38] sm:$0xff]
        %v2379 = vld [vmem:[%s2372 + $0x48] sm:$0xff]
        %v2380 = vld [vmem:[%s2372 + $0x50] sm:$0xff]
        %v2381 = vld [vmem:[%s2372 + $0x60] sm:$0xff]
        %v2382 = vld [vmem:[%s2372 + $0x68] sm:$0xff]
        %v2383 = vld [vmem:[%s2372 + $0x78] sm:$0xff]
        %v2384 = vld [vmem:[%s2372 + $0x80] sm:$0xff]
        %v2385 = vld [vmem:[%s2372 + $0x90] sm:$0xff]
        %v2386 = vld [vmem:[%s2372 + $0x98] sm:$0xff]
        %v2387 = vld [vmem:[%s2372 + $0xa8] sm:$0xff]
        %v2388 = vld [vmem:[%s2372 + $0xb0] sm:$0xff]
        %v2389 = vld [vmem:[%s3] sm:$0xff]
        %v2390 = vld [vmem:[%s3 + $0x8] sm:$0xff]
        %v2391 = vld [vmem:[%s2372 + $0x1] sm:$0xff]
        %v2392 = vld [vmem:[%s2372 + $0x9] sm:$0xff]
        %v2393 = vld [vmem:[%s2372 + $0x19] sm:$0xff]
        %v2394 = vld [vmem:[%s2372 + $0x21] sm:$0xff]
        %v2395 = vld [vmem:[%s2372 + $0x31] sm:$0xff]
        %v2396 = vld [vmem:[%s2372 + $0x39] sm:$0xff]
        %v2397 = vld [vmem:[%s2372 + $0x49] sm:$0xff]
        %v2398 = vld [vmem:[%s2372 + $0x51] sm:$0xff]
        %v2399 = vld [vmem:[%s2372 + $0x61] sm:$0xff]
        %v2400 = vld [vmem:[%s2372 + $0x69] sm:$0xff]
        %v2401 = vld [vmem:[%s2372 + $0x79] sm:$0xff]
        %v2402 = vld [vmem:[%s2372 + $0x81] sm:$0xff]
        %v2403 = vld [vmem:[%s2372 + $0x91] sm:$0xff]
        %v2404 = vld [vmem:[%s2372 + $0x99] sm:$0xff]
        %v2405 = vld [vmem:[%s2372 + $0xa9] sm:$0xff]
        %v2406 = vld [vmem:[%s2372 + $0xb1] sm:$0xff]
        %s2407 = scalar_lea.vmem %s3, 16
        %v2408 = vld [vmem:[%s2407] sm:$0xff]
        %v2409 = vld [vmem:[%s2407 + $0x8] sm:$0xff]
        %v2411 = vsel %vm225, %v2391, 0
        %v2414 = vsel %vm225, %v2392, 0
        %v2417 = vsel %vm225, %v2393, 0
        %v2420 = vsel %vm225, %v2394, 0
        %v2423 = vsel %vm225, %v2395, 0
        %v2426 = vsel %vm225, %v2396, 0
        %v2429 = vsel %vm225, %v2397, 0
        %v2432 = vsel %vm225, %v2398, 0
        %v2435 = vsel %vm225, %v2399, 0
        %v2438 = vsel %vm225, %v2400, 0
        %v2441 = vsel %vm225, %v2401, 0
        %v2444 = vsel %vm225, %v2402, 0
        %v2447 = vsel %vm225, %v2403, 0
        %v2450 = vsel %vm225, %v2404, 0
        %v2453 = vsel %vm225, %v2405, 0
        %v2456 = vsel %vm225, %v2406, 0
        %2458 = vmatprep.subr.mxu0 0.0
        %2459 = vmatpush1.msra.mxu0 %v2408
        %2460 = vmatprep.subr.mxu0 0.0
        %2461 = vmatpush1.msra.mxu0 %v2409
        %2462 = vmatprep.subr.mxu0 0.0
        %2463 = vmatpush1.msra.mxu0 0.0
        %2464 = vmatprep.subr.mxu0 0.0
        %2465 = vmatpush1.msra.mxu0 0.0
        %2466 = vmatprep.subr.mxu0 0.0
        %2467 = vmatpush1.msra.mxu0 0.0
        %2468 = vmatprep.subr.mxu0 0.0
        %2469 = vmatpush1.msra.mxu0 0.0
        %2470 = vmatprep.subr.mxu0 0.0
        %2471 = vmatpush1.msra.mxu0 0.0
        %2472 = vmatprep.subr.mxu0 0.0
        %2473 = vmatpush1.msra.mxu0 0.0
        %2474 = vmatprep.subr.mxu0 0.0
        %2475 = vmatpush1.msra.mxu0 0.0
        %2476 = vmatprep.subr.mxu0 0.0
        %2477 = vmatpush1.msra.mxu0 0.0
        %2478 = vmatprep.subr.mxu0 0.0
        %2479 = vmatpush1.msra.mxu0 0.0
        %2480 = vmatprep.subr.mxu0 0.0
        %2481 = vmatpush1.msra.mxu0 0.0
        %2482 = vmatprep.subr.mxu0 0.0
        %2483 = vmatpush1.msra.mxu0 0.0
        %2484 = vmatprep.subr.mxu0 0.0
        %2485 = vmatpush1.msra.mxu0 0.0
        %2486 = vmatprep.subr.mxu0 0.0
        %2487 = vmatpush1.msra.mxu0 0.0
        %2488 = vmatprep.subr.mxu0 0.0
        %2489 = vmatpush1.msra.mxu0 0.0
        %2490 = vmatprep.subr.mxu0 0.0
        %2491 = vmatpush1.msra.mxu0 0.0
        %2492 = vmatprep.subr.mxu0 0.0
        %2493 = vmatpush1.msra.mxu0 0.0
        %2494 = vmatprep.subr.mxu0 0.0
        %2495 = vmatpush1.msra.mxu0 0.0
        %2496 = vmatprep.subr.mxu0 0.0
        %2497 = vmatpush1.msra.mxu0 0.0
        %2498 = vmatprep.subr.mxu0 0.0
        %2499 = vmatpush1.msra.mxu0 0.0
        %2500 = vmatprep.subr.mxu0 0.0
        %2501 = vmatpush1.msra.mxu0 0.0
        %2502 = vmatprep.subr.mxu0 0.0
        %2503 = vmatpush1.msra.mxu0 0.0
        %2504 = vmatprep.subr.mxu0 0.0
        %2505 = vmatpush1.msra.mxu0 0.0
        %2506 = vmatprep.subr.mxu0 0.0
        %2507 = vmatpush1.msra.mxu0 0.0
        %2508 = vmatprep.subr.mxu0 0.0
        %2509 = vmatpush1.msra.mxu0 0.0
        %2510 = vmatprep.subr.mxu0 0.0
        %2511 = vmatpush1.msra.mxu0 0.0
        %2512 = vmatprep.subr.mxu0 0.0
        %2513 = vmatpush1.msra.mxu0 0.0
        %2514 = vmatprep.subr.mxu0 0.0
        %2515 = vmatpush1.msra.mxu0 0.0
        %2516 = vmatprep.subr.mxu0 0.0
        %2517 = vmatpush1.msra.mxu0 0.0
        %2518 = vmatprep.subr.mxu0 0.0
        %2519 = vmatpush1.msra.mxu0 0.0
        %2520 = vmatprep.subr.mxu0 0.0
        %2521 = vmatpush1.msra.mxu0 0.0
        %2522 = vmatprep.mubr.f32.mxu0 0.0
        %2523 = vmatmul.mubr.f32.gmra.mrb[0].mxu0 %v2411
        %v2524 = vpop.f32.mrb[0].mxu0
        %v2525 = vadd.f32 0.0, %v2524
        %v2526 = vpop.f32.mrb[0].mxu0
        %2527 = vmatprep.mubr.f32.mxu0 0.0
        %2528 = vmatmul.mubr.f32.gmra.mrb[0].mxu0 %v2414
        %v2529 = vpop.f32.mrb[0].mxu0
        %v2530 = vadd.f32 0.0, %v2529
        %v2531 = vpop.f32.mrb[0].mxu0
        %2532 = vmatprep.mubr.f32.mxu0 0.0
        %2533 = vmatmul.mubr.f32.gmra.mrb[0].mxu0 %v2417
        %v2534 = vpop.f32.mrb[0].mxu0
        %v2535 = vadd.f32 0.0, %v2534
        %v2536 = vpop.f32.mrb[0].mxu0
        %2537 = vmatprep.mubr.f32.mxu0 0.0
        %2538 = vmatmul.mubr.f32.gmra.mrb[0].mxu0 %v2420
        %v2539 = vpop.f32.mrb[0].mxu0
        %v2540 = vadd.f32 0.0, %v2539
        %v2541 = vpop.f32.mrb[0].mxu0
        %2542 = vmatprep.mubr.f32.mxu0 0.0
        %2543 = vmatmul.mubr.f32.gmra.mrb[0].mxu0 %v2423
        %v2544 = vpop.f32.mrb[0].mxu0
        %v2545 = vadd.f32 0.0, %v2544
        %v2546 = vpop.f32.mrb[0].mxu0
        %2547 = vmatprep.mubr.f32.mxu0 0.0
        %2548 = vmatmul.mubr.f32.gmra.mrb[0].mxu0 %v2426
        %v2549 = vpop.f32.mrb[0].mxu0
        %v2550 = vadd.f32 0.0, %v2549
        %v2551 = vpop.f32.mrb[0].mxu0
        %2552 = vmatprep.mubr.f32.mxu0 0.0
        %2553 = vmatmul.mubr.f32.gmra.mrb[0].mxu0 %v2429
        %v2554 = vpop.f32.mrb[0].mxu0
        %v2555 = vadd.f32 0.0, %v2554
        %v2556 = vpop.f32.mrb[0].mxu0
        %2557 = vmatprep.mubr.f32.mxu0 0.0
        %2558 = vmatmul.mubr.f32.gmra.mrb[0].mxu0 %v2432
        %v2559 = vpop.f32.mrb[0].mxu0
        %v2560 = vadd.f32 0.0, %v2559
        %v2561 = vpop.f32.mrb[0].mxu0
        %2562 = vmatprep.mubr.f32.mxu0 0.0
        %2563 = vmatmul.mubr.f32.gmra.mrb[0].mxu0 %v2435
        %v2564 = vpop.f32.mrb[0].mxu0
        %v2565 = vadd.f32 0.0, %v2564
        %v2566 = vpop.f32.mrb[0].mxu0
        %2567 = vmatprep.mubr.f32.mxu0 0.0
        %2568 = vmatmul.mubr.f32.gmra.mrb[0].mxu0 %v2438
        %v2569 = vpop.f32.mrb[0].mxu0
        %v2570 = vadd.f32 0.0, %v2569
        %v2571 = vpop.f32.mrb[0].mxu0
        %2572 = vmatprep.mubr.f32.mxu0 0.0
        %2573 = vmatmul.mubr.f32.gmra.mrb[0].mxu0 %v2441
        %v2574 = vpop.f32.mrb[0].mxu0
        %v2575 = vadd.f32 0.0, %v2574
        %v2576 = vpop.f32.mrb[0].mxu0
        %2577 = vmatprep.mubr.f32.mxu0 0.0
        %2578 = vmatmul.mubr.f32.gmra.mrb[0].mxu0 %v2444
        %v2579 = vpop.f32.mrb[0].mxu0
        %v2580 = vadd.f32 0.0, %v2579
        %v2581 = vpop.f32.mrb[0].mxu0
        %2582 = vmatprep.mubr.f32.mxu0 0.0
        %2583 = vmatmul.mubr.f32.gmra.mrb[0].mxu0 %v2447
        %v2584 = vpop.f32.mrb[0].mxu0
        %v2585 = vadd.f32 0.0, %v2584
        %v2586 = vpop.f32.mrb[0].mxu0
        %2587 = vmatprep.mubr.f32.mxu0 0.0
        %2588 = vmatmul.mubr.f32.gmra.mrb[0].mxu0 %v2450
        %v2589 = vpop.f32.mrb[0].mxu0
        %v2590 = vadd.f32 0.0, %v2589
        %v2591 = vpop.f32.mrb[0].mxu0
        %2592 = vmatprep.mubr.f32.mxu0 0.0
        %2593 = vmatmul.mubr.f32.gmra.mrb[0].mxu0 %v2453
        %v2594 = vpop.f32.mrb[0].mxu0
        %v2595 = vadd.f32 0.0, %v2594
        %v2596 = vpop.f32.mrb[0].mxu0
        %2597 = vmatprep.mubr.f32.mxu0 0.0
        %2598 = vmatmul.mubr.f32.gmra.mrb[0].mxu0 %v2456
        %v2599 = vpop.f32.mrb[0].mxu0
        %v2600 = vadd.f32 0.0, %v2599
        %v2601 = vpop.f32.mrb[0].mxu0
        %2602 = vdwg.mxu0
        %v2604 = vsel %vm225, %v2373, 0
        %v2607 = vsel %vm225, %v2374, 0
        %v2610 = vsel %vm225, %v2375, 0
        %v2613 = vsel %vm225, %v2376, 0
        %v2616 = vsel %vm225, %v2377, 0
        %v2619 = vsel %vm225, %v2378, 0
        %v2622 = vsel %vm225, %v2379, 0
        %v2625 = vsel %vm225, %v2380, 0
        %v2628 = vsel %vm225, %v2381, 0
        %v2631 = vsel %vm225, %v2382, 0
        %v2634 = vsel %vm225, %v2383, 0
        %v2637 = vsel %vm225, %v2384, 0
        %v2640 = vsel %vm225, %v2385, 0
        %v2643 = vsel %vm225, %v2386, 0
        %v2646 = vsel %vm225, %v2387, 0
        %v2649 = vsel %vm225, %v2388, 0
        %2651 = vmatprep.subr.mxu0 0.0
        %2652 = vmatpush1.msra.mxu0 %v2389
        %2653 = vmatprep.subr.mxu0 0.0
        %2654 = vmatpush1.msra.mxu0 %v2390
        %2655 = vmatprep.subr.mxu0 0.0
        %2656 = vmatpush1.msra.mxu0 0.0
        %2657 = vmatprep.subr.mxu0 0.0
        %2658 = vmatpush1.msra.mxu0 0.0
        %2659 = vmatprep.subr.mxu0 0.0
        %2660 = vmatpush1.msra.mxu0 0.0
        %2661 = vmatprep.subr.mxu0 0.0
        %2662 = vmatpush1.msra.mxu0 0.0
        %2663 = vmatprep.subr.mxu0 0.0
        %2664 = vmatpush1.msra.mxu0 0.0
        %2665 = vmatprep.subr.mxu0 0.0
        %2666 = vmatpush1.msra.mxu0 0.0
        %2667 = vmatprep.subr.mxu0 0.0
        %2668 = vmatpush1.msra.mxu0 0.0
        %2669 = vmatprep.subr.mxu0 0.0
        %2670 = vmatpush1.msra.mxu0 0.0
        %2671 = vmatprep.subr.mxu0 0.0
        %2672 = vmatpush1.msra.mxu0 0.0
        %2673 = vmatprep.subr.mxu0 0.0
        %2674 = vmatpush1.msra.mxu0 0.0
        %2675 = vmatprep.subr.mxu0 0.0
        %2676 = vmatpush1.msra.mxu0 0.0
        %2677 = vmatprep.subr.mxu0 0.0
        %2678 = vmatpush1.msra.mxu0 0.0
        %2679 = vmatprep.subr.mxu0 0.0
        %2680 = vmatpush1.msra.mxu0 0.0
        %2681 = vmatprep.subr.mxu0 0.0
        %2682 = vmatpush1.msra.mxu0 0.0
        %2683 = vmatprep.subr.mxu0 0.0
        %2684 = vmatpush1.msra.mxu0 0.0
        %2685 = vmatprep.subr.mxu0 0.0
        %2686 = vmatpush1.msra.mxu0 0.0
        %2687 = vmatprep.subr.mxu0 0.0
        %2688 = vmatpush1.msra.mxu0 0.0
        %2689 = vmatprep.subr.mxu0 0.0
        %2690 = vmatpush1.msra.mxu0 0.0
        %2691 = vmatprep.subr.mxu0 0.0
        %2692 = vmatpush1.msra.mxu0 0.0
        %2693 = vmatprep.subr.mxu0 0.0
        %2694 = vmatpush1.msra.mxu0 0.0
        %2695 = vmatprep.subr.mxu0 0.0
        %2696 = vmatpush1.msra.mxu0 0.0
        %2697 = vmatprep.subr.mxu0 0.0
        %2698 = vmatpush1.msra.mxu0 0.0
        %2699 = vmatprep.subr.mxu0 0.0
        %2700 = vmatpush1.msra.mxu0 0.0
        %2701 = vmatprep.subr.mxu0 0.0
        %2702 = vmatpush1.msra.mxu0 0.0
        %2703 = vmatprep.subr.mxu0 0.0
        %2704 = vmatpush1.msra.mxu0 0.0
        %2705 = vmatprep.subr.mxu0 0.0
        %2706 = vmatpush1.msra.mxu0 0.0
        %2707 = vmatprep.subr.mxu0 0.0
        %2708 = vmatpush1.msra.mxu0 0.0
        %2709 = vmatprep.subr.mxu0 0.0
        %2710 = vmatpush1.msra.mxu0 0.0
        %2711 = vmatprep.subr.mxu0 0.0
        %2712 = vmatpush1.msra.mxu0 0.0
        %2713 = vmatprep.subr.mxu0 0.0
        %2714 = vmatpush1.msra.mxu0 0.0
        %2715 = vmatprep.mubr.f32.mxu0 0.0
        %2716 = vmatmul.mubr.f32.gmra.mrb[0].mxu0 %v2604
        %v2717 = vpop.f32.mrb[0].mxu0
        %v2718 = vadd.f32 %v2525, %v2717
        %v2719 = vpop.f32.mrb[0].mxu0
        %2720 = vmatprep.mubr.f32.mxu0 0.0
        %2721 = vmatmul.mubr.f32.gmra.mrb[0].mxu0 %v2607
        %v2722 = vpop.f32.mrb[0].mxu0
        %v2723 = vadd.f32 %v2530, %v2722
        %v2724 = vpop.f32.mrb[0].mxu0
        %2725 = vmatprep.mubr.f32.mxu0 0.0
        %2726 = vmatmul.mubr.f32.gmra.mrb[0].mxu0 %v2610
        %v2727 = vpop.f32.mrb[0].mxu0
        %v2728 = vadd.f32 %v2535, %v2727
        %v2729 = vpop.f32.mrb[0].mxu0
        %2730 = vmatprep.mubr.f32.mxu0 0.0
        %2731 = vmatmul.mubr.f32.gmra.mrb[0].mxu0 %v2613
        %v2732 = vpop.f32.mrb[0].mxu0
        %v2733 = vadd.f32 %v2540, %v2732
        %v2734 = vpop.f32.mrb[0].mxu0
        %2735 = vmatprep.mubr.f32.mxu0 0.0
        %2736 = vmatmul.mubr.f32.gmra.mrb[0].mxu0 %v2616
        %v2737 = vpop.f32.mrb[0].mxu0
        %v2738 = vadd.f32 %v2545, %v2737
        %v2739 = vpop.f32.mrb[0].mxu0
        %2740 = vmatprep.mubr.f32.mxu0 0.0
        %2741 = vmatmul.mubr.f32.gmra.mrb[0].mxu0 %v2619
        %v2742 = vpop.f32.mrb[0].mxu0
        %v2743 = vadd.f32 %v2550, %v2742
        %v2744 = vpop.f32.mrb[0].mxu0
        %2745 = vmatprep.mubr.f32.mxu0 0.0
        %2746 = vmatmul.mubr.f32.gmra.mrb[0].mxu0 %v2622
        %v2747 = vpop.f32.mrb[0].mxu0
        %v2748 = vadd.f32 %v2555, %v2747
        %v2749 = vpop.f32.mrb[0].mxu0
        %2750 = vmatprep.mubr.f32.mxu0 0.0
        %2751 = vmatmul.mubr.f32.gmra.mrb[0].mxu0 %v2625
        %v2752 = vpop.f32.mrb[0].mxu0
        %v2753 = vadd.f32 %v2560, %v2752
        %v2754 = vpop.f32.mrb[0].mxu0
        %2755 = vmatprep.mubr.f32.mxu0 0.0
        %2756 = vmatmul.mubr.f32.gmra.mrb[0].mxu0 %v2628
        %v2757 = vpop.f32.mrb[0].mxu0
        %v2758 = vadd.f32 %v2565, %v2757
        %v2759 = vpop.f32.mrb[0].mxu0
        %2760 = vmatprep.mubr.f32.mxu0 0.0
        %2761 = vmatmul.mubr.f32.gmra.mrb[0].mxu0 %v2631
        %v2762 = vpop.f32.mrb[0].mxu0
        %v2763 = vadd.f32 %v2570, %v2762
        %v2764 = vpop.f32.mrb[0].mxu0
        %2765 = vmatprep.mubr.f32.mxu0 0.0
        %2766 = vmatmul.mubr.f32.gmra.mrb[0].mxu0 %v2634
        %v2767 = vpop.f32.mrb[0].mxu0
        %v2768 = vadd.f32 %v2575, %v2767
        %v2769 = vpop.f32.mrb[0].mxu0
        %2770 = vmatprep.mubr.f32.mxu0 0.0
        %2771 = vmatmul.mubr.f32.gmra.mrb[0].mxu0 %v2637
        %v2772 = vpop.f32.mrb[0].mxu0
        %v2773 = vadd.f32 %v2580, %v2772
        %v2774 = vpop.f32.mrb[0].mxu0
        %2775 = vmatprep.mubr.f32.mxu0 0.0
        %2776 = vmatmul.mubr.f32.gmra.mrb[0].mxu0 %v2640
        %v2777 = vpop.f32.mrb[0].mxu0
        %v2778 = vadd.f32 %v2585, %v2777
        %v2779 = vpop.f32.mrb[0].mxu0
        %2780 = vmatprep.mubr.f32.mxu0 0.0
        %2781 = vmatmul.mubr.f32.gmra.mrb[0].mxu0 %v2643
        %v2782 = vpop.f32.mrb[0].mxu0
        %v2783 = vadd.f32 %v2590, %v2782
        %v2784 = vpop.f32.mrb[0].mxu0
        %2785 = vmatprep.mubr.f32.mxu0 0.0
        %2786 = vmatmul.mubr.f32.gmra.mrb[0].mxu0 %v2646
        %v2787 = vpop.f32.mrb[0].mxu0
        %v2788 = vadd.f32 %v2595, %v2787
        %v2789 = vpop.f32.mrb[0].mxu0
        %2790 = vmatprep.mubr.f32.mxu0 0.0
        %2791 = vmatmul.mubr.f32.gmra.mrb[0].mxu0 %v2649
        %v2792 = vpop.f32.mrb[0].mxu0
        %v2793 = vadd.f32 %v2600, %v2792
        %v2794 = vpop.f32.mrb[0].mxu0
        %2795 = vdwg.mxu0
        %v2796 = vld [vmem:[%s2372 + $0x2] sm:$0xff]
        %v2797 = vld [vmem:[%s2372 + $0xa] sm:$0xff]
        %v2798 = vld [vmem:[%s2372 + $0x1a] sm:$0xff]
        %v2799 = vld [vmem:[%s2372 + $0x22] sm:$0xff]
        %v2800 = vld [vmem:[%s2372 + $0x32] sm:$0xff]
        %v2801 = vld [vmem:[%s2372 + $0x3a] sm:$0xff]
        %v2802 = vld [vmem:[%s2372 + $0x4a] sm:$0xff]
        %v2803 = vld [vmem:[%s2372 + $0x52] sm:$0xff]
        %v2804 = vld [vmem:[%s2372 + $0x62] sm:$0xff]
        %v2805 = vld [vmem:[%s2372 + $0x6a] sm:$0xff]
        %v2806 = vld [vmem:[%s2372 + $0x7a] sm:$0xff]
        %v2807 = vld [vmem:[%s2372 + $0x82] sm:$0xff]
        %v2808 = vld [vmem:[%s2372 + $0x92] sm:$0xff]
        %v2809 = vld [vmem:[%s2372 + $0x9a] sm:$0xff]
        %v2810 = vld [vmem:[%s2372 + $0xaa] sm:$0xff]
        %v2811 = vld [vmem:[%s2372 + $0xb2] sm:$0xff]
        %s2812 = scalar_lea.vmem %s3, 32
        %v2813 = vld [vmem:[%s2812] sm:$0xff]
        %v2814 = vld [vmem:[%s2812 + $0x8] sm:$0xff]
        %v2816 = vsel %vm225, %v2796, 0
        %v2819 = vsel %vm225, %v2797, 0
        %v2822 = vsel %vm225, %v2798, 0
        %v2825 = vsel %vm225, %v2799, 0
        %v2828 = vsel %vm225, %v2800, 0
        %v2831 = vsel %vm225, %v2801, 0
        %v2834 = vsel %vm225, %v2802, 0
        %v2837 = vsel %vm225, %v2803, 0
        %v2840 = vsel %vm225, %v2804, 0
        %v2843 = vsel %vm225, %v2805, 0
        %v2846 = vsel %vm225, %v2806, 0
        %v2849 = vsel %vm225, %v2807, 0
        %v2852 = vsel %vm225, %v2808, 0
        %v2855 = vsel %vm225, %v2809, 0
        %v2858 = vsel %vm225, %v2810, 0
        %v2861 = vsel %vm225, %v2811, 0
        %2863 = vmatprep.subr.mxu0 0.0
        %2864 = vmatpush1.msra.mxu0 %v2813
        %2865 = vmatprep.subr.mxu0 0.0
        %2866 = vmatpush1.msra.mxu0 %v2814
        %2867 = vmatprep.subr.mxu0 0.0
        %2868 = vmatpush1.msra.mxu0 0.0
        %2869 = vmatprep.subr.mxu0 0.0
        %2870 = vmatpush1.msra.mxu0 0.0
        %2871 = vmatprep.subr.mxu0 0.0
        %2872 = vmatpush1.msra.mxu0 0.0
        %2873 = vmatprep.subr.mxu0 0.0
        %2874 = vmatpush1.msra.mxu0 0.0
        %2875 = vmatprep.subr.mxu0 0.0
        %2876 = vmatpush1.msra.mxu0 0.0
        %2877 = vmatprep.subr.mxu0 0.0
        %2878 = vmatpush1.msra.mxu0 0.0
        %2879 = vmatprep.subr.mxu0 0.0
        %2880 = vmatpush1.msra.mxu0 0.0
        %2881 = vmatprep.subr.mxu0 0.0
        %2882 = vmatpush1.msra.mxu0 0.0
        %2883 = vmatprep.subr.mxu0 0.0
        %2884 = vmatpush1.msra.mxu0 0.0
        %2885 = vmatprep.subr.mxu0 0.0
        %2886 = vmatpush1.msra.mxu0 0.0
        %2887 = vmatprep.subr.mxu0 0.0
        %2888 = vmatpush1.msra.mxu0 0.0
        %2889 = vmatprep.subr.mxu0 0.0
        %2890 = vmatpush1.msra.mxu0 0.0
        %2891 = vmatprep.subr.mxu0 0.0
        %2892 = vmatpush1.msra.mxu0 0.0
        %2893 = vmatprep.subr.mxu0 0.0
        %2894 = vmatpush1.msra.mxu0 0.0
        %2895 = vmatprep.subr.mxu0 0.0
        %2896 = vmatpush1.msra.mxu0 0.0
        %2897 = vmatprep.subr.mxu0 0.0
        %2898 = vmatpush1.msra.mxu0 0.0
        %2899 = vmatprep.subr.mxu0 0.0
        %2900 = vmatpush1.msra.mxu0 0.0
        %2901 = vmatprep.subr.mxu0 0.0
        %2902 = vmatpush1.msra.mxu0 0.0
        %2903 = vmatprep.subr.mxu0 0.0
        %2904 = vmatpush1.msra.mxu0 0.0
        %2905 = vmatprep.subr.mxu0 0.0
        %2906 = vmatpush1.msra.mxu0 0.0
        %2907 = vmatprep.subr.mxu0 0.0
        %2908 = vmatpush1.msra.mxu0 0.0
        %2909 = vmatprep.subr.mxu0 0.0
        %2910 = vmatpush1.msra.mxu0 0.0
        %2911 = vmatprep.subr.mxu0 0.0
        %2912 = vmatpush1.msra.mxu0 0.0
        %2913 = vmatprep.subr.mxu0 0.0
        %2914 = vmatpush1.msra.mxu0 0.0
        %2915 = vmatprep.subr.mxu0 0.0
        %2916 = vmatpush1.msra.mxu0 0.0
        %2917 = vmatprep.subr.mxu0 0.0
        %2918 = vmatpush1.msra.mxu0 0.0
        %2919 = vmatprep.subr.mxu0 0.0
        %2920 = vmatpush1.msra.mxu0 0.0
        %2921 = vmatprep.subr.mxu0 0.0
        %2922 = vmatpush1.msra.mxu0 0.0
        %2923 = vmatprep.subr.mxu0 0.0
        %2924 = vmatpush1.msra.mxu0 0.0
        %2925 = vmatprep.subr.mxu0 0.0
        %2926 = vmatpush1.msra.mxu0 0.0
        %2927 = vmatprep.mubr.f32.mxu0 0.0
        %2928 = vmatmul.mubr.f32.gmra.mrb[0].mxu0 %v2816
        %v2929 = vpop.f32.mrb[0].mxu0
        %v2930 = vadd.f32 0.0, %v2929
        %v2931 = vpop.f32.mrb[0].mxu0
        %2932 = vmatprep.mubr.f32.mxu0 0.0
        %2933 = vmatmul.mubr.f32.gmra.mrb[0].mxu0 %v2819
        %v2934 = vpop.f32.mrb[0].mxu0
        %v2935 = vadd.f32 0.0, %v2934
        %v2936 = vpop.f32.mrb[0].mxu0
        %2937 = vmatprep.mubr.f32.mxu0 0.0
        %2938 = vmatmul.mubr.f32.gmra.mrb[0].mxu0 %v2822
        %v2939 = vpop.f32.mrb[0].mxu0
        %v2940 = vadd.f32 0.0, %v2939
        %v2941 = vpop.f32.mrb[0].mxu0
        %2942 = vmatprep.mubr.f32.mxu0 0.0
        %2943 = vmatmul.mubr.f32.gmra.mrb[0].mxu0 %v2825
        %v2944 = vpop.f32.mrb[0].mxu0
        %v2945 = vadd.f32 0.0, %v2944
        %v2946 = vpop.f32.mrb[0].mxu0
        %2947 = vmatprep.mubr.f32.mxu0 0.0
        %2948 = vmatmul.mubr.f32.gmra.mrb[0].mxu0 %v2828
        %v2949 = vpop.f32.mrb[0].mxu0
        %v2950 = vadd.f32 0.0, %v2949
        %v2951 = vpop.f32.mrb[0].mxu0
        %2952 = vmatprep.mubr.f32.mxu0 0.0
        %2953 = vmatmul.mubr.f32.gmra.mrb[0].mxu0 %v2831
        %v2954 = vpop.f32.mrb[0].mxu0
        %v2955 = vadd.f32 0.0, %v2954
        %v2956 = vpop.f32.mrb[0].mxu0
        %2957 = vmatprep.mubr.f32.mxu0 0.0
        %2958 = vmatmul.mubr.f32.gmra.mrb[0].mxu0 %v2834
        %v2959 = vpop.f32.mrb[0].mxu0
        %v2960 = vadd.f32 0.0, %v2959
        %v2961 = vpop.f32.mrb[0].mxu0
        %2962 = vmatprep.mubr.f32.mxu0 0.0
        %2963 = vmatmul.mubr.f32.gmra.mrb[0].mxu0 %v2837
        %v2964 = vpop.f32.mrb[0].mxu0
        %v2965 = vadd.f32 0.0, %v2964
        %v2966 = vpop.f32.mrb[0].mxu0
        %2967 = vmatprep.mubr.f32.mxu0 0.0
        %2968 = vmatmul.mubr.f32.gmra.mrb[0].mxu0 %v2840
        %v2969 = vpop.f32.mrb[0].mxu0
        %v2970 = vadd.f32 0.0, %v2969
        %v2971 = vpop.f32.mrb[0].mxu0
        %2972 = vmatprep.mubr.f32.mxu0 0.0
        %2973 = vmatmul.mubr.f32.gmra.mrb[0].mxu0 %v2843
        %v2974 = vpop.f32.mrb[0].mxu0
        %v2975 = vadd.f32 0.0, %v2974
        %v2976 = vpop.f32.mrb[0].mxu0
        %2977 = vmatprep.mubr.f32.mxu0 0.0
        %2978 = vmatmul.mubr.f32.gmra.mrb[0].mxu0 %v2846
        %v2979 = vpop.f32.mrb[0].mxu0
        %v2980 = vadd.f32 0.0, %v2979
        %v2981 = vpop.f32.mrb[0].mxu0
        %2982 = vmatprep.mubr.f32.mxu0 0.0
        %2983 = vmatmul.mubr.f32.gmra.mrb[0].mxu0 %v2849
        %v2984 = vpop.f32.mrb[0].mxu0
        %v2985 = vadd.f32 0.0, %v2984
        %v2986 = vpop.f32.mrb[0].mxu0
        %2987 = vmatprep.mubr.f32.mxu0 0.0
        %2988 = vmatmul.mubr.f32.gmra.mrb[0].mxu0 %v2852
        %v2989 = vpop.f32.mrb[0].mxu0
        %v2990 = vadd.f32 0.0, %v2989
        %v2991 = vpop.f32.mrb[0].mxu0
        %2992 = vmatprep.mubr.f32.mxu0 0.0
        %2993 = vmatmul.mubr.f32.gmra.mrb[0].mxu0 %v2855
        %v2994 = vpop.f32.mrb[0].mxu0
        %v2995 = vadd.f32 0.0, %v2994
        %v2996 = vpop.f32.mrb[0].mxu0
        %2997 = vmatprep.mubr.f32.mxu0 0.0
        %2998 = vmatmul.mubr.f32.gmra.mrb[0].mxu0 %v2858
        %v2999 = vpop.f32.mrb[0].mxu0
        %v3000 = vadd.f32 0.0, %v2999
        %v3001 = vpop.f32.mrb[0].mxu0
        %3002 = vmatprep.mubr.f32.mxu0 0.0
        %3003 = vmatmul.mubr.f32.gmra.mrb[0].mxu0 %v2861
        %v3004 = vpop.f32.mrb[0].mxu0
        %v3005 = vadd.f32 0.0, %v3004
        %v3006 = vpop.f32.mrb[0].mxu0
        %3007 = vdwg.mxu0
        %v3008 = vadd.f32 %v2718, %v2930
        %v3009 = vadd.f32 %v2723, %v2935
        %v3010 = vadd.f32 %v2728, %v2940
        %v3011 = vadd.f32 %v2733, %v2945
        %v3012 = vadd.f32 %v2738, %v2950
        %v3013 = vadd.f32 %v2743, %v2955
        %v3014 = vadd.f32 %v2748, %v2960
        %v3015 = vadd.f32 %v2753, %v2965
        %v3016 = vadd.f32 %v2758, %v2970
        %v3017 = vadd.f32 %v2763, %v2975
        %v3018 = vadd.f32 %v2768, %v2980
        %v3019 = vadd.f32 %v2773, %v2985
        %v3020 = vadd.f32 %v2778, %v2990
        %v3021 = vadd.f32 %v2783, %v2995
        %v3022 = vadd.f32 %v2788, %v3000
        %v3023 = vadd.f32 %v2793, %v3005
        %s3024 = sadd.s32 %s2370, 1
        %s3025 = smul.u32 %s3024, 24
        %s3026 = scalar_lea.vmem [#allocation2], %s3025
        %v3027 = vld [vmem:[%s3026] sm:$0xff]
        %v3028 = vld [vmem:[%s3026 + $0x8] sm:$0xff]
        %v3029 = vld [vmem:[%s3026 + $0x18] sm:$0xff]
        %v3030 = vld [vmem:[%s3026 + $0x20] sm:$0xff]
        %v3031 = vld [vmem:[%s3026 + $0x30] sm:$0xff]
        %v3032 = vld [vmem:[%s3026 + $0x38] sm:$0xff]
        %v3033 = vld [vmem:[%s3026 + $0x48] sm:$0xff]
        %v3034 = vld [vmem:[%s3026 + $0x50] sm:$0xff]
        %v3035 = vld [vmem:[%s3026 + $0x60] sm:$0xff]
        %v3036 = vld [vmem:[%s3026 + $0x68] sm:$0xff]
        %v3037 = vld [vmem:[%s3026 + $0x78] sm:$0xff]
        %v3038 = vld [vmem:[%s3026 + $0x80] sm:$0xff]
        %v3039 = vld [vmem:[%s3026 + $0x90] sm:$0xff]
        %v3040 = vld [vmem:[%s3026 + $0x98] sm:$0xff]
        %v3041 = vld [vmem:[%s3026 + $0xa8] sm:$0xff]
        %v3042 = vld [vmem:[%s3026 + $0xb0] sm:$0xff]
        %s3043 = scalar_lea.vmem %s3, 48
        %v3044 = vld [vmem:[%s3043] sm:$0xff]
        %v3045 = vld [vmem:[%s3043 + $0x8] sm:$0xff]
        %v3047 = vsel %vm225, %v3027, 0
        %v3050 = vsel %vm225, %v3028, 0
        %v3053 = vsel %vm225, %v3029, 0
        %v3056 = vsel %vm225, %v3030, 0
        %v3059 = vsel %vm225, %v3031, 0
        %v3062 = vsel %vm225, %v3032, 0
        %v3065 = vsel %vm225, %v3033, 0
        %v3068 = vsel %vm225, %v3034, 0
        %v3071 = vsel %vm225, %v3035, 0
        %v3074 = vsel %vm225, %v3036, 0
        %v3077 = vsel %vm225, %v3037, 0
        %v3080 = vsel %vm225, %v3038, 0
        %v3083 = vsel %vm225, %v3039, 0
        %v3086 = vsel %vm225, %v3040, 0
        %v3089 = vsel %vm225, %v3041, 0
        %v3092 = vsel %vm225, %v3042, 0
        %3094 = vmatprep.subr.mxu0 0.0
        %3095 = vmatpush1.msra.mxu0 %v3044
        %3096 = vmatprep.subr.mxu0 0.0
        %3097 = vmatpush1.msra.mxu0 %v3045
        %3098 = vmatprep.subr.mxu0 0.0
        %3099 = vmatpush1.msra.mxu0 0.0
        %3100 = vmatprep.subr.mxu0 0.0
        %3101 = vmatpush1.msra.mxu0 0.0
        %3102 = vmatprep.subr.mxu0 0.0
        %3103 = vmatpush1.msra.mxu0 0.0
        %3104 = vmatprep.subr.mxu0 0.0
        %3105 = vmatpush1.msra.mxu0 0.0
        %3106 = vmatprep.subr.mxu0 0.0
        %3107 = vmatpush1.msra.mxu0 0.0
        %3108 = vmatprep.subr.mxu0 0.0
        %3109 = vmatpush1.msra.mxu0 0.0
        %3110 = vmatprep.subr.mxu0 0.0
        %3111 = vmatpush1.msra.mxu0 0.0
        %3112 = vmatprep.subr.mxu0 0.0
        %3113 = vmatpush1.msra.mxu0 0.0
        %3114 = vmatprep.subr.mxu0 0.0
        %3115 = vmatpush1.msra.mxu0 0.0
        %3116 = vmatprep.subr.mxu0 0.0
        %3117 = vmatpush1.msra.mxu0 0.0
        %3118 = vmatprep.subr.mxu0 0.0
        %3119 = vmatpush1.msra.mxu0 0.0
        %3120 = vmatprep.subr.mxu0 0.0
        %3121 = vmatpush1.msra.mxu0 0.0
        %3122 = vmatprep.subr.mxu0 0.0
        %3123 = vmatpush1.msra.mxu0 0.0
        %3124 = vmatprep.subr.mxu0 0.0
        %3125 = vmatpush1.msra.mxu0 0.0
        %3126 = vmatprep.subr.mxu0 0.0
        %3127 = vmatpush1.msra.mxu0 0.0
        %3128 = vmatprep.subr.mxu0 0.0
        %3129 = vmatpush1.msra.mxu0 0.0
        %3130 = vmatprep.subr.mxu0 0.0
        %3131 = vmatpush1.msra.mxu0 0.0
        %3132 = vmatprep.subr.mxu0 0.0
        %3133 = vmatpush1.msra.mxu0 0.0
        %3134 = vmatprep.subr.mxu0 0.0
        %3135 = vmatpush1.msra.mxu0 0.0
        %3136 = vmatprep.subr.mxu0 0.0
        %3137 = vmatpush1.msra.mxu0 0.0
        %3138 = vmatprep.subr.mxu0 0.0
        %3139 = vmatpush1.msra.mxu0 0.0
        %3140 = vmatprep.subr.mxu0 0.0
        %3141 = vmatpush1.msra.mxu0 0.0
        %3142 = vmatprep.subr.mxu0 0.0
        %3143 = vmatpush1.msra.mxu0 0.0
        %3144 = vmatprep.subr.mxu0 0.0
        %3145 = vmatpush1.msra.mxu0 0.0
        %3146 = vmatprep.subr.mxu0 0.0
        %3147 = vmatpush1.msra.mxu0 0.0
        %3148 = vmatprep.subr.mxu0 0.0
        %3149 = vmatpush1.msra.mxu0 0.0
        %3150 = vmatprep.subr.mxu0 0.0
        %3151 = vmatpush1.msra.mxu0 0.0
        %3152 = vmatprep.subr.mxu0 0.0
        %3153 = vmatpush1.msra.mxu0 0.0
        %3154 = vmatprep.subr.mxu0 0.0
        %3155 = vmatpush1.msra.mxu0 0.0
        %3156 = vmatprep.subr.mxu0 0.0
        %3157 = vmatpush1.msra.mxu0 0.0
        %3158 = vmatprep.mubr.f32.mxu0 0.0
        %3159 = vmatmul.mubr.f32.gmra.mrb[0].mxu0 %v3047
        %v3160 = vpop.f32.mrb[0].mxu0
        %v3161 = vadd.f32 0.0, %v3160
        %v3162 = vpop.f32.mrb[0].mxu0
        %3163 = vmatprep.mubr.f32.mxu0 0.0
        %3164 = vmatmul.mubr.f32.gmra.mrb[0].mxu0 %v3050
        %v3165 = vpop.f32.mrb[0].mxu0
        %v3166 = vadd.f32 0.0, %v3165
        %v3167 = vpop.f32.mrb[0].mxu0
        %3168 = vmatprep.mubr.f32.mxu0 0.0
        %3169 = vmatmul.mubr.f32.gmra.mrb[0].mxu0 %v3053
        %v3170 = vpop.f32.mrb[0].mxu0
        %v3171 = vadd.f32 0.0, %v3170
        %v3172 = vpop.f32.mrb[0].mxu0
        %3173 = vmatprep.mubr.f32.mxu0 0.0
        %3174 = vmatmul.mubr.f32.gmra.mrb[0].mxu0 %v3056
        %v3175 = vpop.f32.mrb[0].mxu0
        %v3176 = vadd.f32 0.0, %v3175
        %v3177 = vpop.f32.mrb[0].mxu0
        %3178 = vmatprep.mubr.f32.mxu0 0.0
        %3179 = vmatmul.mubr.f32.gmra.mrb[0].mxu0 %v3059
        %v3180 = vpop.f32.mrb[0].mxu0
        %v3181 = vadd.f32 0.0, %v3180
        %v3182 = vpop.f32.mrb[0].mxu0
        %3183 = vmatprep.mubr.f32.mxu0 0.0
        %3184 = vmatmul.mubr.f32.gmra.mrb[0].mxu0 %v3062
        %v3185 = vpop.f32.mrb[0].mxu0
        %v3186 = vadd.f32 0.0, %v3185
        %v3187 = vpop.f32.mrb[0].mxu0
        %3188 = vmatprep.mubr.f32.mxu0 0.0
        %3189 = vmatmul.mubr.f32.gmra.mrb[0].mxu0 %v3065
        %v3190 = vpop.f32.mrb[0].mxu0
        %v3191 = vadd.f32 0.0, %v3190
        %v3192 = vpop.f32.mrb[0].mxu0
        %3193 = vmatprep.mubr.f32.mxu0 0.0
        %3194 = vmatmul.mubr.f32.gmra.mrb[0].mxu0 %v3068
        %v3195 = vpop.f32.mrb[0].mxu0
        %v3196 = vadd.f32 0.0, %v3195
        %v3197 = vpop.f32.mrb[0].mxu0
        %3198 = vmatprep.mubr.f32.mxu0 0.0
        %3199 = vmatmul.mubr.f32.gmra.mrb[0].mxu0 %v3071
        %v3200 = vpop.f32.mrb[0].mxu0
        %v3201 = vadd.f32 0.0, %v3200
        %v3202 = vpop.f32.mrb[0].mxu0
        %3203 = vmatprep.mubr.f32.mxu0 0.0
        %3204 = vmatmul.mubr.f32.gmra.mrb[0].mxu0 %v3074
        %v3205 = vpop.f32.mrb[0].mxu0
        %v3206 = vadd.f32 0.0, %v3205
        %v3207 = vpop.f32.mrb[0].mxu0
        %3208 = vmatprep.mubr.f32.mxu0 0.0
        %3209 = vmatmul.mubr.f32.gmra.mrb[0].mxu0 %v3077
        %v3210 = vpop.f32.mrb[0].mxu0
        %v3211 = vadd.f32 0.0, %v3210
        %v3212 = vpop.f32.mrb[0].mxu0
        %3213 = vmatprep.mubr.f32.mxu0 0.0
        %3214 = vmatmul.mubr.f32.gmra.mrb[0].mxu0 %v3080
        %v3215 = vpop.f32.mrb[0].mxu0
        %v3216 = vadd.f32 0.0, %v3215
        %v3217 = vpop.f32.mrb[0].mxu0
        %3218 = vmatprep.mubr.f32.mxu0 0.0
        %3219 = vmatmul.mubr.f32.gmra.mrb[0].mxu0 %v3083
        %v3220 = vpop.f32.mrb[0].mxu0
        %v3221 = vadd.f32 0.0, %v3220
        %v3222 = vpop.f32.mrb[0].mxu0
        %3223 = vmatprep.mubr.f32.mxu0 0.0
        %3224 = vmatmul.mubr.f32.gmra.mrb[0].mxu0 %v3086
        %v3225 = vpop.f32.mrb[0].mxu0
        %v3226 = vadd.f32 0.0, %v3225
        %v3227 = vpop.f32.mrb[0].mxu0
        %3228 = vmatprep.mubr.f32.mxu0 0.0
        %3229 = vmatmul.mubr.f32.gmra.mrb[0].mxu0 %v3089
        %v3230 = vpop.f32.mrb[0].mxu0
        %v3231 = vadd.f32 0.0, %v3230
        %v3232 = vpop.f32.mrb[0].mxu0
        %3233 = vmatprep.mubr.f32.mxu0 0.0
        %3234 = vmatmul.mubr.f32.gmra.mrb[0].mxu0 %v3092
        %v3235 = vpop.f32.mrb[0].mxu0
        %v3236 = vadd.f32 0.0, %v3235
        %v3237 = vpop.f32.mrb[0].mxu0
        %3238 = vdwg.mxu0
        %v3239 = vadd.f32 %v3008, %v3161
        %v3240 = vadd.f32 %v3009, %v3166
        %v3241 = vadd.f32 %v3010, %v3171
        %v3242 = vadd.f32 %v3011, %v3176
        %v3243 = vadd.f32 %v3012, %v3181
        %v3244 = vadd.f32 %v3013, %v3186
        %v3245 = vadd.f32 %v3014, %v3191
        %v3246 = vadd.f32 %v3015, %v3196
        %v3247 = vadd.f32 %v3016, %v3201
        %v3248 = vadd.f32 %v3017, %v3206
        %v3249 = vadd.f32 %v3018, %v3211
        %v3250 = vadd.f32 %v3019, %v3216
        %v3251 = vadd.f32 %v3020, %v3221
        %v3252 = vadd.f32 %v3021, %v3226
        %v3253 = vadd.f32 %v3022, %v3231
        %v3254 = vadd.f32 %v3023, %v3236
        %v3255 = vld [vmem:[%s3026 + $0x1] sm:$0xff]
        %v3256 = vld [vmem:[%s3026 + $0x9] sm:$0xff]
        %v3257 = vld [vmem:[%s3026 + $0x19] sm:$0xff]
        %v3258 = vld [vmem:[%s3026 + $0x21] sm:$0xff]
        %v3259 = vld [vmem:[%s3026 + $0x31] sm:$0xff]
        %v3260 = vld [vmem:[%s3026 + $0x39] sm:$0xff]
        %v3261 = vld [vmem:[%s3026 + $0x49] sm:$0xff]
        %v3262 = vld [vmem:[%s3026 + $0x51] sm:$0xff]
        %v3263 = vld [vmem:[%s3026 + $0x61] sm:$0xff]
        %v3264 = vld [vmem:[%s3026 + $0x69] sm:$0xff]
        %v3265 = vld [vmem:[%s3026 + $0x79] sm:$0xff]
        %v3266 = vld [vmem:[%s3026 + $0x81] sm:$0xff]
        %v3267 = vld [vmem:[%s3026 + $0x91] sm:$0xff]
        %v3268 = vld [vmem:[%s3026 + $0x99] sm:$0xff]
        %v3269 = vld [vmem:[%s3026 + $0xa9] sm:$0xff]
        %v3270 = vld [vmem:[%s3026 + $0xb1] sm:$0xff]
        %s3271 = scalar_lea.vmem %s3, 64
        %v3272 = vld [vmem:[%s3271] sm:$0xff]
        %v3273 = vld [vmem:[%s3271 + $0x8] sm:$0xff]
        %v3275 = vsel %vm225, %v3255, 0
        %v3278 = vsel %vm225, %v3256, 0
        %v3281 = vsel %vm225, %v3257, 0
        %v3284 = vsel %vm225, %v3258, 0
        %v3287 = vsel %vm225, %v3259, 0
        %v3290 = vsel %vm225, %v3260, 0
        %v3293 = vsel %vm225, %v3261, 0
        %v3296 = vsel %vm225, %v3262, 0
        %v3299 = vsel %vm225, %v3263, 0
        %v3302 = vsel %vm225, %v3264, 0
        %v3305 = vsel %vm225, %v3265, 0
        %v3308 = vsel %vm225, %v3266, 0
        %v3311 = vsel %vm225, %v3267, 0
        %v3314 = vsel %vm225, %v3268, 0
        %v3317 = vsel %vm225, %v3269, 0
        %v3320 = vsel %vm225, %v3270, 0
        %3322 = vmatprep.subr.mxu0 0.0
        %3323 = vmatpush1.msra.mxu0 %v3272
        %3324 = vmatprep.subr.mxu0 0.0
        %3325 = vmatpush1.msra.mxu0 %v3273
        %3326 = vmatprep.subr.mxu0 0.0
        %3327 = vmatpush1.msra.mxu0 0.0
        %3328 = vmatprep.subr.mxu0 0.0
        %3329 = vmatpush1.msra.mxu0 0.0
        %3330 = vmatprep.subr.mxu0 0.0
        %3331 = vmatpush1.msra.mxu0 0.0
        %3332 = vmatprep.subr.mxu0 0.0
        %3333 = vmatpush1.msra.mxu0 0.0
        %3334 = vmatprep.subr.mxu0 0.0
        %3335 = vmatpush1.msra.mxu0 0.0
        %3336 = vmatprep.subr.mxu0 0.0
        %3337 = vmatpush1.msra.mxu0 0.0
        %3338 = vmatprep.subr.mxu0 0.0
        %3339 = vmatpush1.msra.mxu0 0.0
        %3340 = vmatprep.subr.mxu0 0.0
        %3341 = vmatpush1.msra.mxu0 0.0
        %3342 = vmatprep.subr.mxu0 0.0
        %3343 = vmatpush1.msra.mxu0 0.0
        %3344 = vmatprep.subr.mxu0 0.0
        %3345 = vmatpush1.msra.mxu0 0.0
        %3346 = vmatprep.subr.mxu0 0.0
        %3347 = vmatpush1.msra.mxu0 0.0
        %3348 = vmatprep.subr.mxu0 0.0
        %3349 = vmatpush1.msra.mxu0 0.0
        %3350 = vmatprep.subr.mxu0 0.0
        %3351 = vmatpush1.msra.mxu0 0.0
        %3352 = vmatprep.subr.mxu0 0.0
        %3353 = vmatpush1.msra.mxu0 0.0
        %3354 = vmatprep.subr.mxu0 0.0
        %3355 = vmatpush1.msra.mxu0 0.0
        %3356 = vmatprep.subr.mxu0 0.0
        %3357 = vmatpush1.msra.mxu0 0.0
        %3358 = vmatprep.subr.mxu0 0.0
        %3359 = vmatpush1.msra.mxu0 0.0
        %3360 = vmatprep.subr.mxu0 0.0
        %3361 = vmatpush1.msra.mxu0 0.0
        %3362 = vmatprep.subr.mxu0 0.0
        %3363 = vmatpush1.msra.mxu0 0.0
        %3364 = vmatprep.subr.mxu0 0.0
        %3365 = vmatpush1.msra.mxu0 0.0
        %3366 = vmatprep.subr.mxu0 0.0
        %3367 = vmatpush1.msra.mxu0 0.0
        %3368 = vmatprep.subr.mxu0 0.0
        %3369 = vmatpush1.msra.mxu0 0.0
        %3370 = vmatprep.subr.mxu0 0.0
        %3371 = vmatpush1.msra.mxu0 0.0
        %3372 = vmatprep.subr.mxu0 0.0
        %3373 = vmatpush1.msra.mxu0 0.0
        %3374 = vmatprep.subr.mxu0 0.0
        %3375 = vmatpush1.msra.mxu0 0.0
        %3376 = vmatprep.subr.mxu0 0.0
        %3377 = vmatpush1.msra.mxu0 0.0
        %3378 = vmatprep.subr.mxu0 0.0
        %3379 = vmatpush1.msra.mxu0 0.0
        %3380 = vmatprep.subr.mxu0 0.0
        %3381 = vmatpush1.msra.mxu0 0.0
        %3382 = vmatprep.subr.mxu0 0.0
        %3383 = vmatpush1.msra.mxu0 0.0
        %3384 = vmatprep.subr.mxu0 0.0
        %3385 = vmatpush1.msra.mxu0 0.0
        %3386 = vmatprep.mubr.f32.mxu0 0.0
        %3387 = vmatmul.mubr.f32.gmra.mrb[0].mxu0 %v3275
        %v3388 = vpop.f32.mrb[0].mxu0
        %v3389 = vadd.f32 0.0, %v3388
        %v3390 = vpop.f32.mrb[0].mxu0
        %3391 = vmatprep.mubr.f32.mxu0 0.0
        %3392 = vmatmul.mubr.f32.gmra.mrb[0].mxu0 %v3278
        %v3393 = vpop.f32.mrb[0].mxu0
        %v3394 = vadd.f32 0.0, %v3393
        %v3395 = vpop.f32.mrb[0].mxu0
        %3396 = vmatprep.mubr.f32.mxu0 0.0
        %3397 = vmatmul.mubr.f32.gmra.mrb[0].mxu0 %v3281
        %v3398 = vpop.f32.mrb[0].mxu0
        %v3399 = vadd.f32 0.0, %v3398
        %v3400 = vpop.f32.mrb[0].mxu0
        %3401 = vmatprep.mubr.f32.mxu0 0.0
        %3402 = vmatmul.mubr.f32.gmra.mrb[0].mxu0 %v3284
        %v3403 = vpop.f32.mrb[0].mxu0
        %v3404 = vadd.f32 0.0, %v3403
        %v3405 = vpop.f32.mrb[0].mxu0
        %3406 = vmatprep.mubr.f32.mxu0 0.0
        %3407 = vmatmul.mubr.f32.gmra.mrb[0].mxu0 %v3287
        %v3408 = vpop.f32.mrb[0].mxu0
        %v3409 = vadd.f32 0.0, %v3408
        %v3410 = vpop.f32.mrb[0].mxu0
        %3411 = vmatprep.mubr.f32.mxu0 0.0
        %3412 = vmatmul.mubr.f32.gmra.mrb[0].mxu0 %v3290
        %v3413 = vpop.f32.mrb[0].mxu0
        %v3414 = vadd.f32 0.0, %v3413
        %v3415 = vpop.f32.mrb[0].mxu0
        %3416 = vmatprep.mubr.f32.mxu0 0.0
        %3417 = vmatmul.mubr.f32.gmra.mrb[0].mxu0 %v3293
        %v3418 = vpop.f32.mrb[0].mxu0
        %v3419 = vadd.f32 0.0, %v3418
        %v3420 = vpop.f32.mrb[0].mxu0
        %3421 = vmatprep.mubr.f32.mxu0 0.0
        %3422 = vmatmul.mubr.f32.gmra.mrb[0].mxu0 %v3296
        %v3423 = vpop.f32.mrb[0].mxu0
        %v3424 = vadd.f32 0.0, %v3423
        %v3425 = vpop.f32.mrb[0].mxu0
        %3426 = vmatprep.mubr.f32.mxu0 0.0
        %3427 = vmatmul.mubr.f32.gmra.mrb[0].mxu0 %v3299
        %v3428 = vpop.f32.mrb[0].mxu0
        %v3429 = vadd.f32 0.0, %v3428
        %v3430 = vpop.f32.mrb[0].mxu0
        %3431 = vmatprep.mubr.f32.mxu0 0.0
        %3432 = vmatmul.mubr.f32.gmra.mrb[0].mxu0 %v3302
        %v3433 = vpop.f32.mrb[0].mxu0
        %v3434 = vadd.f32 0.0, %v3433
        %v3435 = vpop.f32.mrb[0].mxu0
        %3436 = vmatprep.mubr.f32.mxu0 0.0
        %3437 = vmatmul.mubr.f32.gmra.mrb[0].mxu0 %v3305
        %v3438 = vpop.f32.mrb[0].mxu0
        %v3439 = vadd.f32 0.0, %v3438
        %v3440 = vpop.f32.mrb[0].mxu0
        %3441 = vmatprep.mubr.f32.mxu0 0.0
        %3442 = vmatmul.mubr.f32.gmra.mrb[0].mxu0 %v3308
        %v3443 = vpop.f32.mrb[0].mxu0
        %v3444 = vadd.f32 0.0, %v3443
        %v3445 = vpop.f32.mrb[0].mxu0
        %3446 = vmatprep.mubr.f32.mxu0 0.0
        %3447 = vmatmul.mubr.f32.gmra.mrb[0].mxu0 %v3311
        %v3448 = vpop.f32.mrb[0].mxu0
        %v3449 = vadd.f32 0.0, %v3448
        %v3450 = vpop.f32.mrb[0].mxu0
        %3451 = vmatprep.mubr.f32.mxu0 0.0
        %3452 = vmatmul.mubr.f32.gmra.mrb[0].mxu0 %v3314
        %v3453 = vpop.f32.mrb[0].mxu0
        %v3454 = vadd.f32 0.0, %v3453
        %v3455 = vpop.f32.mrb[0].mxu0
        %3456 = vmatprep.mubr.f32.mxu0 0.0
        %3457 = vmatmul.mubr.f32.gmra.mrb[0].mxu0 %v3317
        %v3458 = vpop.f32.mrb[0].mxu0
        %v3459 = vadd.f32 0.0, %v3458
        %v3460 = vpop.f32.mrb[0].mxu0
        %3461 = vmatprep.mubr.f32.mxu0 0.0
        %3462 = vmatmul.mubr.f32.gmra.mrb[0].mxu0 %v3320
        %v3463 = vpop.f32.mrb[0].mxu0
        %v3464 = vadd.f32 0.0, %v3463
        %v3465 = vpop.f32.mrb[0].mxu0
        %3466 = vdwg.mxu0
        %v3467 = vadd.f32 %v3239, %v3389
        %v3468 = vadd.f32 %v3240, %v3394
        %v3469 = vadd.f32 %v3241, %v3399
        %v3470 = vadd.f32 %v3242, %v3404
        %v3471 = vadd.f32 %v3243, %v3409
        %v3472 = vadd.f32 %v3244, %v3414
        %v3473 = vadd.f32 %v3245, %v3419
        %v3474 = vadd.f32 %v3246, %v3424
        %v3475 = vadd.f32 %v3247, %v3429
        %v3476 = vadd.f32 %v3248, %v3434
        %v3477 = vadd.f32 %v3249, %v3439
        %v3478 = vadd.f32 %v3250, %v3444
        %v3479 = vadd.f32 %v3251, %v3449
        %v3480 = vadd.f32 %v3252, %v3454
        %v3481 = vadd.f32 %v3253, %v3459
        %v3482 = vadd.f32 %v3254, %v3464
        %v3483 = vld [vmem:[%s3026 + $0x2] sm:$0xff]
        %v3484 = vld [vmem:[%s3026 + $0xa] sm:$0xff]
        %v3485 = vld [vmem:[%s3026 + $0x1a] sm:$0xff]
        %v3486 = vld [vmem:[%s3026 + $0x22] sm:$0xff]
        %v3487 = vld [vmem:[%s3026 + $0x32] sm:$0xff]
        %v3488 = vld [vmem:[%s3026 + $0x3a] sm:$0xff]
        %v3489 = vld [vmem:[%s3026 + $0x4a] sm:$0xff]
        %v3490 = vld [vmem:[%s3026 + $0x52] sm:$0xff]
        %v3491 = vld [vmem:[%s3026 + $0x62] sm:$0xff]
        %v3492 = vld [vmem:[%s3026 + $0x6a] sm:$0xff]
        %v3493 = vld [vmem:[%s3026 + $0x7a] sm:$0xff]
        %v3494 = vld [vmem:[%s3026 + $0x82] sm:$0xff]
        %v3495 = vld [vmem:[%s3026 + $0x92] sm:$0xff]
        %v3496 = vld [vmem:[%s3026 + $0x9a] sm:$0xff]
        %v3497 = vld [vmem:[%s3026 + $0xaa] sm:$0xff]
        %v3498 = vld [vmem:[%s3026 + $0xb2] sm:$0xff]
        %s3499 = scalar_lea.vmem %s3, 80
        %v3500 = vld [vmem:[%s3499] sm:$0xff]
        %v3501 = vld [vmem:[%s3499 + $0x8] sm:$0xff]
        %v3503 = vsel %vm225, %v3483, 0
        %v3506 = vsel %vm225, %v3484, 0
        %v3509 = vsel %vm225, %v3485, 0
        %v3512 = vsel %vm225, %v3486, 0
        %v3515 = vsel %vm225, %v3487, 0
        %v3518 = vsel %vm225, %v3488, 0
        %v3521 = vsel %vm225, %v3489, 0
        %v3524 = vsel %vm225, %v3490, 0
        %v3527 = vsel %vm225, %v3491, 0
        %v3530 = vsel %vm225, %v3492, 0
        %v3533 = vsel %vm225, %v3493, 0
        %v3536 = vsel %vm225, %v3494, 0
        %v3539 = vsel %vm225, %v3495, 0
        %v3542 = vsel %vm225, %v3496, 0
        %v3545 = vsel %vm225, %v3497, 0
        %v3548 = vsel %vm225, %v3498, 0
        %3550 = vmatprep.subr.mxu0 0.0
        %3551 = vmatpush1.msra.mxu0 %v3500
        %3552 = vmatprep.subr.mxu0 0.0
        %3553 = vmatpush1.msra.mxu0 %v3501
        %3554 = vmatprep.subr.mxu0 0.0
        %3555 = vmatpush1.msra.mxu0 0.0
        %3556 = vmatprep.subr.mxu0 0.0
        %3557 = vmatpush1.msra.mxu0 0.0
        %3558 = vmatprep.subr.mxu0 0.0
        %3559 = vmatpush1.msra.mxu0 0.0
        %3560 = vmatprep.subr.mxu0 0.0
        %3561 = vmatpush1.msra.mxu0 0.0
        %3562 = vmatprep.subr.mxu0 0.0
        %3563 = vmatpush1.msra.mxu0 0.0
        %3564 = vmatprep.subr.mxu0 0.0
        %3565 = vmatpush1.msra.mxu0 0.0
        %3566 = vmatprep.subr.mxu0 0.0
        %3567 = vmatpush1.msra.mxu0 0.0
        %3568 = vmatprep.subr.mxu0 0.0
        %3569 = vmatpush1.msra.mxu0 0.0
        %3570 = vmatprep.subr.mxu0 0.0
        %3571 = vmatpush1.msra.mxu0 0.0
        %3572 = vmatprep.subr.mxu0 0.0
        %3573 = vmatpush1.msra.mxu0 0.0
        %3574 = vmatprep.subr.mxu0 0.0
        %3575 = vmatpush1.msra.mxu0 0.0
        %3576 = vmatprep.subr.mxu0 0.0
        %3577 = vmatpush1.msra.mxu0 0.0
        %3578 = vmatprep.subr.mxu0 0.0
        %3579 = vmatpush1.msra.mxu0 0.0
        %3580 = vmatprep.subr.mxu0 0.0
        %3581 = vmatpush1.msra.mxu0 0.0
        %3582 = vmatprep.subr.mxu0 0.0
        %3583 = vmatpush1.msra.mxu0 0.0
        %3584 = vmatprep.subr.mxu0 0.0
        %3585 = vmatpush1.msra.mxu0 0.0
        %3586 = vmatprep.subr.mxu0 0.0
        %3587 = vmatpush1.msra.mxu0 0.0
        %3588 = vmatprep.subr.mxu0 0.0
        %3589 = vmatpush1.msra.mxu0 0.0
        %3590 = vmatprep.subr.mxu0 0.0
        %3591 = vmatpush1.msra.mxu0 0.0
        %3592 = vmatprep.subr.mxu0 0.0
        %3593 = vmatpush1.msra.mxu0 0.0
        %3594 = vmatprep.subr.mxu0 0.0
        %3595 = vmatpush1.msra.mxu0 0.0
        %3596 = vmatprep.subr.mxu0 0.0
        %3597 = vmatpush1.msra.mxu0 0.0
        %3598 = vmatprep.subr.mxu0 0.0
        %3599 = vmatpush1.msra.mxu0 0.0
        %3600 = vmatprep.subr.mxu0 0.0
        %3601 = vmatpush1.msra.mxu0 0.0
        %3602 = vmatprep.subr.mxu0 0.0
        %3603 = vmatpush1.msra.mxu0 0.0
        %3604 = vmatprep.subr.mxu0 0.0
        %3605 = vmatpush1.msra.mxu0 0.0
        %3606 = vmatprep.subr.mxu0 0.0
        %3607 = vmatpush1.msra.mxu0 0.0
        %3608 = vmatprep.subr.mxu0 0.0
        %3609 = vmatpush1.msra.mxu0 0.0
        %3610 = vmatprep.subr.mxu0 0.0
        %3611 = vmatpush1.msra.mxu0 0.0
        %3612 = vmatprep.subr.mxu0 0.0
        %3613 = vmatpush1.msra.mxu0 0.0
        %3614 = vmatprep.mubr.f32.mxu0 0.0
        %3615 = vmatmul.mubr.f32.gmra.mrb[0].mxu0 %v3503
        %v3616 = vpop.f32.mrb[0].mxu0
        %v3617 = vadd.f32 0.0, %v3616
        %v3618 = vpop.f32.mrb[0].mxu0
        %3619 = vmatprep.mubr.f32.mxu0 0.0
        %3620 = vmatmul.mubr.f32.gmra.mrb[0].mxu0 %v3506
        %v3621 = vpop.f32.mrb[0].mxu0
        %v3622 = vadd.f32 0.0, %v3621
        %v3623 = vpop.f32.mrb[0].mxu0
        %3624 = vmatprep.mubr.f32.mxu0 0.0
        %3625 = vmatmul.mubr.f32.gmra.mrb[0].mxu0 %v3509
        %v3626 = vpop.f32.mrb[0].mxu0
        %v3627 = vadd.f32 0.0, %v3626
        %v3628 = vpop.f32.mrb[0].mxu0
        %3629 = vmatprep.mubr.f32.mxu0 0.0
        %3630 = vmatmul.mubr.f32.gmra.mrb[0].mxu0 %v3512
        %v3631 = vpop.f32.mrb[0].mxu0
        %v3632 = vadd.f32 0.0, %v3631
        %v3633 = vpop.f32.mrb[0].mxu0
        %3634 = vmatprep.mubr.f32.mxu0 0.0
        %3635 = vmatmul.mubr.f32.gmra.mrb[0].mxu0 %v3515
        %v3636 = vpop.f32.mrb[0].mxu0
        %v3637 = vadd.f32 0.0, %v3636
        %v3638 = vpop.f32.mrb[0].mxu0
        %3639 = vmatprep.mubr.f32.mxu0 0.0
        %3640 = vmatmul.mubr.f32.gmra.mrb[0].mxu0 %v3518
        %v3641 = vpop.f32.mrb[0].mxu0
        %v3642 = vadd.f32 0.0, %v3641
        %v3643 = vpop.f32.mrb[0].mxu0
        %3644 = vmatprep.mubr.f32.mxu0 0.0
        %3645 = vmatmul.mubr.f32.gmra.mrb[0].mxu0 %v3521
        %v3646 = vpop.f32.mrb[0].mxu0
        %v3647 = vadd.f32 0.0, %v3646
        %v3648 = vpop.f32.mrb[0].mxu0
        %3649 = vmatprep.mubr.f32.mxu0 0.0
        %3650 = vmatmul.mubr.f32.gmra.mrb[0].mxu0 %v3524
        %v3651 = vpop.f32.mrb[0].mxu0
        %v3652 = vadd.f32 0.0, %v3651
        %v3653 = vpop.f32.mrb[0].mxu0
        %3654 = vmatprep.mubr.f32.mxu0 0.0
        %3655 = vmatmul.mubr.f32.gmra.mrb[0].mxu0 %v3527
        %v3656 = vpop.f32.mrb[0].mxu0
        %v3657 = vadd.f32 0.0, %v3656
        %v3658 = vpop.f32.mrb[0].mxu0
        %3659 = vmatprep.mubr.f32.mxu0 0.0
        %3660 = vmatmul.mubr.f32.gmra.mrb[0].mxu0 %v3530
        %v3661 = vpop.f32.mrb[0].mxu0
        %v3662 = vadd.f32 0.0, %v3661
        %v3663 = vpop.f32.mrb[0].mxu0
        %3664 = vmatprep.mubr.f32.mxu0 0.0
        %3665 = vmatmul.mubr.f32.gmra.mrb[0].mxu0 %v3533
        %v3666 = vpop.f32.mrb[0].mxu0
        %v3667 = vadd.f32 0.0, %v3666
        %v3668 = vpop.f32.mrb[0].mxu0
        %3669 = vmatprep.mubr.f32.mxu0 0.0
        %3670 = vmatmul.mubr.f32.gmra.mrb[0].mxu0 %v3536
        %v3671 = vpop.f32.mrb[0].mxu0
        %v3672 = vadd.f32 0.0, %v3671
        %v3673 = vpop.f32.mrb[0].mxu0
        %3674 = vmatprep.mubr.f32.mxu0 0.0
        %3675 = vmatmul.mubr.f32.gmra.mrb[0].mxu0 %v3539
        %v3676 = vpop.f32.mrb[0].mxu0
        %v3677 = vadd.f32 0.0, %v3676
        %v3678 = vpop.f32.mrb[0].mxu0
        %3679 = vmatprep.mubr.f32.mxu0 0.0
        %3680 = vmatmul.mubr.f32.gmra.mrb[0].mxu0 %v3542
        %v3681 = vpop.f32.mrb[0].mxu0
        %v3682 = vadd.f32 0.0, %v3681
        %v3683 = vpop.f32.mrb[0].mxu0
        %3684 = vmatprep.mubr.f32.mxu0 0.0
        %3685 = vmatmul.mubr.f32.gmra.mrb[0].mxu0 %v3545
        %v3686 = vpop.f32.mrb[0].mxu0
        %v3687 = vadd.f32 0.0, %v3686
        %v3688 = vpop.f32.mrb[0].mxu0
        %3689 = vmatprep.mubr.f32.mxu0 0.0
        %3690 = vmatmul.mubr.f32.gmra.mrb[0].mxu0 %v3548
        %v3691 = vpop.f32.mrb[0].mxu0
        %v3692 = vadd.f32 0.0, %v3691
        %v3693 = vpop.f32.mrb[0].mxu0
        %3694 = vdwg.mxu0
        %v3695 = vadd.f32 %v3467, %v3617
        %v3696 = vadd.f32 %v3468, %v3622
        %v3697 = vadd.f32 %v3469, %v3627
        %v3698 = vadd.f32 %v3470, %v3632
        %v3699 = vadd.f32 %v3471, %v3637
        %v3700 = vadd.f32 %v3472, %v3642
        %v3701 = vadd.f32 %v3473, %v3647
        %v3702 = vadd.f32 %v3474, %v3652
        %v3703 = vadd.f32 %v3475, %v3657
        %v3704 = vadd.f32 %v3476, %v3662
        %v3705 = vadd.f32 %v3477, %v3667
        %v3706 = vadd.f32 %v3478, %v3672
        %v3707 = vadd.f32 %v3479, %v3677
        %v3708 = vadd.f32 %v3480, %v3682
        %v3709 = vadd.f32 %v3481, %v3687
        %v3710 = vadd.f32 %v3482, %v3692
        %s3711 = sadd.s32 %s2370, 2
        %s3712 = smul.u32 %s3711, 24
        %s3713 = scalar_lea.vmem [#allocation2], %s3712
        %v3714 = vld [vmem:[%s3713] sm:$0xff]
        %v3715 = vld [vmem:[%s3713 + $0x8] sm:$0xff]
        %v3716 = vld [vmem:[%s3713 + $0x18] sm:$0xff]
        %v3717 = vld [vmem:[%s3713 + $0x20] sm:$0xff]
        %v3718 = vld [vmem:[%s3713 + $0x30] sm:$0xff]
        %v3719 = vld [vmem:[%s3713 + $0x38] sm:$0xff]
        %v3720 = vld [vmem:[%s3713 + $0x48] sm:$0xff]
        %v3721 = vld [vmem:[%s3713 + $0x50] sm:$0xff]
        %v3722 = vld [vmem:[%s3713 + $0x60] sm:$0xff]
        %v3723 = vld [vmem:[%s3713 + $0x68] sm:$0xff]
        %v3724 = vld [vmem:[%s3713 + $0x78] sm:$0xff]
        %v3725 = vld [vmem:[%s3713 + $0x80] sm:$0xff]
        %v3726 = vld [vmem:[%s3713 + $0x90] sm:$0xff]
        %v3727 = vld [vmem:[%s3713 + $0x98] sm:$0xff]
        %v3728 = vld [vmem:[%s3713 + $0xa8] sm:$0xff]
        %v3729 = vld [vmem:[%s3713 + $0xb0] sm:$0xff]
        %s3730 = scalar_lea.vmem %s3, 96
        %v3731 = vld [vmem:[%s3730] sm:$0xff]
        %v3732 = vld [vmem:[%s3730 + $0x8] sm:$0xff]
        %v3734 = vsel %vm225, %v3714, 0
        %v3737 = vsel %vm225, %v3715, 0
        %v3740 = vsel %vm225, %v3716, 0
        %v3743 = vsel %vm225, %v3717, 0
        %v3746 = vsel %vm225, %v3718, 0
        %v3749 = vsel %vm225, %v3719, 0
        %v3752 = vsel %vm225, %v3720, 0
        %v3755 = vsel %vm225, %v3721, 0
        %v3758 = vsel %vm225, %v3722, 0
        %v3761 = vsel %vm225, %v3723, 0
        %v3764 = vsel %vm225, %v3724, 0
        %v3767 = vsel %vm225, %v3725, 0
        %v3770 = vsel %vm225, %v3726, 0
        %v3773 = vsel %vm225, %v3727, 0
        %v3776 = vsel %vm225, %v3728, 0
        %v3779 = vsel %vm225, %v3729, 0
        %3781 = vmatprep.subr.mxu0 0.0
        %3782 = vmatpush1.msra.mxu0 %v3731
        %3783 = vmatprep.subr.mxu0 0.0
        %3784 = vmatpush1.msra.mxu0 %v3732
        %3785 = vmatprep.subr.mxu0 0.0
        %3786 = vmatpush1.msra.mxu0 0.0
        %3787 = vmatprep.subr.mxu0 0.0
        %3788 = vmatpush1.msra.mxu0 0.0
        %3789 = vmatprep.subr.mxu0 0.0
        %3790 = vmatpush1.msra.mxu0 0.0
        %3791 = vmatprep.subr.mxu0 0.0
        %3792 = vmatpush1.msra.mxu0 0.0
        %3793 = vmatprep.subr.mxu0 0.0
        %3794 = vmatpush1.msra.mxu0 0.0
        %3795 = vmatprep.subr.mxu0 0.0
        %3796 = vmatpush1.msra.mxu0 0.0
        %3797 = vmatprep.subr.mxu0 0.0
        %3798 = vmatpush1.msra.mxu0 0.0
        %3799 = vmatprep.subr.mxu0 0.0
        %3800 = vmatpush1.msra.mxu0 0.0
        %3801 = vmatprep.subr.mxu0 0.0
        %3802 = vmatpush1.msra.mxu0 0.0
        %3803 = vmatprep.subr.mxu0 0.0
        %3804 = vmatpush1.msra.mxu0 0.0
        %3805 = vmatprep.subr.mxu0 0.0
        %3806 = vmatpush1.msra.mxu0 0.0
        %3807 = vmatprep.subr.mxu0 0.0
        %3808 = vmatpush1.msra.mxu0 0.0
        %3809 = vmatprep.subr.mxu0 0.0
        %3810 = vmatpush1.msra.mxu0 0.0
        %3811 = vmatprep.subr.mxu0 0.0
        %3812 = vmatpush1.msra.mxu0 0.0
        %3813 = vmatprep.subr.mxu0 0.0
        %3814 = vmatpush1.msra.mxu0 0.0
        %3815 = vmatprep.subr.mxu0 0.0
        %3816 = vmatpush1.msra.mxu0 0.0
        %3817 = vmatprep.subr.mxu0 0.0
        %3818 = vmatpush1.msra.mxu0 0.0
        %3819 = vmatprep.subr.mxu0 0.0
        %3820 = vmatpush1.msra.mxu0 0.0
        %3821 = vmatprep.subr.mxu0 0.0
        %3822 = vmatpush1.msra.mxu0 0.0
        %3823 = vmatprep.subr.mxu0 0.0
        %3824 = vmatpush1.msra.mxu0 0.0
        %3825 = vmatprep.subr.mxu0 0.0
        %3826 = vmatpush1.msra.mxu0 0.0
        %3827 = vmatprep.subr.mxu0 0.0
        %3828 = vmatpush1.msra.mxu0 0.0
        %3829 = vmatprep.subr.mxu0 0.0
        %3830 = vmatpush1.msra.mxu0 0.0
        %3831 = vmatprep.subr.mxu0 0.0
        %3832 = vmatpush1.msra.mxu0 0.0
        %3833 = vmatprep.subr.mxu0 0.0
        %3834 = vmatpush1.msra.mxu0 0.0
        %3835 = vmatprep.subr.mxu0 0.0
        %3836 = vmatpush1.msra.mxu0 0.0
        %3837 = vmatprep.subr.mxu0 0.0
        %3838 = vmatpush1.msra.mxu0 0.0
        %3839 = vmatprep.subr.mxu0 0.0
        %3840 = vmatpush1.msra.mxu0 0.0
        %3841 = vmatprep.subr.mxu0 0.0
        %3842 = vmatpush1.msra.mxu0 0.0
        %3843 = vmatprep.subr.mxu0 0.0
        %3844 = vmatpush1.msra.mxu0 0.0
        %3845 = vmatprep.mubr.f32.mxu0 0.0
        %3846 = vmatmul.mubr.f32.gmra.mrb[0].mxu0 %v3734
        %v3847 = vpop.f32.mrb[0].mxu0
        %v3848 = vadd.f32 0.0, %v3847
        %v3849 = vpop.f32.mrb[0].mxu0
        %3850 = vmatprep.mubr.f32.mxu0 0.0
        %3851 = vmatmul.mubr.f32.gmra.mrb[0].mxu0 %v3737
        %v3852 = vpop.f32.mrb[0].mxu0
        %v3853 = vadd.f32 0.0, %v3852
        %v3854 = vpop.f32.mrb[0].mxu0
        %3855 = vmatprep.mubr.f32.mxu0 0.0
        %3856 = vmatmul.mubr.f32.gmra.mrb[0].mxu0 %v3740
        %v3857 = vpop.f32.mrb[0].mxu0
        %v3858 = vadd.f32 0.0, %v3857
        %v3859 = vpop.f32.mrb[0].mxu0
        %3860 = vmatprep.mubr.f32.mxu0 0.0
        %3861 = vmatmul.mubr.f32.gmra.mrb[0].mxu0 %v3743
        %v3862 = vpop.f32.mrb[0].mxu0
        %v3863 = vadd.f32 0.0, %v3862
        %v3864 = vpop.f32.mrb[0].mxu0
        %3865 = vmatprep.mubr.f32.mxu0 0.0
        %3866 = vmatmul.mubr.f32.gmra.mrb[0].mxu0 %v3746
        %v3867 = vpop.f32.mrb[0].mxu0
        %v3868 = vadd.f32 0.0, %v3867
        %v3869 = vpop.f32.mrb[0].mxu0
        %3870 = vmatprep.mubr.f32.mxu0 0.0
        %3871 = vmatmul.mubr.f32.gmra.mrb[0].mxu0 %v3749
        %v3872 = vpop.f32.mrb[0].mxu0
        %v3873 = vadd.f32 0.0, %v3872
        %v3874 = vpop.f32.mrb[0].mxu0
        %3875 = vmatprep.mubr.f32.mxu0 0.0
        %3876 = vmatmul.mubr.f32.gmra.mrb[0].mxu0 %v3752
        %v3877 = vpop.f32.mrb[0].mxu0
        %v3878 = vadd.f32 0.0, %v3877
        %v3879 = vpop.f32.mrb[0].mxu0
        %3880 = vmatprep.mubr.f32.mxu0 0.0
        %3881 = vmatmul.mubr.f32.gmra.mrb[0].mxu0 %v3755
        %v3882 = vpop.f32.mrb[0].mxu0
        %v3883 = vadd.f32 0.0, %v3882
        %v3884 = vpop.f32.mrb[0].mxu0
        %3885 = vmatprep.mubr.f32.mxu0 0.0
        %3886 = vmatmul.mubr.f32.gmra.mrb[0].mxu0 %v3758
        %v3887 = vpop.f32.mrb[0].mxu0
        %v3888 = vadd.f32 0.0, %v3887
        %v3889 = vpop.f32.mrb[0].mxu0
        %3890 = vmatprep.mubr.f32.mxu0 0.0
        %3891 = vmatmul.mubr.f32.gmra.mrb[0].mxu0 %v3761
        %v3892 = vpop.f32.mrb[0].mxu0
        %v3893 = vadd.f32 0.0, %v3892
        %v3894 = vpop.f32.mrb[0].mxu0
        %3895 = vmatprep.mubr.f32.mxu0 0.0
        %3896 = vmatmul.mubr.f32.gmra.mrb[0].mxu0 %v3764
        %v3897 = vpop.f32.mrb[0].mxu0
        %v3898 = vadd.f32 0.0, %v3897
        %v3899 = vpop.f32.mrb[0].mxu0
        %3900 = vmatprep.mubr.f32.mxu0 0.0
        %3901 = vmatmul.mubr.f32.gmra.mrb[0].mxu0 %v3767
        %v3902 = vpop.f32.mrb[0].mxu0
        %v3903 = vadd.f32 0.0, %v3902
        %v3904 = vpop.f32.mrb[0].mxu0
        %3905 = vmatprep.mubr.f32.mxu0 0.0
        %3906 = vmatmul.mubr.f32.gmra.mrb[0].mxu0 %v3770
        %v3907 = vpop.f32.mrb[0].mxu0
        %v3908 = vadd.f32 0.0, %v3907
        %v3909 = vpop.f32.mrb[0].mxu0
        %3910 = vmatprep.mubr.f32.mxu0 0.0
        %3911 = vmatmul.mubr.f32.gmra.mrb[0].mxu0 %v3773
        %v3912 = vpop.f32.mrb[0].mxu0
        %v3913 = vadd.f32 0.0, %v3912
        %v3914 = vpop.f32.mrb[0].mxu0
        %3915 = vmatprep.mubr.f32.mxu0 0.0
        %3916 = vmatmul.mubr.f32.gmra.mrb[0].mxu0 %v3776
        %v3917 = vpop.f32.mrb[0].mxu0
        %v3918 = vadd.f32 0.0, %v3917
        %v3919 = vpop.f32.mrb[0].mxu0
        %3920 = vmatprep.mubr.f32.mxu0 0.0
        %3921 = vmatmul.mubr.f32.gmra.mrb[0].mxu0 %v3779
        %v3922 = vpop.f32.mrb[0].mxu0
        %v3923 = vadd.f32 0.0, %v3922
        %v3924 = vpop.f32.mrb[0].mxu0
        %3925 = vdwg.mxu0
        %v3926 = vadd.f32 %v3695, %v3848
        %v3927 = vadd.f32 %v3696, %v3853
        %v3928 = vadd.f32 %v3697, %v3858
        %v3929 = vadd.f32 %v3698, %v3863
        %v3930 = vadd.f32 %v3699, %v3868
        %v3931 = vadd.f32 %v3700, %v3873
        %v3932 = vadd.f32 %v3701, %v3878
        %v3933 = vadd.f32 %v3702, %v3883
        %v3934 = vadd.f32 %v3703, %v3888
        %v3935 = vadd.f32 %v3704, %v3893
        %v3936 = vadd.f32 %v3705, %v3898
        %v3937 = vadd.f32 %v3706, %v3903
        %v3938 = vadd.f32 %v3707, %v3908
        %v3939 = vadd.f32 %v3708, %v3913
        %v3940 = vadd.f32 %v3709, %v3918
        %v3941 = vadd.f32 %v3710, %v3923
        %v3942 = vld [vmem:[%s3713 + $0x1] sm:$0xff]
        %v3943 = vld [vmem:[%s3713 + $0x9] sm:$0xff]
        %v3944 = vld [vmem:[%s3713 + $0x19] sm:$0xff]
        %v3945 = vld [vmem:[%s3713 + $0x21] sm:$0xff]
        %v3946 = vld [vmem:[%s3713 + $0x31] sm:$0xff]
        %v3947 = vld [vmem:[%s3713 + $0x39] sm:$0xff]
        %v3948 = vld [vmem:[%s3713 + $0x49] sm:$0xff]
        %v3949 = vld [vmem:[%s3713 + $0x51] sm:$0xff]
        %v3950 = vld [vmem:[%s3713 + $0x61] sm:$0xff]
        %v3951 = vld [vmem:[%s3713 + $0x69] sm:$0xff]
        %v3952 = vld [vmem:[%s3713 + $0x79] sm:$0xff]
        %v3953 = vld [vmem:[%s3713 + $0x81] sm:$0xff]
        %v3954 = vld [vmem:[%s3713 + $0x91] sm:$0xff]
        %v3955 = vld [vmem:[%s3713 + $0x99] sm:$0xff]
        %v3956 = vld [vmem:[%s3713 + $0xa9] sm:$0xff]
        %v3957 = vld [vmem:[%s3713 + $0xb1] sm:$0xff]
        %s3958 = scalar_lea.vmem %s3, 112
        %v3959 = vld [vmem:[%s3958] sm:$0xff]
        %v3960 = vld [vmem:[%s3958 + $0x8] sm:$0xff]
        %v3962 = vsel %vm225, %v3942, 0
        %v3965 = vsel %vm225, %v3943, 0
        %v3968 = vsel %vm225, %v3944, 0
        %v3971 = vsel %vm225, %v3945, 0
        %v3974 = vsel %vm225, %v3946, 0
        %v3977 = vsel %vm225, %v3947, 0
        %v3980 = vsel %vm225, %v3948, 0
        %v3983 = vsel %vm225, %v3949, 0
        %v3986 = vsel %vm225, %v3950, 0
        %v3989 = vsel %vm225, %v3951, 0
        %v3992 = vsel %vm225, %v3952, 0
        %v3995 = vsel %vm225, %v3953, 0
        %v3998 = vsel %vm225, %v3954, 0
        %v4001 = vsel %vm225, %v3955, 0
        %v4004 = vsel %vm225, %v3956, 0
        %v4007 = vsel %vm225, %v3957, 0
        %4009 = vmatprep.subr.mxu0 0.0
        %4010 = vmatpush1.msra.mxu0 %v3959
        %4011 = vmatprep.subr.mxu0 0.0
        %4012 = vmatpush1.msra.mxu0 %v3960
        %4013 = vmatprep.subr.mxu0 0.0
        %4014 = vmatpush1.msra.mxu0 0.0
        %4015 = vmatprep.subr.mxu0 0.0
        %4016 = vmatpush1.msra.mxu0 0.0
        %4017 = vmatprep.subr.mxu0 0.0
        %4018 = vmatpush1.msra.mxu0 0.0
        %4019 = vmatprep.subr.mxu0 0.0
        %4020 = vmatpush1.msra.mxu0 0.0
        %4021 = vmatprep.subr.mxu0 0.0
        %4022 = vmatpush1.msra.mxu0 0.0
        %4023 = vmatprep.subr.mxu0 0.0
        %4024 = vmatpush1.msra.mxu0 0.0
        %4025 = vmatprep.subr.mxu0 0.0
        %4026 = vmatpush1.msra.mxu0 0.0
        %4027 = vmatprep.subr.mxu0 0.0
        %4028 = vmatpush1.msra.mxu0 0.0
        %4029 = vmatprep.subr.mxu0 0.0
        %4030 = vmatpush1.msra.mxu0 0.0
        %4031 = vmatprep.subr.mxu0 0.0
        %4032 = vmatpush1.msra.mxu0 0.0
        %4033 = vmatprep.subr.mxu0 0.0
        %4034 = vmatpush1.msra.mxu0 0.0
        %4035 = vmatprep.subr.mxu0 0.0
        %4036 = vmatpush1.msra.mxu0 0.0
        %4037 = vmatprep.subr.mxu0 0.0
        %4038 = vmatpush1.msra.mxu0 0.0
        %4039 = vmatprep.subr.mxu0 0.0
        %4040 = vmatpush1.msra.mxu0 0.0
        %4041 = vmatprep.subr.mxu0 0.0
        %4042 = vmatpush1.msra.mxu0 0.0
        %4043 = vmatprep.subr.mxu0 0.0
        %4044 = vmatpush1.msra.mxu0 0.0
        %4045 = vmatprep.subr.mxu0 0.0
        %4046 = vmatpush1.msra.mxu0 0.0
        %4047 = vmatprep.subr.mxu0 0.0
        %4048 = vmatpush1.msra.mxu0 0.0
        %4049 = vmatprep.subr.mxu0 0.0
        %4050 = vmatpush1.msra.mxu0 0.0
        %4051 = vmatprep.subr.mxu0 0.0
        %4052 = vmatpush1.msra.mxu0 0.0
        %4053 = vmatprep.subr.mxu0 0.0
        %4054 = vmatpush1.msra.mxu0 0.0
        %4055 = vmatprep.subr.mxu0 0.0
        %4056 = vmatpush1.msra.mxu0 0.0
        %4057 = vmatprep.subr.mxu0 0.0
        %4058 = vmatpush1.msra.mxu0 0.0
        %4059 = vmatprep.subr.mxu0 0.0
        %4060 = vmatpush1.msra.mxu0 0.0
        %4061 = vmatprep.subr.mxu0 0.0
        %4062 = vmatpush1.msra.mxu0 0.0
        %4063 = vmatprep.subr.mxu0 0.0
        %4064 = vmatpush1.msra.mxu0 0.0
        %4065 = vmatprep.subr.mxu0 0.0
        %4066 = vmatpush1.msra.mxu0 0.0
        %4067 = vmatprep.subr.mxu0 0.0
        %4068 = vmatpush1.msra.mxu0 0.0
        %4069 = vmatprep.subr.mxu0 0.0
        %4070 = vmatpush1.msra.mxu0 0.0
        %4071 = vmatprep.subr.mxu0 0.0
        %4072 = vmatpush1.msra.mxu0 0.0
        %4073 = vmatprep.mubr.f32.mxu0 0.0
        %4074 = vmatmul.mubr.f32.gmra.mrb[0].mxu0 %v3962
        %v4075 = vpop.f32.mrb[0].mxu0
        %v4076 = vadd.f32 0.0, %v4075
        %v4077 = vpop.f32.mrb[0].mxu0
        %4078 = vmatprep.mubr.f32.mxu0 0.0
        %4079 = vmatmul.mubr.f32.gmra.mrb[0].mxu0 %v3965
        %v4080 = vpop.f32.mrb[0].mxu0
        %v4081 = vadd.f32 0.0, %v4080
        %v4082 = vpop.f32.mrb[0].mxu0
        %4083 = vmatprep.mubr.f32.mxu0 0.0
        %4084 = vmatmul.mubr.f32.gmra.mrb[0].mxu0 %v3968
        %v4085 = vpop.f32.mrb[0].mxu0
        %v4086 = vadd.f32 0.0, %v4085
        %v4087 = vpop.f32.mrb[0].mxu0
        %4088 = vmatprep.mubr.f32.mxu0 0.0
        %4089 = vmatmul.mubr.f32.gmra.mrb[0].mxu0 %v3971
        %v4090 = vpop.f32.mrb[0].mxu0
        %v4091 = vadd.f32 0.0, %v4090
        %v4092 = vpop.f32.mrb[0].mxu0
        %4093 = vmatprep.mubr.f32.mxu0 0.0
        %4094 = vmatmul.mubr.f32.gmra.mrb[0].mxu0 %v3974
        %v4095 = vpop.f32.mrb[0].mxu0
        %v4096 = vadd.f32 0.0, %v4095
        %v4097 = vpop.f32.mrb[0].mxu0
        %4098 = vmatprep.mubr.f32.mxu0 0.0
        %4099 = vmatmul.mubr.f32.gmra.mrb[0].mxu0 %v3977
        %v4100 = vpop.f32.mrb[0].mxu0
        %v4101 = vadd.f32 0.0, %v4100
        %v4102 = vpop.f32.mrb[0].mxu0
        %4103 = vmatprep.mubr.f32.mxu0 0.0
        %4104 = vmatmul.mubr.f32.gmra.mrb[0].mxu0 %v3980
        %v4105 = vpop.f32.mrb[0].mxu0
        %v4106 = vadd.f32 0.0, %v4105
        %v4107 = vpop.f32.mrb[0].mxu0
        %4108 = vmatprep.mubr.f32.mxu0 0.0
        %4109 = vmatmul.mubr.f32.gmra.mrb[0].mxu0 %v3983
        %v4110 = vpop.f32.mrb[0].mxu0
        %v4111 = vadd.f32 0.0, %v4110
        %v4112 = vpop.f32.mrb[0].mxu0
        %4113 = vmatprep.mubr.f32.mxu0 0.0
        %4114 = vmatmul.mubr.f32.gmra.mrb[0].mxu0 %v3986
        %v4115 = vpop.f32.mrb[0].mxu0
        %v4116 = vadd.f32 0.0, %v4115
        %v4117 = vpop.f32.mrb[0].mxu0
        %4118 = vmatprep.mubr.f32.mxu0 0.0
        %4119 = vmatmul.mubr.f32.gmra.mrb[0].mxu0 %v3989
        %v4120 = vpop.f32.mrb[0].mxu0
        %v4121 = vadd.f32 0.0, %v4120
        %v4122 = vpop.f32.mrb[0].mxu0
        %4123 = vmatprep.mubr.f32.mxu0 0.0
        %4124 = vmatmul.mubr.f32.gmra.mrb[0].mxu0 %v3992
        %v4125 = vpop.f32.mrb[0].mxu0
        %v4126 = vadd.f32 0.0, %v4125
        %v4127 = vpop.f32.mrb[0].mxu0
        %4128 = vmatprep.mubr.f32.mxu0 0.0
        %4129 = vmatmul.mubr.f32.gmra.mrb[0].mxu0 %v3995
        %v4130 = vpop.f32.mrb[0].mxu0
        %v4131 = vadd.f32 0.0, %v4130
        %v4132 = vpop.f32.mrb[0].mxu0
        %4133 = vmatprep.mubr.f32.mxu0 0.0
        %4134 = vmatmul.mubr.f32.gmra.mrb[0].mxu0 %v3998
        %v4135 = vpop.f32.mrb[0].mxu0
        %v4136 = vadd.f32 0.0, %v4135
        %v4137 = vpop.f32.mrb[0].mxu0
        %4138 = vmatprep.mubr.f32.mxu0 0.0
        %4139 = vmatmul.mubr.f32.gmra.mrb[0].mxu0 %v4001
        %v4140 = vpop.f32.mrb[0].mxu0
        %v4141 = vadd.f32 0.0, %v4140
        %v4142 = vpop.f32.mrb[0].mxu0
        %4143 = vmatprep.mubr.f32.mxu0 0.0
        %4144 = vmatmul.mubr.f32.gmra.mrb[0].mxu0 %v4004
        %v4145 = vpop.f32.mrb[0].mxu0
        %v4146 = vadd.f32 0.0, %v4145
        %v4147 = vpop.f32.mrb[0].mxu0
        %4148 = vmatprep.mubr.f32.mxu0 0.0
        %4149 = vmatmul.mubr.f32.gmra.mrb[0].mxu0 %v4007
        %v4150 = vpop.f32.mrb[0].mxu0
        %v4151 = vadd.f32 0.0, %v4150
        %v4152 = vpop.f32.mrb[0].mxu0
        %4153 = vdwg.mxu0
        %v4154 = vadd.f32 %v3926, %v4076
        %v4155 = vadd.f32 %v3927, %v4081
        %v4156 = vadd.f32 %v3928, %v4086
        %v4157 = vadd.f32 %v3929, %v4091
        %v4158 = vadd.f32 %v3930, %v4096
        %v4159 = vadd.f32 %v3931, %v4101
        %v4160 = vadd.f32 %v3932, %v4106
        %v4161 = vadd.f32 %v3933, %v4111
        %v4162 = vadd.f32 %v3934, %v4116
        %v4163 = vadd.f32 %v3935, %v4121
        %v4164 = vadd.f32 %v3936, %v4126
        %v4165 = vadd.f32 %v3937, %v4131
        %v4166 = vadd.f32 %v3938, %v4136
        %v4167 = vadd.f32 %v3939, %v4141
        %v4168 = vadd.f32 %v3940, %v4146
        %v4169 = vadd.f32 %v3941, %v4151
        %v4170 = vld [vmem:[%s3713 + $0x2] sm:$0xff]
        %v4171 = vld [vmem:[%s3713 + $0xa] sm:$0xff]
        %v4172 = vld [vmem:[%s3713 + $0x1a] sm:$0xff]
        %v4173 = vld [vmem:[%s3713 + $0x22] sm:$0xff]
        %v4174 = vld [vmem:[%s3713 + $0x32] sm:$0xff]
        %v4175 = vld [vmem:[%s3713 + $0x3a] sm:$0xff]
        %v4176 = vld [vmem:[%s3713 + $0x4a] sm:$0xff]
        %v4177 = vld [vmem:[%s3713 + $0x52] sm:$0xff]
        %v4178 = vld [vmem:[%s3713 + $0x62] sm:$0xff]
        %v4179 = vld [vmem:[%s3713 + $0x6a] sm:$0xff]
        %v4180 = vld [vmem:[%s3713 + $0x7a] sm:$0xff]
        %v4181 = vld [vmem:[%s3713 + $0x82] sm:$0xff]
        %v4182 = vld [vmem:[%s3713 + $0x92] sm:$0xff]
        %v4183 = vld [vmem:[%s3713 + $0x9a] sm:$0xff]
        %v4184 = vld [vmem:[%s3713 + $0xaa] sm:$0xff]
        %v4185 = vld [vmem:[%s3713 + $0xb2] sm:$0xff]
        %s4186 = scalar_lea.vmem %s3, 128
        %v4187 = vld [vmem:[%s4186] sm:$0xff]
        %v4188 = vld [vmem:[%s4186 + $0x8] sm:$0xff]
        %v4190 = vsel %vm225, %v4170, 0
        %v4193 = vsel %vm225, %v4171, 0
        %v4196 = vsel %vm225, %v4172, 0
        %v4199 = vsel %vm225, %v4173, 0
        %v4202 = vsel %vm225, %v4174, 0
        %v4205 = vsel %vm225, %v4175, 0
        %v4208 = vsel %vm225, %v4176, 0
        %v4211 = vsel %vm225, %v4177, 0
        %v4214 = vsel %vm225, %v4178, 0
        %v4217 = vsel %vm225, %v4179, 0
        %v4220 = vsel %vm225, %v4180, 0
        %v4223 = vsel %vm225, %v4181, 0
        %v4226 = vsel %vm225, %v4182, 0
        %v4229 = vsel %vm225, %v4183, 0
        %v4232 = vsel %vm225, %v4184, 0
        %v4235 = vsel %vm225, %v4185, 0
        %4237 = vmatprep.subr.mxu0 0.0
        %4238 = vmatpush1.msra.mxu0 %v4187
        %4239 = vmatprep.subr.mxu0 0.0
        %4240 = vmatpush1.msra.mxu0 %v4188
        %4241 = vmatprep.subr.mxu0 0.0
        %4242 = vmatpush1.msra.mxu0 0.0
        %4243 = vmatprep.subr.mxu0 0.0
        %4244 = vmatpush1.msra.mxu0 0.0
        %4245 = vmatprep.subr.mxu0 0.0
        %4246 = vmatpush1.msra.mxu0 0.0
        %4247 = vmatprep.subr.mxu0 0.0
        %4248 = vmatpush1.msra.mxu0 0.0
        %4249 = vmatprep.subr.mxu0 0.0
        %4250 = vmatpush1.msra.mxu0 0.0
        %4251 = vmatprep.subr.mxu0 0.0
        %4252 = vmatpush1.msra.mxu0 0.0
        %4253 = vmatprep.subr.mxu0 0.0
        %4254 = vmatpush1.msra.mxu0 0.0
        %4255 = vmatprep.subr.mxu0 0.0
        %4256 = vmatpush1.msra.mxu0 0.0
        %4257 = vmatprep.subr.mxu0 0.0
        %4258 = vmatpush1.msra.mxu0 0.0
        %4259 = vmatprep.subr.mxu0 0.0
        %4260 = vmatpush1.msra.mxu0 0.0
        %4261 = vmatprep.subr.mxu0 0.0
        %4262 = vmatpush1.msra.mxu0 0.0
        %4263 = vmatprep.subr.mxu0 0.0
        %4264 = vmatpush1.msra.mxu0 0.0
        %4265 = vmatprep.subr.mxu0 0.0
        %4266 = vmatpush1.msra.mxu0 0.0
        %4267 = vmatprep.subr.mxu0 0.0
        %4268 = vmatpush1.msra.mxu0 0.0
        %4269 = vmatprep.subr.mxu0 0.0
        %4270 = vmatpush1.msra.mxu0 0.0
        %4271 = vmatprep.subr.mxu0 0.0
        %4272 = vmatpush1.msra.mxu0 0.0
        %4273 = vmatprep.subr.mxu0 0.0
        %4274 = vmatpush1.msra.mxu0 0.0
        %4275 = vmatprep.subr.mxu0 0.0
        %4276 = vmatpush1.msra.mxu0 0.0
        %4277 = vmatprep.subr.mxu0 0.0
        %4278 = vmatpush1.msra.mxu0 0.0
        %4279 = vmatprep.subr.mxu0 0.0
        %4280 = vmatpush1.msra.mxu0 0.0
        %4281 = vmatprep.subr.mxu0 0.0
        %4282 = vmatpush1.msra.mxu0 0.0
        %4283 = vmatprep.subr.mxu0 0.0
        %4284 = vmatpush1.msra.mxu0 0.0
        %4285 = vmatprep.subr.mxu0 0.0
        %4286 = vmatpush1.msra.mxu0 0.0
        %4287 = vmatprep.subr.mxu0 0.0
        %4288 = vmatpush1.msra.mxu0 0.0
        %4289 = vmatprep.subr.mxu0 0.0
        %4290 = vmatpush1.msra.mxu0 0.0
        %4291 = vmatprep.subr.mxu0 0.0
        %4292 = vmatpush1.msra.mxu0 0.0
        %4293 = vmatprep.subr.mxu0 0.0
        %4294 = vmatpush1.msra.mxu0 0.0
        %4295 = vmatprep.subr.mxu0 0.0
        %4296 = vmatpush1.msra.mxu0 0.0
        %4297 = vmatprep.subr.mxu0 0.0
        %4298 = vmatpush1.msra.mxu0 0.0
        %4299 = vmatprep.subr.mxu0 0.0
        %4300 = vmatpush1.msra.mxu0 0.0
        %4301 = vmatprep.mubr.f32.mxu0 0.0
        %4302 = vmatmul.mubr.f32.gmra.mrb[0].mxu0 %v4190
        %v4303 = vpop.f32.mrb[0].mxu0
        %v4304 = vadd.f32 0.0, %v4303
        %v4305 = vpop.f32.mrb[0].mxu0
        %4306 = vmatprep.mubr.f32.mxu0 0.0
        %4307 = vmatmul.mubr.f32.gmra.mrb[0].mxu0 %v4193
        %v4308 = vpop.f32.mrb[0].mxu0
        %v4309 = vadd.f32 0.0, %v4308
        %v4310 = vpop.f32.mrb[0].mxu0
        %4311 = vmatprep.mubr.f32.mxu0 0.0
        %4312 = vmatmul.mubr.f32.gmra.mrb[0].mxu0 %v4196
        %v4313 = vpop.f32.mrb[0].mxu0
        %v4314 = vadd.f32 0.0, %v4313
        %v4315 = vpop.f32.mrb[0].mxu0
        %4316 = vmatprep.mubr.f32.mxu0 0.0
        %4317 = vmatmul.mubr.f32.gmra.mrb[0].mxu0 %v4199
        %v4318 = vpop.f32.mrb[0].mxu0
        %v4319 = vadd.f32 0.0, %v4318
        %v4320 = vpop.f32.mrb[0].mxu0
        %4321 = vmatprep.mubr.f32.mxu0 0.0
        %4322 = vmatmul.mubr.f32.gmra.mrb[0].mxu0 %v4202
        %v4323 = vpop.f32.mrb[0].mxu0
        %v4324 = vadd.f32 0.0, %v4323
        %v4325 = vpop.f32.mrb[0].mxu0
        %4326 = vmatprep.mubr.f32.mxu0 0.0
        %4327 = vmatmul.mubr.f32.gmra.mrb[0].mxu0 %v4205
        %v4328 = vpop.f32.mrb[0].mxu0
        %v4329 = vadd.f32 0.0, %v4328
        %v4330 = vpop.f32.mrb[0].mxu0
        %4331 = vmatprep.mubr.f32.mxu0 0.0
        %4332 = vmatmul.mubr.f32.gmra.mrb[0].mxu0 %v4208
        %v4333 = vpop.f32.mrb[0].mxu0
        %v4334 = vadd.f32 0.0, %v4333
        %v4335 = vpop.f32.mrb[0].mxu0
        %4336 = vmatprep.mubr.f32.mxu0 0.0
        %4337 = vmatmul.mubr.f32.gmra.mrb[0].mxu0 %v4211
        %v4338 = vpop.f32.mrb[0].mxu0
        %v4339 = vadd.f32 0.0, %v4338
        %v4340 = vpop.f32.mrb[0].mxu0
        %4341 = vmatprep.mubr.f32.mxu0 0.0
        %4342 = vmatmul.mubr.f32.gmra.mrb[0].mxu0 %v4214
        %v4343 = vpop.f32.mrb[0].mxu0
        %v4344 = vadd.f32 0.0, %v4343
        %v4345 = vpop.f32.mrb[0].mxu0
        %4346 = vmatprep.mubr.f32.mxu0 0.0
        %4347 = vmatmul.mubr.f32.gmra.mrb[0].mxu0 %v4217
        %v4348 = vpop.f32.mrb[0].mxu0
        %v4349 = vadd.f32 0.0, %v4348
        %v4350 = vpop.f32.mrb[0].mxu0
        %4351 = vmatprep.mubr.f32.mxu0 0.0
        %4352 = vmatmul.mubr.f32.gmra.mrb[0].mxu0 %v4220
        %v4353 = vpop.f32.mrb[0].mxu0
        %v4354 = vadd.f32 0.0, %v4353
        %v4355 = vpop.f32.mrb[0].mxu0
        %4356 = vmatprep.mubr.f32.mxu0 0.0
        %4357 = vmatmul.mubr.f32.gmra.mrb[0].mxu0 %v4223
        %v4358 = vpop.f32.mrb[0].mxu0
        %v4359 = vadd.f32 0.0, %v4358
        %v4360 = vpop.f32.mrb[0].mxu0
        %4361 = vmatprep.mubr.f32.mxu0 0.0
        %4362 = vmatmul.mubr.f32.gmra.mrb[0].mxu0 %v4226
        %v4363 = vpop.f32.mrb[0].mxu0
        %v4364 = vadd.f32 0.0, %v4363
        %v4365 = vpop.f32.mrb[0].mxu0
        %4366 = vmatprep.mubr.f32.mxu0 0.0
        %4367 = vmatmul.mubr.f32.gmra.mrb[0].mxu0 %v4229
        %v4368 = vpop.f32.mrb[0].mxu0
        %v4369 = vadd.f32 0.0, %v4368
        %v4370 = vpop.f32.mrb[0].mxu0
        %4371 = vmatprep.mubr.f32.mxu0 0.0
        %4372 = vmatmul.mubr.f32.gmra.mrb[0].mxu0 %v4232
        %v4373 = vpop.f32.mrb[0].mxu0
        %v4374 = vadd.f32 0.0, %v4373
        %v4375 = vpop.f32.mrb[0].mxu0
        %4376 = vmatprep.mubr.f32.mxu0 0.0
        %4377 = vmatmul.mubr.f32.gmra.mrb[0].mxu0 %v4235
        %v4378 = vpop.f32.mrb[0].mxu0
        %v4379 = vadd.f32 0.0, %v4378
        %v4380 = vpop.f32.mrb[0].mxu0
        %4381 = vdwg.mxu0
        %v4382 = vadd.f32 %v4154, %v4304
        %v4383 = vadd.f32 %v4155, %v4309
        %v4384 = vadd.f32 %v4156, %v4314
        %v4385 = vadd.f32 %v4157, %v4319
        %v4386 = vadd.f32 %v4158, %v4324
        %v4387 = vadd.f32 %v4159, %v4329
        %v4388 = vadd.f32 %v4160, %v4334
        %v4389 = vadd.f32 %v4161, %v4339
        %v4390 = vadd.f32 %v4162, %v4344
        %v4391 = vadd.f32 %v4163, %v4349
        %v4392 = vadd.f32 %v4164, %v4354
        %v4393 = vadd.f32 %v4165, %v4359
        %v4394 = vadd.f32 %v4166, %v4364
        %v4395 = vadd.f32 %v4167, %v4369
        %v4396 = vadd.f32 %v4168, %v4374
        %v4397 = vadd.f32 %v4169, %v4379
        %v4399 = vlaneseq
        %v4400 = vshrl.u32 %v4399, 7
        %v4401 = vsub.s32 0, %v4400
        %v4402 = vrot.slane %v282, %v4401
        %v4404 = vadd.f32 %v4382, %v4402
        %v4405 = vadd.f32 %v4383, %v4402
        %v4406 = vadd.f32 %v4384, %v4402
        %v4407 = vadd.f32 %v4385, %v4402
        %v4408 = vadd.f32 %v4386, %v4402
        %v4409 = vadd.f32 %v4387, %v4402
        %v4410 = vadd.f32 %v4388, %v4402
        %v4411 = vadd.f32 %v4389, %v4402
        %v4412 = vadd.f32 %v4390, %v4402
        %v4413 = vadd.f32 %v4391, %v4402
        %v4414 = vadd.f32 %v4392, %v4402
        %v4415 = vadd.f32 %v4393, %v4402
        %v4416 = vadd.f32 %v4394, %v4402
        %v4417 = vadd.f32 %v4395, %v4402
        %v4418 = vadd.f32 %v4396, %v4402
        %v4419 = vadd.f32 %v4397, %v4402
        %v4420 = vmax.f32 %v4404, 0.0
        %v4421 = vmax.f32 %v4405, 0.0
        %v4422 = vmax.f32 %v4406, 0.0
        %v4423 = vmax.f32 %v4407, 0.0
        %v4424 = vmax.f32 %v4408, 0.0
        %v4425 = vmax.f32 %v4409, 0.0
        %v4426 = vmax.f32 %v4410, 0.0
        %v4427 = vmax.f32 %v4411, 0.0
        %v4428 = vmax.f32 %v4412, 0.0
        %v4429 = vmax.f32 %v4413, 0.0
        %v4430 = vmax.f32 %v4414, 0.0
        %v4431 = vmax.f32 %v4415, 0.0
        %v4432 = vmax.f32 %v4416, 0.0
        %v4433 = vmax.f32 %v4417, 0.0
        %v4434 = vmax.f32 %v4418, 0.0
        %v4435 = vmax.f32 %v4419, 0.0
        %s4436 = smul.u32 %s2365, 128
        %s4437 = scalar_lea.vmem %s224, %s4436
        %4438 = vst.msk [vmem:[%s4437] sm:$0xff] %vm225, %v4420
        %4439 = vst.msk [vmem:[%s4437 + $0x8] sm:$0xff] %vm225, %v4421
        %4440 = vst.msk [vmem:[%s4437 + $0x10] sm:$0xff] %vm225, %v4422
        %4441 = vst.msk [vmem:[%s4437 + $0x18] sm:$0xff] %vm225, %v4423
        %4442 = vst.msk [vmem:[%s4437 + $0x20] sm:$0xff] %vm225, %v4424
        %4443 = vst.msk [vmem:[%s4437 + $0x28] sm:$0xff] %vm225, %v4425
        %4444 = vst.msk [vmem:[%s4437 + $0x30] sm:$0xff] %vm225, %v4426
        %4445 = vst.msk [vmem:[%s4437 + $0x38] sm:$0xff] %vm225, %v4427
        %4446 = vst.msk [vmem:[%s4437 + $0x40] sm:$0xff] %vm225, %v4428
        %4447 = vst.msk [vmem:[%s4437 + $0x48] sm:$0xff] %vm225, %v4429
        %4448 = vst.msk [vmem:[%s4437 + $0x50] sm:$0xff] %vm225, %v4430
        %4449 = vst.msk [vmem:[%s4437 + $0x58] sm:$0xff] %vm225, %v4431
        %4450 = vst.msk [vmem:[%s4437 + $0x60] sm:$0xff] %vm225, %v4432
        %4451 = vst.msk [vmem:[%s4437 + $0x68] sm:$0xff] %vm225, %v4433
        %4452 = vst.msk [vmem:[%s4437 + $0x70] sm:$0xff] %vm225, %v4434
        %4453 = vst.msk [vmem:[%s4437 + $0x78] sm:$0xff] %vm225, %v4435
      $region52: #{tpu_custom_call.1} parent=39 // loop_footer
        %s2369 = sadd.s32 1, %s2365
      $region53: #{tpu_custom_call.1} parent=39 // loop_footer_branch
        %2364 = sbr.rel target = $region49
      $region54: #{tpu_custom_call.1} parent=39 // loop_exit
        _
      %p4454 = scmp.lt.s32.totalorder %s16, 1
      %s4455 = scalar_select %p4454, %s16, 1
      %s4456 = smul.addr %s4455, 32
      %s4457 = smul.addr %s4456, 8
      %s4458 = scalar_lea.vmem %s5, %s4457
      // Predicated region
      $region55: #{tpu_custom_call.1} parent=39 // pred_check
        %p4459 = pneg %p144
      $region56: #{tpu_custom_call.1} parent=39 // pred_check_branch
        %4461 = sbr.rel (%p4459) target = $region58
      $region57: #{tpu_custom_call.1} parent=39 // pred_region
        _
      $region58: #{tpu_custom_call.1} parent=39 // pred_fallthru
        _
    $region40: #{tpu_custom_call.1} parent=5 // pred_fallthru
      _
    %p4462 = scmp.le.s32.totalorder 2, %s11
    // Predicated region
    $region59: #{tpu_custom_call.1} parent=5 // pred_check
      %p4463 = pneg %p4462
    $region60: #{tpu_custom_call.1} parent=5 // pred_check_branch
      %4465 = sbr.rel (%p4463) target = $region62
    $region61: #{tpu_custom_call.1} parent=5 // pred_region
      %s4466 = ssub.s32 %s11, 2
      // Predicated region
      $region63: #{tpu_custom_call.1} parent=61 // pred_check
        %p4467 = pneg %p150
      $region64: #{tpu_custom_call.1} parent=61 // pred_check_branch
        %4469 = sbr.rel (%p4467) target = $region66
      $region65: #{tpu_custom_call.1} parent=61 // pred_region
        %p4470 = scmp.lt.s32.totalorder %s17, 1
        %s4471 = scalar_select %p4470, %s17, 1
        %s4472 = smul.addr %s4471, 32
        %s4473 = smul.addr %s4472, 8
        %s4474 = scalar_lea.vmem %s5, %s4473
      $region66: #{tpu_custom_call.1} parent=61 // pred_fallthru
        _
    $region62: #{tpu_custom_call.1} parent=5 // pred_fallthru
      _
  $region6: #{tpu_custom_call.1} parent=0 // loop_footer
    %s15 = sadd.s32 1, %s11
  $region7: #{tpu_custom_call.1} parent=0 // loop_footer_branch
    %10 = sbr.rel target = $region3
  $region8: #{tpu_custom_call.1} parent=0 // loop_exit
    _

</llo_original>
